<compile_context>
chip_gen: v5e
topology: v5e:2x2
jax: 0.10.0
libtpu: 0.0.40
codegen_flags: <defaults>
</compile_context>

<pallas_src>
import math
import functools

import jax
import jax.numpy as jnp
from jax import lax
from jax.experimental import pallas as pl
from jax.experimental.pallas import tpu as pltpu


# ----------------------------------------------------------------------------- kernel
def _layer_kernel(sp_ref, x_ref, ck_hbm, cv_hbm,
                  wqT_ref, bq_ref, wkT_ref, bk_ref, wvT_ref, bv_ref,
                  woT_ref, bo_ref, w1T_ref, w3T_ref, w2T_ref,
                  g_attn_ref, g_ffn_ref, cos_ref, sin_ref,
                  xo_ref, cko_hbm, cvo_hbm,
                  ck_vmem, cv_vmem, k_stage, v_stage, sems,
                  *, n_heads, head_dim, eps):
    f32 = jnp.float32
    bf16 = jnp.bfloat16
    B, D = x_ref.shape
    S = ck_vmem.shape[1]
    Dkv = ck_vmem.shape[2]
    sp = sp_ref[0]                      # current decode position (scalar, SMEM)

    # Kick off the KV-cache read DMAs; they overlap with the QKV projections below.
    rd_k = pltpu.make_async_copy(ck_hbm, ck_vmem, sems.at[0])
    rd_v = pltpu.make_async_copy(cv_hbm, cv_vmem, sems.at[1])
    rd_k.start()
    rd_v.start()

    x = x_ref[...]                      # [B, D] f32

    # ---- RMSNorm (pre-attention), f32 on the VPU ----
    ms = jnp.mean(x * x, axis=-1, keepdims=True)
    xn = x * lax.rsqrt(ms + eps) * g_attn_ref[...]
    xn_bf = xn.astype(bf16)

    # ---- q/k/v projections: bf16 weights, f32 accumulation on the MXU ----
    xq = jnp.dot(xn_bf, wqT_ref[...], preferred_element_type=f32) + bq_ref[...]
    xk = jnp.dot(xn_bf, wkT_ref[...], preferred_element_type=f32) + bk_ref[...]
    xv = jnp.dot(xn_bf, wvT_ref[...], preferred_element_type=f32) + bv_ref[...]

    # ---- RoPE: out = x*cos + pair_swap(x)*sin.  The pair swap is done in-kernel
    # with a generated 0/1 permutation matmul (exact, no swapped-weight duplicates
    # streamed from HBM).
    def _swap_matrix(n):
        ri = lax.broadcasted_iota(jnp.int32, (n, n), 0)
        ci = lax.broadcasted_iota(jnp.int32, (n, n), 1)
        partner = ri + 1 - 2 * (ri & 1)          # 2i <-> 2i+1
        return jnp.where(ci == partner, 1.0, 0.0).astype(bf16)

    pmat_q = _swap_matrix(D)
    pmat_k = pmat_q if Dkv == D else _swap_matrix(Dkv)
    cosv = cos_ref[...]
    sinv = sin_ref[...]
    xq_sw = jnp.dot(xq.astype(bf16), pmat_q, preferred_element_type=f32)
    xk_sw = jnp.dot(xk.astype(bf16), pmat_k, preferred_element_type=f32)
    q = xq * cosv + xq_sw * sinv                              # [B, D]
    k = xk * cosv[:, :Dkv] + xk_sw * sinv[:, :Dkv]            # [B, Dkv]

    # ---- in-place KV-cache update: write ONLY position sp back to HBM (aliased) ----
    k_stage[...] = k[:, None, :]
    v_stage[...] = xv[:, None, :]

    rd_k.wait()
    rd_v.wait()                                               # old cache now in VMEM

    wr_k = pltpu.make_async_copy(k_stage, cko_hbm.at[:, pl.ds(sp, 1), :], sems.at[2])
    wr_v = pltpu.make_async_copy(v_stage, cvo_hbm.at[:, pl.ds(sp, 1), :], sems.at[3])
    wr_k.start()
    wr_v.start()

    # ---- attention over cache positions 0..sp (new k/v spliced in via select) ----
    pos_s = lax.broadcasted_iota(jnp.int32, (1, S, 1), 1)
    is_cur = pos_s == sp
    keff = jnp.where(is_cur, k[:, None, :], ck_vmem[...])     # [B, S, Dkv] f32
    veff = jnp.where(is_cur, xv[:, None, :], cv_vmem[...])
    # TODO(synk): the torch reference (buggily) reads *values* from cache_k; we use cache_v.

    scale = 1.0 / math.sqrt(head_dim)
    valid = lax.broadcasted_iota(jnp.int32, (1, 1, S), 2) <= sp     # [1,1,S]
    # TODO(synk): at real S, tile the KV axis (grid / inner loop bounded by sp,
    #             online softmax) instead of masking the full axis.
    head_outs = []
    for hh in range(n_heads):                   # static unroll over heads only;
        lo = hh * head_dim                      # batch dim handled by the einsum
        hi = lo + head_dim
        qh = q[:, None, lo:hi].astype(bf16)     # [B, 1, hd]
        kh = keff[:, :, lo:hi].astype(bf16)     # [B, S, hd]
        vh = veff[:, :, lo:hi].astype(bf16)     # [B, S, hd]
        s = jnp.einsum("bqd,bkd->bqk", qh, kh,
                       preferred_element_type=f32) * scale          # [B, 1, S]
        s = jnp.where(valid, s, -jnp.inf)
        m = jnp.max(s, axis=-1, keepdims=True)
        p = jnp.exp(s - m)
        p = p * pl.reciprocal(jnp.sum(p, axis=-1, keepdims=True), approx=True)
        o = jnp.einsum("bqk,bkd->bqd", p.astype(bf16), vh,
                       preferred_element_type=f32)                  # [B, 1, hd]
        head_outs.append(o[:, 0, :])
    attn = jnp.concatenate(head_outs, axis=-1)                      # [B, D] f32

    attn_o = jnp.dot(attn.astype(bf16), woT_ref[...],
                     preferred_element_type=f32) + bo_ref[...]
    h1 = x + attn_o

    # ---- RMSNorm (pre-FFN) + SwiGLU feed-forward ----
    ms2 = jnp.mean(h1 * h1, axis=-1, keepdims=True)
    hn = h1 * lax.rsqrt(ms2 + eps) * g_ffn_ref[...]
    hn_bf = hn.astype(bf16)
    a = jnp.dot(hn_bf, w1T_ref[...], preferred_element_type=f32)    # [B, Hff]
    gate = jnp.dot(hn_bf, w3T_ref[...], preferred_element_type=f32)
    swish = a * jax.nn.sigmoid(a)                                   # SiLU, f32
    ff = jnp.dot((swish * gate).astype(bf16), w2T_ref[...],
                 preferred_element_type=f32)                        # [B, D]

    xo_ref[...] = h1 + ff

    wr_k.wait()
    wr_v.wait()


# ----------------------------------------------------------------------------- wrapper
def encoder_layer(h, ck, cv, sp, cos_vec, sin_vec, lp, cfg):
    B, D = h.shape
    S, Dkv = ck.shape[1], ck.shape[2]
    kernel = functools.partial(_layer_kernel,
                               n_heads=cfg["n_heads"],
                               head_dim=cfg["head_dim"],
                               eps=cfg["norm_eps"])
    vmem = pl.BlockSpec(memory_space=pltpu.MemorySpace.VMEM)
    smem = pl.BlockSpec(memory_space=pltpu.MemorySpace.SMEM)
    hbm = pl.BlockSpec(memory_space=pl.ANY)
    inputs = (sp, h, ck, cv,
              lp["wqT"], lp["bq"], lp["wkT"], lp["bk"], lp["wvT"], lp["bv"],
              lp["woT"], lp["bo"], lp["w1T"], lp["w3T"], lp["w2T"],
              lp["g_attn"], lp["g_ffn"], cos_vec, sin_vec)
    out_shape = (jax.ShapeDtypeStruct((B, D), jnp.float32),
                 jax.ShapeDtypeStruct((B, S, Dkv), jnp.float32),
                 jax.ShapeDtypeStruct((B, S, Dkv), jnp.float32))
    return pl.pallas_call(
        kernel,
        out_shape=out_shape,
        in_specs=[smem, vmem, hbm, hbm] + [vmem] * 15,
        out_specs=(vmem, hbm, hbm),
        scratch_shapes=[
            pltpu.VMEM((B, S, Dkv), jnp.float32),   # K cache read buffer
            pltpu.VMEM((B, S, Dkv), jnp.float32),   # V cache read buffer
            pltpu.VMEM((B, 1, Dkv), jnp.float32),   # new-K staging for the slot write
            pltpu.VMEM((B, 1, Dkv), jnp.float32),   # new-V staging for the slot write
            pltpu.SemaphoreType.DMA((4,)),
        ],
        input_output_aliases={2: 1, 3: 2},          # in-place KV caches
        compiler_params=pltpu.CompilerParams(vmem_limit_bytes=32 * 1024 * 1024),
    )(*inputs)


def precompute_theta_pos_frequencies(head_dim, seq_len, theta=10000.0):
    # Faithful to the reference, including its use of (i - 1) in the exponent.
    i = jnp.arange(0, head_dim, 2, dtype=jnp.float32)
    th = 1.0 / (theta ** ((i - 1.0) / head_dim))
    m = jnp.arange(seq_len, dtype=jnp.float32)
    return jnp.outer(m, th)          # rotation angles (torch stores polar(1, angles))


def rope_vectors(freq_table, start_pos, n_heads, head_dim):
    ang = freq_table[start_pos]                                   # [head_dim // 2]
    c = jnp.repeat(jnp.cos(ang), 2)                               # [head_dim]
    s = jnp.stack([-jnp.sin(ang), jnp.sin(ang)], axis=-1).reshape(-1)
    cos_vec = jnp.tile(c, n_heads)[None, :].astype(jnp.float32)   # [1, n_heads*head_dim]
    sin_vec = jnp.tile(s, n_heads)[None, :].astype(jnp.float32)
    return cos_vec, sin_vec


def pair_swap_perm(n):
    return jnp.arange(n).reshape(-1, 2)[:, ::-1].reshape(-1)


def make_config():
    dim, n_heads = 128, 4                       # lane-dense toy config (D multiple of 128)
    cfg = dict(dim=dim, n_heads=n_heads, head_dim=dim // n_heads,
               n_kv_heads=n_heads, n_layers=2, vocab_size=64,
               max_seq_len=16, multiple_of=128, norm_eps=1e-5)
    hidden = 4 * dim
    hidden = int(2 * hidden // 3)
    hidden = cfg["multiple_of"] * (hidden + cfg["multiple_of"] - 1) // cfg["multiple_of"]
    cfg["ffn_hidden"] = hidden                  # 384
    return cfg


def init_params(key, cfg):
    D = cfg["dim"]
    Dkv = cfg["n_kv_heads"] * cfg["head_dim"]
    Hff = cfg["ffn_hidden"]
    V = cfg["vocab_size"]
    bf16 = jnp.bfloat16

    def nrm(k, shape, scale):
        return scale * jax.random.normal(k, shape, dtype=jnp.float32)

    keys = jax.random.split(key, 1 + cfg["n_layers"])
    emb = nrm(keys[0], (V, D), 0.1)
    layers = []
    for li in range(cfg["n_layers"]):
        ks = jax.random.split(keys[1 + li], 11)
        layers.append(dict(
            wqT=nrm(ks[0], (D, D), 0.05).astype(bf16),   bq=nrm(ks[1], (1, D), 0.02),
            wkT=nrm(ks[2], (D, Dkv), 0.05).astype(bf16), bk=nrm(ks[3], (1, Dkv), 0.02),
            wvT=nrm(ks[4], (D, Dkv), 0.05).astype(bf16), bv=nrm(ks[5], (1, Dkv), 0.02),
            woT=nrm(ks[6], (D, D), 0.05).astype(bf16),   bo=nrm(ks[7], (1, D), 0.02),
            w1T=nrm(ks[8], (D, Hff), 0.05).astype(bf16),
            w3T=nrm(ks[9], (D, Hff), 0.05).astype(bf16),
            w2T=nrm(ks[10], (Hff, D), 0.05).astype(bf16),
            g_attn=jnp.ones((1, D), jnp.float32),
            g_ffn=jnp.ones((1, D), jnp.float32)))
    freq = precompute_theta_pos_frequencies(cfg["head_dim"], cfg["max_seq_len"] * 2)
    return dict(emb=emb, layers=layers, freq=freq)


def transformer_forward(tokens, start_pos, params, caches, cfg):
    B, S1 = tokens.shape
    assert S1 == 1, "only one token at a time can be processed"
    h = params["emb"][tokens[:, 0]]                      # [B, D] embedding gather (glue)
    cos_vec, sin_vec = rope_vectors(params["freq"], start_pos,
                                    cfg["n_heads"], cfg["head_dim"])
    sp = jnp.asarray(start_pos, jnp.int32).reshape((1,))
    new_caches = []
    for lp, (ck, cv) in zip(params["layers"], caches):
        h, ck, cv = encoder_layer(h, ck, cv, sp, cos_vec, sin_vec, lp, cfg)
        new_caches.append((ck, cv))
    # TODO(synk): the reference Transformer.forward never applies self.norm /
    # self.output and implicitly returns None; we return the final hidden states.
    return h[:, None, :], new_caches


# ----------------------------------------------------------------------------- pure-JAX reference
def reference_forward(tokens, start_pos, params, caches, cfg):
    B = tokens.shape[0]
    D, H, HD, S = cfg["dim"], cfg["n_heads"], cfg["head_dim"], cfg["max_seq_len"]
    eps = cfg["norm_eps"]
    bf16, f32 = jnp.bfloat16, jnp.float32
    h = params["emb"][tokens[:, 0]]
    cos_vec, sin_vec = rope_vectors(params["freq"], start_pos, H, HD)
    perm = pair_swap_perm(D)
    t = jnp.arange(S)
    scale = 1.0 / math.sqrt(HD)

    def rms(x, g):
        return g * (x * lax.rsqrt(jnp.mean(x * x, -1, keepdims=True) + eps))

    def mm(a, w):  # bf16 x bf16 -> f32 accumulate, mirrors kernel matmul numerics
        return jnp.dot(a.astype(bf16), w, preferred_element_type=f32)

    new_caches = []
    for lp, (ck, cv) in zip(params["layers"], caches):
        xn = rms(h, lp["g_attn"][0])
        xq = mm(xn, lp["wqT"]) + lp["bq"][0]
        xk = mm(xn, lp["wkT"]) + lp["bk"][0]
        xv = mm(xn, lp["wvT"]) + lp["bv"][0]
        xq_sw = xq.astype(bf16).astype(f32)[:, perm]   # kernel swaps via bf16 perm-matmul
        xk_sw = xk.astype(bf16).astype(f32)[:, perm]
        q = xq * cos_vec[0] + xq_sw * sin_vec[0]
        k = xk * cos_vec[0] + xk_sw * sin_vec[0]
        ck = ck.at[:, start_pos].set(k)
        cv = cv.at[:, start_pos].set(xv)
        qh = q.reshape(B, H, HD)
        kh = ck.reshape(B, S, H, HD)
        vh = cv.reshape(B, S, H, HD)
        scores = jnp.einsum("bhd,bshd->bhs", qh.astype(bf16), kh.astype(bf16),
                            preferred_element_type=f32) * scale
        scores = jnp.where(t[None, None, :] <= start_pos, scores, -jnp.inf)
        p = jax.nn.softmax(scores, axis=-1)
        o = jnp.einsum("bhs,bshd->bhd", p.astype(bf16), vh.astype(bf16),
                       preferred_element_type=f32).reshape(B, D)
        h = h + (mm(o, lp["woT"]) + lp["bo"][0])
        hn = rms(h, lp["g_ffn"][0])
        a = mm(hn, lp["w1T"])
        gate = mm(hn, lp["w3T"])
        h = h + mm(jax.nn.silu(a) * gate, lp["w2T"])
        new_caches.append((ck, cv))
    return h[:, None, :], new_caches


# ----------------------------------------------------------------------------- main
if __name__ == "__main__":
    cfg = make_config()
    key = jax.random.PRNGKey(0)
    k_params, k_tok = jax.random.split(key)
    params = init_params(k_params, cfg)

    B = 2
    tokens = jax.random.randint(k_tok, (B, 1), 0, cfg["vocab_size"], dtype=jnp.int32)
    start_pos = 3
    Dkv = cfg["n_kv_heads"] * cfg["head_dim"]

    def fresh_caches():
        return [(jnp.zeros((B, cfg["max_seq_len"], Dkv), jnp.float32),
                 jnp.zeros((B, cfg["max_seq_len"], Dkv), jnp.float32))
                for _ in range(cfg["n_layers"])]

    # Pure-JAX reference first (its caches are separate; the Pallas path donates its own).
    ref_out, ref_caches = reference_forward(tokens, start_pos, params, fresh_caches(), cfg)

    # Pallas path: jit + donate the caches so the in-place (aliased) update is real.
    fwd = jax.jit(functools.partial(transformer_forward, cfg=cfg), donate_argnums=(3,))
    out, new_caches = fwd(tokens, start_pos, params, fresh_caches())
    out = jax.block_until_ready(out)

    err = float(jnp.max(jnp.abs(out - ref_out)))
    assert bool(jnp.allclose(out, ref_out, atol=2e-2, rtol=2e-2)), \
        f"hidden mismatch, max err {err}"
    for (ck, cv), (rck, rcv) in zip(new_caches, ref_caches):
        assert bool(jnp.allclose(ck, rck, atol=1e-2, rtol=1e-2)), "K cache mismatch"
        assert bool(jnp.allclose(cv, rcv, atol=1e-2, rtol=1e-2)), "V cache mismatch"

    print("KERNEL_OK")
</pallas_src>

<mosaic_0001>
module attributes {stable_mosaic.version = 11 : i64} {
  func.func @_layer_kernel(%arg0: memref<1xi32, #tpu.memory_space<smem>>, %arg1: memref<2x128xf32, #tpu.memory_space<vmem>>, %arg2: memref<2x16x128xf32, #tpu.memory_space<any>>, %arg3: memref<2x16x128xf32, #tpu.memory_space<any>>, %arg4: memref<128x128xbf16, #tpu.memory_space<vmem>>, %arg5: memref<1x128xf32, #tpu.memory_space<vmem>>, %arg6: memref<128x128xbf16, #tpu.memory_space<vmem>>, %arg7: memref<1x128xf32, #tpu.memory_space<vmem>>, %arg8: memref<128x128xbf16, #tpu.memory_space<vmem>>, %arg9: memref<1x128xf32, #tpu.memory_space<vmem>>, %arg10: memref<128x128xbf16, #tpu.memory_space<vmem>>, %arg11: memref<1x128xf32, #tpu.memory_space<vmem>>, %arg12: memref<128x468xbf16, #tpu.memory_space<vmem>>, %arg13: memref<128x468xbf16, #tpu.memory_space<vmem>>, %arg14: memref<468x128xbf16, #tpu.memory_space<vmem>>, %arg15: memref<1x128xf32, #tpu.memory_space<vmem>>, %arg16: memref<1x128xf32, #tpu.memory_space<vmem>>, %arg17: memref<1x128xf32, #tpu.memory_space<vmem>>, %arg18: memref<1x128xf32, #tpu.memory_space<vmem>>, %arg19: memref<2x128xf32, #tpu.memory_space<vmem>>, %arg20: memref<2x16x128xf32, #tpu.memory_space<any>>, %arg21: memref<2x16x128xf32, #tpu.memory_space<any>>, %arg22: memref<2x16x128xf32, #tpu.memory_space<vmem>>, %arg23: memref<2x16x128xf32, #tpu.memory_space<vmem>>, %arg24: memref<2x1x128xf32, #tpu.memory_space<vmem>>, %arg25: memref<2x1x128xf32, #tpu.memory_space<vmem>>, %arg26: memref<4x!tpu.dma_semaphore, #tpu.memory_space<semaphore_mem>>) attributes {dimension_semantics = [], scalar_prefetch = 0 : i64, scratch_operands = 5 : i64, tpu.core_type = #tpu.core_type<tc>} {
    %c0 = arith.constant 0 : index
    %0 = memref.load %arg0[%c0] : memref<1xi32, #tpu.memory_space<smem>>
    %c0_i32 = arith.constant 0 : i32
    %1 = tpu.memref_slice %arg26[%c0_i32] : memref<4x!tpu.dma_semaphore, #tpu.memory_space<semaphore_mem>> -> memref<1x!tpu.dma_semaphore, #tpu.memory_space<semaphore_mem>>
    %2 = tpu.memref_squeeze %1 : memref<1x!tpu.dma_semaphore, #tpu.memory_space<semaphore_mem>> -> memref<!tpu.dma_semaphore, #tpu.memory_space<semaphore_mem>>
    tpu.enqueue_dma source(%arg2 : memref<2x16x128xf32, #tpu.memory_space<any>>) target(%arg22 : memref<2x16x128xf32, #tpu.memory_space<vmem>>) target_semaphore(%2 : memref<!tpu.dma_semaphore, #tpu.memory_space<semaphore_mem>>)
    %c1_i32 = arith.constant 1 : i32
    %3 = tpu.memref_slice %arg26[%c1_i32] : memref<4x!tpu.dma_semaphore, #tpu.memory_space<semaphore_mem>> -> memref<1x!tpu.dma_semaphore, #tpu.memory_space<semaphore_mem>>
    %4 = tpu.memref_squeeze %3 : memref<1x!tpu.dma_semaphore, #tpu.memory_space<semaphore_mem>> -> memref<!tpu.dma_semaphore, #tpu.memory_space<semaphore_mem>>
    tpu.enqueue_dma source(%arg3 : memref<2x16x128xf32, #tpu.memory_space<any>>) target(%arg23 : memref<2x16x128xf32, #tpu.memory_space<vmem>>) target_semaphore(%4 : memref<!tpu.dma_semaphore, #tpu.memory_space<semaphore_mem>>)
    %c0_0 = arith.constant 0 : index
    %c0_1 = arith.constant 0 : index
    %5 = vector.load %arg1[%c0_0, %c0_1] : memref<2x128xf32, #tpu.memory_space<vmem>>, vector<2x128xf32>
    %6 = arith.mulf %5, %5 : vector<2x128xf32>
    %cst = arith.constant dense<0.000000e+00> : vector<2xf32>
    %7 = vector.multi_reduction <add>, %6, %cst [1] : vector<2x128xf32> to vector<2xf32>
    %8 = vector.shape_cast %7 : vector<2xf32> to vector<2x1xf32>
    %cst_2 = arith.constant 1.280000e+02 : f32
    %9 = vector.broadcast %cst_2 : f32 to vector<2x1xf32>
    %10 = arith.divf %8, %9 : vector<2x1xf32>
    %cst_3 = arith.constant 9.99999974E-6 : f32
    %11 = vector.broadcast %cst_3 : f32 to vector<2x1xf32>
    %12 = arith.addf %10, %11 : vector<2x1xf32>
    %13 = math.rsqrt %12 : vector<2x1xf32>
    %14 = vector.broadcast %13 : vector<2x1xf32> to vector<2x128xf32>
    %15 = arith.mulf %5, %14 : vector<2x128xf32>
    %c0_4 = arith.constant 0 : index
    %c0_5 = arith.constant 0 : index
    %16 = vector.load %arg15[%c0_4, %c0_5] : memref<1x128xf32, #tpu.memory_space<vmem>>, vector<1x128xf32>
    %17 = vector.broadcast %16 : vector<1x128xf32> to vector<2x128xf32>
    %18 = arith.mulf %15, %17 : vector<2x128xf32>
    %19 = arith.truncf %18 : vector<2x128xf32> to vector<2x128xbf16>
    %c0_6 = arith.constant 0 : index
    %c0_7 = arith.constant 0 : index
    %20 = vector.load %arg4[%c0_6, %c0_7] : memref<128x128xbf16, #tpu.memory_space<vmem>>, vector<128x128xbf16>
    %cst_8 = arith.constant dense<0.000000e+00> : vector<2x128xf32>
    %21 = tpu.matmul %19, %20, %cst_8 {dimension_numbers = #tpu.dot_dimension_numbers<[1], [0], [0], [1], [0, 0, 1, 1], [], []>} : vector<2x128xbf16>, vector<128x128xbf16>, vector<2x128xf32> -> vector<2x128xf32>
    %c0_9 = arith.constant 0 : index
    %c0_10 = arith.constant 0 : index
    %22 = vector.load %arg5[%c0_9, %c0_10] : memref<1x128xf32, #tpu.memory_space<vmem>>, vector<1x128xf32>
    %23 = vector.broadcast %22 : vector<1x128xf32> to vector<2x128xf32>
    %24 = arith.addf %21, %23 : vector<2x128xf32>
    %c0_11 = arith.constant 0 : index
    %c0_12 = arith.constant 0 : index
    %25 = vector.load %arg6[%c0_11, %c0_12] : memref<128x128xbf16, #tpu.memory_space<vmem>>, vector<128x128xbf16>
    %cst_13 = arith.constant dense<0.000000e+00> : vector<2x128xf32>
    %26 = tpu.matmul %19, %25, %cst_13 {dimension_numbers = #tpu.dot_dimension_numbers<[1], [0], [0], [1], [0, 0, 1, 1], [], []>} : vector<2x128xbf16>, vector<128x128xbf16>, vector<2x128xf32> -> vector<2x128xf32>
    %c0_14 = arith.constant 0 : index
    %c0_15 = arith.constant 0 : index
    %27 = vector.load %arg7[%c0_14, %c0_15] : memref<1x128xf32, #tpu.memory_space<vmem>>, vector<1x128xf32>
    %28 = vector.broadcast %27 : vector<1x128xf32> to vector<2x128xf32>
    %29 = arith.addf %26, %28 : vector<2x128xf32>
    %c0_16 = arith.constant 0 : index
    %c0_17 = arith.constant 0 : index
    %30 = vector.load %arg8[%c0_16, %c0_17] : memref<128x128xbf16, #tpu.memory_space<vmem>>, vector<128x128xbf16>
    %cst_18 = arith.constant dense<0.000000e+00> : vector<2x128xf32>
    %31 = tpu.matmul %19, %30, %cst_18 {dimension_numbers = #tpu.dot_dimension_numbers<[1], [0], [0], [1], [0, 0, 1, 1], [], []>} : vector<2x128xbf16>, vector<128x128xbf16>, vector<2x128xf32> -> vector<2x128xf32>
    %c0_19 = arith.constant 0 : index
    %c0_20 = arith.constant 0 : index
    %32 = vector.load %arg9[%c0_19, %c0_20] : memref<1x128xf32, #tpu.memory_space<vmem>>, vector<1x128xf32>
    %33 = vector.broadcast %32 : vector<1x128xf32> to vector<2x128xf32>
    %34 = arith.addf %31, %33 : vector<2x128xf32>
    %35 = tpu.iota {dimensions = array<i32: 0>} : vector<128x128xi32>
    %36 = tpu.iota {dimensions = array<i32: 1>} : vector<128x128xi32>
    %c1_i32_21 = arith.constant 1 : i32
    %37 = vector.broadcast %c1_i32_21 : i32 to vector<128x128xi32>
    %38 = arith.addi %35, %37 : vector<128x128xi32>
    %c1_i32_22 = arith.constant 1 : i32
    %39 = vector.broadcast %c1_i32_22 : i32 to vector<128x128xi32>
    %40 = arith.andi %35, %39 : vector<128x128xi32>
    %c2_i32 = arith.constant 2 : i32
    %41 = vector.broadcast %c2_i32 : i32 to vector<128x128xi32>
    %42 = arith.muli %41, %40 : vector<128x128xi32>
    %43 = arith.subi %38, %42 : vector<128x128xi32>
    %44 = arith.cmpi eq, %36, %43 : vector<128x128xi32>
    %cst_23 = arith.constant 1.000000e+00 : f32
    %cst_24 = arith.constant 0.000000e+00 : f32
    %45 = vector.broadcast %cst_23 : f32 to vector<128x128xf32>
    %46 = vector.broadcast %cst_24 : f32 to vector<128x128xf32>
    %47 = arith.select %44, %45, %46 : vector<128x128xi1>, vector<128x128xf32>
    %48 = arith.truncf %47 : vector<128x128xf32> to vector<128x128xbf16>
    %c0_25 = arith.constant 0 : index
    %c0_26 = arith.constant 0 : index
    %49 = vector.load %arg17[%c0_25, %c0_26] : memref<1x128xf32, #tpu.memory_space<vmem>>, vector<1x128xf32>
    %c0_27 = arith.constant 0 : index
    %c0_28 = arith.constant 0 : index
    %50 = vector.load %arg18[%c0_27, %c0_28] : memref<1x128xf32, #tpu.memory_space<vmem>>, vector<1x128xf32>
    %51 = arith.truncf %24 : vector<2x128xf32> to vector<2x128xbf16>
    %cst_29 = arith.constant dense<0.000000e+00> : vector<2x128xf32>
    %52 = tpu.matmul %51, %48, %cst_29 {dimension_numbers = #tpu.dot_dimension_numbers<[1], [0], [0], [1], [0, 0, 1, 1], [], []>} : vector<2x128xbf16>, vector<128x128xbf16>, vector<2x128xf32> -> vector<2x128xf32>
    %53 = arith.truncf %29 : vector<2x128xf32> to vector<2x128xbf16>
    %cst_30 = arith.constant dense<0.000000e+00> : vector<2x128xf32>
    %54 = tpu.matmul %53, %48, %cst_30 {dimension_numbers = #tpu.dot_dimension_numbers<[1], [0], [0], [1], [0, 0, 1, 1], [], []>} : vector<2x128xbf16>, vector<128x128xbf16>, vector<2x128xf32> -> vector<2x128xf32>
    %55 = vector.broadcast %49 : vector<1x128xf32> to vector<2x128xf32>
    %56 = arith.mulf %24, %55 : vector<2x128xf32>
    %57 = vector.broadcast %50 : vector<1x128xf32> to vector<2x128xf32>
    %58 = arith.mulf %52, %57 : vector<2x128xf32>
    %59 = arith.addf %56, %58 : vector<2x128xf32>
    %60 = vector.broadcast %49 : vector<1x128xf32> to vector<2x128xf32>
    %61 = arith.mulf %29, %60 : vector<2x128xf32>
    %62 = vector.broadcast %50 : vector<1x128xf32> to vector<2x128xf32>
    %63 = arith.mulf %54, %62 : vector<2x128xf32>
    %64 = arith.addf %61, %63 : vector<2x128xf32>
    %65 = vector.shape_cast %64 : vector<2x128xf32> to vector<2x1x128xf32>
    %c0_31 = arith.constant 0 : index
    %c0_32 = arith.constant 0 : index
    %c0_33 = arith.constant 0 : index
    %66 = vector.load %arg24[%c0_31, %c0_32, %c0_33] : memref<2x1x128xf32, #tpu.memory_space<vmem>>, vector<2x1x128xf32>
    tpu.vector_store %arg24[%c0_31, %c0_32, %c0_33], %65 {strides = array<i32>} : memref<2x1x128xf32, #tpu.memory_space<vmem>>, vector<2x1x128xf32>,
    %67 = vector.shape_cast %34 : vector<2x128xf32> to vector<2x1x128xf32>
    %c0_34 = arith.constant 0 : index
    %c0_35 = arith.constant 0 : index
    %c0_36 = arith.constant 0 : index
    %68 = vector.load %arg25[%c0_34, %c0_35, %c0_36] : memref<2x1x128xf32, #tpu.memory_space<vmem>>, vector<2x1x128xf32>
    tpu.vector_store %arg25[%c0_34, %c0_35, %c0_36], %67 {strides = array<i32>} : memref<2x1x128xf32, #tpu.memory_space<vmem>>, vector<2x1x128xf32>,
    %c0_i32_37 = arith.constant 0 : i32
    %69 = tpu.memref_slice %arg26[%c0_i32_37] : memref<4x!tpu.dma_semaphore, #tpu.memory_space<semaphore_mem>> -> memref<1x!tpu.dma_semaphore, #tpu.memory_space<semaphore_mem>>
    %70 = tpu.memref_squeeze %69 : memref<1x!tpu.dma_semaphore, #tpu.memory_space<semaphore_mem>> -> memref<!tpu.dma_semaphore, #tpu.memory_space<semaphore_mem>>
    tpu.wait_dma2 semaphore(%70 : memref<!tpu.dma_semaphore, #tpu.memory_space<semaphore_mem>>) src(%arg2 : memref<2x16x128xf32, #tpu.memory_space<any>>) dst(%arg22 : memref<2x16x128xf32, #tpu.memory_space<vmem>>)
    %c1_i32_38 = arith.constant 1 : i32
    %71 = tpu.memref_slice %arg26[%c1_i32_38] : memref<4x!tpu.dma_semaphore, #tpu.memory_space<semaphore_mem>> -> memref<1x!tpu.dma_semaphore, #tpu.memory_space<semaphore_mem>>
    %72 = tpu.memref_squeeze %71 : memref<1x!tpu.dma_semaphore, #tpu.memory_space<semaphore_mem>> -> memref<!tpu.dma_semaphore, #tpu.memory_space<semaphore_mem>>
    tpu.wait_dma2 semaphore(%72 : memref<!tpu.dma_semaphore, #tpu.memory_space<semaphore_mem>>) src(%arg3 : memref<2x16x128xf32, #tpu.memory_space<any>>) dst(%arg23 : memref<2x16x128xf32, #tpu.memory_space<vmem>>)
    %c2_i32_39 = arith.constant 2 : i32
    %c0_i32_40 = arith.constant 0 : i32
    %c0_i32_41 = arith.constant 0 : i32
    %73 = tpu.memref_slice %arg20[%c0_i32_40, %0, %c0_i32_41] : memref<2x16x128xf32, #tpu.memory_space<any>> -> memref<2x1x128xf32, #tpu.memory_space<any>>
    %74 = tpu.memref_slice %arg26[%c2_i32_39] : memref<4x!tpu.dma_semaphore, #tpu.memory_space<semaphore_mem>> -> memref<1x!tpu.dma_semaphore, #tpu.memory_space<semaphore_mem>>
    %75 = tpu.memref_squeeze %74 : memref<1x!tpu.dma_semaphore, #tpu.memory_space<semaphore_mem>> -> memref<!tpu.dma_semaphore, #tpu.memory_space<semaphore_mem>>
    tpu.enqueue_dma source(%arg24 : memref<2x1x128xf32, #tpu.memory_space<vmem>>) target(%73 : memref<2x1x128xf32, #tpu.memory_space<any>>) target_semaphore(%75 : memref<!tpu.dma_semaphore, #tpu.memory_space<semaphore_mem>>)
    %c3_i32 = arith.constant 3 : i32
    %c0_i32_42 = arith.constant 0 : i32
    %c0_i32_43 = arith.constant 0 : i32
    %76 = tpu.memref_slice %arg21[%c0_i32_42, %0, %c0_i32_43] : memref<2x16x128xf32, #tpu.memory_space<any>> -> memref<2x1x128xf32, #tpu.memory_space<any>>
    %77 = tpu.memref_slice %arg26[%c3_i32] : memref<4x!tpu.dma_semaphore, #tpu.memory_space<semaphore_mem>> -> memref<1x!tpu.dma_semaphore, #tpu.memory_space<semaphore_mem>>
    %78 = tpu.memref_squeeze %77 : memref<1x!tpu.dma_semaphore, #tpu.memory_space<semaphore_mem>> -> memref<!tpu.dma_semaphore, #tpu.memory_space<semaphore_mem>>
    tpu.enqueue_dma source(%arg25 : memref<2x1x128xf32, #tpu.memory_space<vmem>>) target(%76 : memref<2x1x128xf32, #tpu.memory_space<any>>) target_semaphore(%78 : memref<!tpu.dma_semaphore, #tpu.memory_space<semaphore_mem>>)
    %79 = tpu.iota {dimensions = array<i32: 1>} : vector<1x16x1xi32>
    %80 = vector.broadcast %0 : i32 to vector<1x16x1xi32>
    %81 = arith.cmpi eq, %79, %80 : vector<1x16x1xi32>
    %82 = vector.shape_cast %64 : vector<2x128xf32> to vector<2x1x128xf32>
    %c0_44 = arith.constant 0 : index
    %c0_45 = arith.constant 0 : index
    %c0_46 = arith.constant 0 : index
    %83 = vector.load %arg22[%c0_44, %c0_45, %c0_46] : memref<2x16x128xf32, #tpu.memory_space<vmem>>, vector<2x16x128xf32>
    %84 = vector.shape_cast %81 : vector<1x16x1xi1> to vector<1x16x1xi1>
    %85 = vector.broadcast %84 : vector<1x16x1xi1> to vector<2x16x128xi1>
    %86 = vector.shape_cast %82 : vector<2x1x128xf32> to vector<2x1x128xf32>
    %87 = vector.broadcast %86 : vector<2x1x128xf32> to vector<2x16x128xf32>
    %88 = arith.select %85, %87, %83 : vector<2x16x128xi1>, vector<2x16x128xf32>
    %89 = vector.shape_cast %34 : vector<2x128xf32> to vector<2x1x128xf32>
    %c0_47 = arith.constant 0 : index
    %c0_48 = arith.constant 0 : index
    %c0_49 = arith.constant 0 : index
    %90 = vector.load %arg23[%c0_47, %c0_48, %c0_49] : memref<2x16x128xf32, #tpu.memory_space<vmem>>, vector<2x16x128xf32>
    %91 = vector.shape_cast %81 : vector<1x16x1xi1> to vector<1x16x1xi1>
    %92 = vector.broadcast %91 : vector<1x16x1xi1> to vector<2x16x128xi1>
    %93 = vector.shape_cast %89 : vector<2x1x128xf32> to vector<2x1x128xf32>
    %94 = vector.broadcast %93 : vector<2x1x128xf32> to vector<2x16x128xf32>
    %95 = arith.select %92, %94, %90 : vector<2x16x128xi1>, vector<2x16x128xf32>
    %96 = tpu.iota {dimensions = array<i32: 2>} : vector<1x1x16xi32>
    %97 = vector.broadcast %0 : i32 to vector<1x1x16xi32>
    %98 = arith.cmpi sle, %96, %97 : vector<1x1x16xi32>
    %99 = vector.extract_strided_slice %59 {offsets = [0, 0], sizes = [2, 32], strides = [1, 1]} : vector<2x128xf32> to vector<2x32xf32>
    %100 = vector.shape_cast %99 : vector<2x32xf32> to vector<2x1x32xf32>
    %101 = arith.truncf %100 : vector<2x1x32xf32> to vector<2x1x32xbf16>
    %102 = vector.extract_strided_slice %88 {offsets = [0, 0, 0], sizes = [2, 16, 32], strides = [1, 1, 1]} : vector<2x16x128xf32> to vector<2x16x32xf32>
    %103 = arith.truncf %102 : vector<2x16x32xf32> to vector<2x16x32xbf16>
    %104 = vector.extract_strided_slice %95 {offsets = [0, 0, 0], sizes = [2, 16, 32], strides = [1, 1, 1]} : vector<2x16x128xf32> to vector<2x16x32xf32>
    %105 = arith.truncf %104 : vector<2x16x32xf32> to vector<2x16x32xbf16>
    "tpu.trace_start"() <{level = 10 : i32, message = "bqd,bkd->bqk"}> : () -> ()
    %cst_50 = arith.constant dense<0.000000e+00> : vector<2x1x16xf32>
    %106 = tpu.matmul %101, %103, %cst_50 {dimension_numbers = #tpu.dot_dimension_numbers<[2], [2], [1], [1], [0, 0, 0, 1, 1, 1], [0], [0]>} : vector<2x1x32xbf16>, vector<2x16x32xbf16>, vector<2x1x16xf32> -> vector<2x1x16xf32>
    "tpu.trace_stop"() : () -> ()
    %cst_51 = arith.constant 0.176776692 : f32
    %107 = vector.broadcast %cst_51 : f32 to vector<2x1x16xf32>
    %108 = arith.mulf %106, %107 : vector<2x1x16xf32>
    %cst_52 = arith.constant 0xFF800000 : f32
    %109 = vector.shape_cast %98 : vector<1x1x16xi1> to vector<1x1x16xi1>
    %110 = vector.broadcast %109 : vector<1x1x16xi1> to vector<2x1x16xi1>
    %111 = vector.broadcast %cst_52 : f32 to vector<2x1x16xf32>
    %112 = arith.select %110, %108, %111 : vector<2x1x16xi1>, vector<2x1x16xf32>
    %cst_53 = arith.constant dense<0xFF800000> : vector<2x1xf32>
    %113 = vector.multi_reduction <maximumf>, %112, %cst_53 [2] : vector<2x1x16xf32> to vector<2x1xf32>
    %114 = vector.shape_cast %113 : vector<2x1xf32> to vector<2x1x1xf32>
    %115 = vector.broadcast %114 : vector<2x1x1xf32> to vector<2x1x16xf32>
    %116 = arith.subf %112, %115 : vector<2x1x16xf32>
    %117 = math.exp %116 : vector<2x1x16xf32>
    %cst_54 = arith.constant dense<0.000000e+00> : vector<2x1xf32>
    %118 = vector.multi_reduction <add>, %117, %cst_54 [2] : vector<2x1x16xf32> to vector<2x1xf32>
    %119 = vector.shape_cast %118 : vector<2x1xf32> to vector<2x1x1xf32>
    %120 = tpu.reciprocal %119 {approx = true} : vector<2x1x1xf32> -> vector<2x1x1xf32>
    %121 = vector.broadcast %120 : vector<2x1x1xf32> to vector<2x1x16xf32>
    %122 = arith.mulf %117, %121 : vector<2x1x16xf32>
    %123 = arith.truncf %122 : vector<2x1x16xf32> to vector<2x1x16xbf16>
    "tpu.trace_start"() <{level = 10 : i32, message = "bqk,bkd->bqd"}> : () -> ()
    %cst_55 = arith.constant dense<0.000000e+00> : vector<2x1x32xf32>
    %124 = tpu.matmul %123, %105, %cst_55 {dimension_numbers = #tpu.dot_dimension_numbers<[2], [1], [1], [2], [0, 0, 0, 1, 1, 2], [0], [0]>} : vector<2x1x16xbf16>, vector<2x16x32xbf16>, vector<2x1x32xf32> -> vector<2x1x32xf32>
    "tpu.trace_stop"() : () -> ()
    %125 = vector.shape_cast %124 : vector<2x1x32xf32> to vector<2x32xf32>
    %126 = vector.extract_strided_slice %59 {offsets = [0, 32], sizes = [2, 32], strides = [1, 1]} : vector<2x128xf32> to vector<2x32xf32>
    %127 = vector.shape_cast %126 : vector<2x32xf32> to vector<2x1x32xf32>
    %128 = arith.truncf %127 : vector<2x1x32xf32> to vector<2x1x32xbf16>
    %129 = vector.extract_strided_slice %88 {offsets = [0, 0, 32], sizes = [2, 16, 32], strides = [1, 1, 1]} : vector<2x16x128xf32> to vector<2x16x32xf32>
    %130 = arith.truncf %129 : vector<2x16x32xf32> to vector<2x16x32xbf16>
    %131 = vector.extract_strided_slice %95 {offsets = [0, 0, 32], sizes = [2, 16, 32], strides = [1, 1, 1]} : vector<2x16x128xf32> to vector<2x16x32xf32>
    %132 = arith.truncf %131 : vector<2x16x32xf32> to vector<2x16x32xbf16>
    "tpu.trace_start"() <{level = 10 : i32, message = "bqd,bkd->bqk"}> : () -> ()
    %cst_56 = arith.constant dense<0.000000e+00> : vector<2x1x16xf32>
    %133 = tpu.matmul %128, %130, %cst_56 {dimension_numbers = #tpu.dot_dimension_numbers<[2], [2], [1], [1], [0, 0, 0, 1, 1, 1], [0], [0]>} : vector<2x1x32xbf16>, vector<2x16x32xbf16>, vector<2x1x16xf32> -> vector<2x1x16xf32>
    "tpu.trace_stop"() : () -> ()
    %cst_57 = arith.constant 0.176776692 : f32
    %134 = vector.broadcast %cst_57 : f32 to vector<2x1x16xf32>
    %135 = arith.mulf %133, %134 : vector<2x1x16xf32>
    %cst_58 = arith.constant 0xFF800000 : f32
    %136 = vector.shape_cast %98 : vector<1x1x16xi1> to vector<1x1x16xi1>
    %137 = vector.broadcast %136 : vector<1x1x16xi1> to vector<2x1x16xi1>
    %138 = vector.broadcast %cst_58 : f32 to vector<2x1x16xf32>
    %139 = arith.select %137, %135, %138 : vector<2x1x16xi1>, vector<2x1x16xf32>
    %cst_59 = arith.constant dense<0xFF800000> : vector<2x1xf32>
    %140 = vector.multi_reduction <maximumf>, %139, %cst_59 [2] : vector<2x1x16xf32> to vector<2x1xf32>
    %141 = vector.shape_cast %140 : vector<2x1xf32> to vector<2x1x1xf32>
    %142 = vector.broadcast %141 : vector<2x1x1xf32> to vector<2x1x16xf32>
    %143 = arith.subf %139, %142 : vector<2x1x16xf32>
    %144 = math.exp %143 : vector<2x1x16xf32>
    %cst_60 = arith.constant dense<0.000000e+00> : vector<2x1xf32>
    %145 = vector.multi_reduction <add>, %144, %cst_60 [2] : vector<2x1x16xf32> to vector<2x1xf32>
    %146 = vector.shape_cast %145 : vector<2x1xf32> to vector<2x1x1xf32>
    %147 = tpu.reciprocal %146 {approx = true} : vector<2x1x1xf32> -> vector<2x1x1xf32>
    %148 = vector.broadcast %147 : vector<2x1x1xf32> to vector<2x1x16xf32>
    %149 = arith.mulf %144, %148 : vector<2x1x16xf32>
    %150 = arith.truncf %149 : vector<2x1x16xf32> to vector<2x1x16xbf16>
    "tpu.trace_start"() <{level = 10 : i32, message = "bqk,bkd->bqd"}> : () -> ()
    %cst_61 = arith.constant dense<0.000000e+00> : vector<2x1x32xf32>
    %151 = tpu.matmul %150, %132, %cst_61 {dimension_numbers = #tpu.dot_dimension_numbers<[2], [1], [1], [2], [0, 0, 0, 1, 1, 2], [0], [0]>} : vector<2x1x16xbf16>, vector<2x16x32xbf16>, vector<2x1x32xf32> -> vector<2x1x32xf32>
    "tpu.trace_stop"() : () -> ()
    %152 = vector.shape_cast %151 : vector<2x1x32xf32> to vector<2x32xf32>
    %153 = vector.extract_strided_slice %59 {offsets = [0, 64], sizes = [2, 32], strides = [1, 1]} : vector<2x128xf32> to vector<2x32xf32>
    %154 = vector.shape_cast %153 : vector<2x32xf32> to vector<2x1x32xf32>
    %155 = arith.truncf %154 : vector<2x1x32xf32> to vector<2x1x32xbf16>
    %156 = vector.extract_strided_slice %88 {offsets = [0, 0, 64], sizes = [2, 16, 32], strides = [1, 1, 1]} : vector<2x16x128xf32> to vector<2x16x32xf32>
    %157 = arith.truncf %156 : vector<2x16x32xf32> to vector<2x16x32xbf16>
    %158 = vector.extract_strided_slice %95 {offsets = [0, 0, 64], sizes = [2, 16, 32], strides = [1, 1, 1]} : vector<2x16x128xf32> to vector<2x16x32xf32>
    %159 = arith.truncf %158 : vector<2x16x32xf32> to vector<2x16x32xbf16>
    "tpu.trace_start"() <{level = 10 : i32, message = "bqd,bkd->bqk"}> : () -> ()
    %cst_62 = arith.constant dense<0.000000e+00> : vector<2x1x16xf32>
    %160 = tpu.matmul %155, %157, %cst_62 {dimension_numbers = #tpu.dot_dimension_numbers<[2], [2], [1], [1], [0, 0, 0, 1, 1, 1], [0], [0]>} : vector<2x1x32xbf16>, vector<2x16x32xbf16>, vector<2x1x16xf32> -> vector<2x1x16xf32>
    "tpu.trace_stop"() : () -> ()
    %cst_63 = arith.constant 0.176776692 : f32
    %161 = vector.broadcast %cst_63 : f32 to vector<2x1x16xf32>
    %162 = arith.mulf %160, %161 : vector<2x1x16xf32>
    %cst_64 = arith.constant 0xFF800000 : f32
    %163 = vector.shape_cast %98 : vector<1x1x16xi1> to vector<1x1x16xi1>
    %164 = vector.broadcast %163 : vector<1x1x16xi1> to vector<2x1x16xi1>
    %165 = vector.broadcast %cst_64 : f32 to vector<2x1x16xf32>
    %166 = arith.select %164, %162, %165 : vector<2x1x16xi1>, vector<2x1x16xf32>
    %cst_65 = arith.constant dense<0xFF800000> : vector<2x1xf32>
    %167 = vector.multi_reduction <maximumf>, %166, %cst_65 [2] : vector<2x1x16xf32> to vector<2x1xf32>
    %168 = vector.shape_cast %167 : vector<2x1xf32> to vector<2x1x1xf32>
    %169 = vector.broadcast %168 : vector<2x1x1xf32> to vector<2x1x16xf32>
    %170 = arith.subf %166, %169 : vector<2x1x16xf32>
    %171 = math.exp %170 : vector<2x1x16xf32>
    %cst_66 = arith.constant dense<0.000000e+00> : vector<2x1xf32>
    %172 = vector.multi_reduction <add>, %171, %cst_66 [2] : vector<2x1x16xf32> to vector<2x1xf32>
    %173 = vector.shape_cast %172 : vector<2x1xf32> to vector<2x1x1xf32>
    %174 = tpu.reciprocal %173 {approx = true} : vector<2x1x1xf32> -> vector<2x1x1xf32>
    %175 = vector.broadcast %174 : vector<2x1x1xf32> to vector<2x1x16xf32>
    %176 = arith.mulf %171, %175 : vector<2x1x16xf32>
    %177 = arith.truncf %176 : vector<2x1x16xf32> to vector<2x1x16xbf16>
    "tpu.trace_start"() <{level = 10 : i32, message = "bqk,bkd->bqd"}> : () -> ()
    %cst_67 = arith.constant dense<0.000000e+00> : vector<2x1x32xf32>
    %178 = tpu.matmul %177, %159, %cst_67 {dimension_numbers = #tpu.dot_dimension_numbers<[2], [1], [1], [2], [0, 0, 0, 1, 1, 2], [0], [0]>} : vector<2x1x16xbf16>, vector<2x16x32xbf16>, vector<2x1x32xf32> -> vector<2x1x32xf32>
    "tpu.trace_stop"() : () -> ()
    %179 = vector.shape_cast %178 : vector<2x1x32xf32> to vector<2x32xf32>
    %180 = vector.extract_strided_slice %59 {offsets = [0, 96], sizes = [2, 32], strides = [1, 1]} : vector<2x128xf32> to vector<2x32xf32>
    %181 = vector.shape_cast %180 : vector<2x32xf32> to vector<2x1x32xf32>
    %182 = arith.truncf %181 : vector<2x1x32xf32> to vector<2x1x32xbf16>
    %183 = vector.extract_strided_slice %88 {offsets = [0, 0, 96], sizes = [2, 16, 32], strides = [1, 1, 1]} : vector<2x16x128xf32> to vector<2x16x32xf32>
    %184 = arith.truncf %183 : vector<2x16x32xf32> to vector<2x16x32xbf16>
    %185 = vector.extract_strided_slice %95 {offsets = [0, 0, 96], sizes = [2, 16, 32], strides = [1, 1, 1]} : vector<2x16x128xf32> to vector<2x16x32xf32>
    %186 = arith.truncf %185 : vector<2x16x32xf32> to vector<2x16x32xbf16>
    "tpu.trace_start"() <{level = 10 : i32, message = "bqd,bkd->bqk"}> : () -> ()
    %cst_68 = arith.constant dense<0.000000e+00> : vector<2x1x16xf32>
    %187 = tpu.matmul %182, %184, %cst_68 {dimension_numbers = #tpu.dot_dimension_numbers<[2], [2], [1], [1], [0, 0, 0, 1, 1, 1], [0], [0]>} : vector<2x1x32xbf16>, vector<2x16x32xbf16>, vector<2x1x16xf32> -> vector<2x1x16xf32>
    "tpu.trace_stop"() : () -> ()
    %cst_69 = arith.constant 0.176776692 : f32
    %188 = vector.broadcast %cst_69 : f32 to vector<2x1x16xf32>
    %189 = arith.mulf %187, %188 : vector<2x1x16xf32>
    %cst_70 = arith.constant 0xFF800000 : f32
    %190 = vector.shape_cast %98 : vector<1x1x16xi1> to vector<1x1x16xi1>
    %191 = vector.broadcast %190 : vector<1x1x16xi1> to vector<2x1x16xi1>
    %192 = vector.broadcast %cst_70 : f32 to vector<2x1x16xf32>
    %193 = arith.select %191, %189, %192 : vector<2x1x16xi1>, vector<2x1x16xf32>
    %cst_71 = arith.constant dense<0xFF800000> : vector<2x1xf32>
    %194 = vector.multi_reduction <maximumf>, %193, %cst_71 [2] : vector<2x1x16xf32> to vector<2x1xf32>
    %195 = vector.shape_cast %194 : vector<2x1xf32> to vector<2x1x1xf32>
    %196 = vector.broadcast %195 : vector<2x1x1xf32> to vector<2x1x16xf32>
    %197 = arith.subf %193, %196 : vector<2x1x16xf32>
    %198 = math.exp %197 : vector<2x1x16xf32>
    %cst_72 = arith.constant dense<0.000000e+00> : vector<2x1xf32>
    %199 = vector.multi_reduction <add>, %198, %cst_72 [2] : vector<2x1x16xf32> to vector<2x1xf32>
    %200 = vector.shape_cast %199 : vector<2x1xf32> to vector<2x1x1xf32>
    %201 = tpu.reciprocal %200 {approx = true} : vector<2x1x1xf32> -> vector<2x1x1xf32>
    %202 = vector.broadcast %201 : vector<2x1x1xf32> to vector<2x1x16xf32>
    %203 = arith.mulf %198, %202 : vector<2x1x16xf32>
    %204 = arith.truncf %203 : vector<2x1x16xf32> to vector<2x1x16xbf16>
    "tpu.trace_start"() <{level = 10 : i32, message = "bqk,bkd->bqd"}> : () -> ()
    %cst_73 = arith.constant dense<0.000000e+00> : vector<2x1x32xf32>
    %205 = tpu.matmul %204, %186, %cst_73 {dimension_numbers = #tpu.dot_dimension_numbers<[2], [1], [1], [2], [0, 0, 0, 1, 1, 2], [0], [0]>} : vector<2x1x16xbf16>, vector<2x16x32xbf16>, vector<2x1x32xf32> -> vector<2x1x32xf32>
    "tpu.trace_stop"() : () -> ()
    %206 = vector.shape_cast %205 : vector<2x1x32xf32> to vector<2x32xf32>
    %207 = tpu.concatenate %125, %152, %179, %206 in 1 : vector<2x32xf32>, vector<2x32xf32>, vector<2x32xf32>, vector<2x32xf32> -> vector<2x128xf32>
    %208 = arith.truncf %207 : vector<2x128xf32> to vector<2x128xbf16>
    %c0_74 = arith.constant 0 : index
    %c0_75 = arith.constant 0 : index
    %209 = vector.load %arg10[%c0_74, %c0_75] : memref<128x128xbf16, #tpu.memory_space<vmem>>, vector<128x128xbf16>
    %cst_76 = arith.constant dense<0.000000e+00> : vector<2x128xf32>
    %210 = tpu.matmul %208, %209, %cst_76 {dimension_numbers = #tpu.dot_dimension_numbers<[1], [0], [0], [1], [0, 0, 1, 1], [], []>} : vector<2x128xbf16>, vector<128x128xbf16>, vector<2x128xf32> -> vector<2x128xf32>
    %c0_77 = arith.constant 0 : index
    %c0_78 = arith.constant 0 : index
    %211 = vector.load %arg11[%c0_77, %c0_78] : memref<1x128xf32, #tpu.memory_space<vmem>>, vector<1x128xf32>
    %212 = vector.broadcast %211 : vector<1x128xf32> to vector<2x128xf32>
    %213 = arith.addf %210, %212 : vector<2x128xf32>
    %214 = arith.addf %5, %213 : vector<2x128xf32>
    %215 = arith.mulf %214, %214 : vector<2x128xf32>
    %cst_79 = arith.constant dense<0.000000e+00> : vector<2xf32>
    %216 = vector.multi_reduction <add>, %215, %cst_79 [1] : vector<2x128xf32> to vector<2xf32>
    %217 = vector.shape_cast %216 : vector<2xf32> to vector<2x1xf32>
    %cst_80 = arith.constant 1.280000e+02 : f32
    %218 = vector.broadcast %cst_80 : f32 to vector<2x1xf32>
    %219 = arith.divf %217, %218 : vector<2x1xf32>
    %cst_81 = arith.constant 9.99999974E-6 : f32
    %220 = vector.broadcast %cst_81 : f32 to vector<2x1xf32>
    %221 = arith.addf %219, %220 : vector<2x1xf32>
    %222 = math.rsqrt %221 : vector<2x1xf32>
    %223 = vector.broadcast %222 : vector<2x1xf32> to vector<2x128xf32>
    %224 = arith.mulf %214, %223 : vector<2x128xf32>
    %c0_82 = arith.constant 0 : index
    %c0_83 = arith.constant 0 : index
    %225 = vector.load %arg16[%c0_82, %c0_83] : memref<1x128xf32, #tpu.memory_space<vmem>>, vector<1x128xf32>
    %226 = vector.broadcast %225 : vector<1x128xf32> to vector<2x128xf32>
    %227 = arith.mulf %224, %226 : vector<2x128xf32>
    %228 = arith.truncf %227 : vector<2x128xf32> to vector<2x128xbf16>
    %c0_84 = arith.constant 0 : index
    %c0_85 = arith.constant 0 : index
    %229 = vector.load %arg12[%c0_84, %c0_85] : memref<128x468xbf16, #tpu.memory_space<vmem>>, vector<128x468xbf16>
    %cst_86 = arith.constant dense<0.000000e+00> : vector<2x468xf32>
    %230 = tpu.matmul %228, %229, %cst_86 {dimension_numbers = #tpu.dot_dimension_numbers<[1], [0], [0], [1], [0, 0, 1, 1], [], []>} : vector<2x128xbf16>, vector<128x468xbf16>, vector<2x468xf32> -> vector<2x468xf32>
    %c0_87 = arith.constant 0 : index
    %c0_88 = arith.constant 0 : index
    %231 = vector.load %arg13[%c0_87, %c0_88] : memref<128x468xbf16, #tpu.memory_space<vmem>>, vector<128x468xbf16>
    %cst_89 = arith.constant dense<0.000000e+00> : vector<2x468xf32>
    %232 = tpu.matmul %228, %231, %cst_89 {dimension_numbers = #tpu.dot_dimension_numbers<[1], [0], [0], [1], [0, 0, 1, 1], [], []>} : vector<2x128xbf16>, vector<128x468xbf16>, vector<2x468xf32> -> vector<2x468xf32>
    %233 = arith.negf %230 : vector<2x468xf32>
    %234 = math.exp %233 : vector<2x468xf32>
    %cst_90 = arith.constant 1.000000e+00 : f32
    %235 = vector.broadcast %cst_90 : f32 to vector<2x468xf32>
    %236 = arith.addf %235, %234 : vector<2x468xf32>
    %237 = arith.divf %235, %236 : vector<2x468xf32>
    %238 = arith.mulf %230, %237 : vector<2x468xf32>
    %239 = arith.mulf %238, %232 : vector<2x468xf32>
    %240 = arith.truncf %239 : vector<2x468xf32> to vector<2x468xbf16>
    %c0_91 = arith.constant 0 : index
    %c0_92 = arith.constant 0 : index
    %241 = vector.load %arg14[%c0_91, %c0_92] : memref<468x128xbf16, #tpu.memory_space<vmem>>, vector<468x128xbf16>
    %cst_93 = arith.constant dense<0.000000e+00> : vector<2x128xf32>
    %242 = tpu.matmul %240, %241, %cst_93 {dimension_numbers = #tpu.dot_dimension_numbers<[1], [0], [0], [1], [0, 0, 1, 1], [], []>} : vector<2x468xbf16>, vector<468x128xbf16>, vector<2x128xf32> -> vector<2x128xf32>
    %243 = arith.addf %214, %242 : vector<2x128xf32>
    %c0_94 = arith.constant 0 : index
    %c0_95 = arith.constant 0 : index
    %244 = vector.load %arg19[%c0_94, %c0_95] : memref<2x128xf32, #tpu.memory_space<vmem>>, vector<2x128xf32>
    tpu.vector_store %arg19[%c0_94, %c0_95], %243 {strides = array<i32>} : memref<2x128xf32, #tpu.memory_space<vmem>>, vector<2x128xf32>,
    %c2_i32_96 = arith.constant 2 : i32
    %c0_i32_97 = arith.constant 0 : i32
    %c0_i32_98 = arith.constant 0 : i32
    %245 = tpu.memref_slice %arg20[%c0_i32_97, %0, %c0_i32_98] : memref<2x16x128xf32, #tpu.memory_space<any>> -> memref<2x1x128xf32, #tpu.memory_space<any>>
    %246 = tpu.memref_slice %arg26[%c2_i32_96] : memref<4x!tpu.dma_semaphore, #tpu.memory_space<semaphore_mem>> -> memref<1x!tpu.dma_semaphore, #tpu.memory_space<semaphore_mem>>
    %247 = tpu.memref_squeeze %246 : memref<1x!tpu.dma_semaphore, #tpu.memory_space<semaphore_mem>> -> memref<!tpu.dma_semaphore, #tpu.memory_space<semaphore_mem>>
    tpu.wait_dma2 semaphore(%247 : memref<!tpu.dma_semaphore, #tpu.memory_space<semaphore_mem>>) src(%arg24 : memref<2x1x128xf32, #tpu.memory_space<vmem>>) dst(%245 : memref<2x1x128xf32, #tpu.memory_space<any>>)
    %c3_i32_99 = arith.constant 3 : i32
    %c0_i32_100 = arith.constant 0 : i32
    %c0_i32_101 = arith.constant 0 : i32
    %248 = tpu.memref_slice %arg21[%c0_i32_100, %0, %c0_i32_101] : memref<2x16x128xf32, #tpu.memory_space<any>> -> memref<2x1x128xf32, #tpu.memory_space<any>>
    %249 = tpu.memref_slice %arg26[%c3_i32_99] : memref<4x!tpu.dma_semaphore, #tpu.memory_space<semaphore_mem>> -> memref<1x!tpu.dma_semaphore, #tpu.memory_space<semaphore_mem>>
    %250 = tpu.memref_squeeze %249 : memref<1x!tpu.dma_semaphore, #tpu.memory_space<semaphore_mem>> -> memref<!tpu.dma_semaphore, #tpu.memory_space<semaphore_mem>>
    tpu.wait_dma2 semaphore(%250 : memref<!tpu.dma_semaphore, #tpu.memory_space<semaphore_mem>>) src(%arg25 : memref<2x1x128xf32, #tpu.memory_space<vmem>>) dst(%248 : memref<2x1x128xf32, #tpu.memory_space<any>>)
    return
  }
}

module attributes {stable_mosaic.version = 11 : i64} {
  func.func @_layer_kernel(%arg0: memref<1xi32, #tpu.memory_space<smem>>, %arg1: memref<2x128xf32, #tpu.memory_space<vmem>>, %arg2: memref<2x16x128xf32, #tpu.memory_space<any>>, %arg3: memref<2x16x128xf32, #tpu.memory_space<any>>, %arg4: memref<128x128xbf16, #tpu.memory_space<vmem>>, %arg5: memref<1x128xf32, #tpu.memory_space<vmem>>, %arg6: memref<128x128xbf16, #tpu.memory_space<vmem>>, %arg7: memref<1x128xf32, #tpu.memory_space<vmem>>, %arg8: memref<128x128xbf16, #tpu.memory_space<vmem>>, %arg9: memref<1x128xf32, #tpu.memory_space<vmem>>, %arg10: memref<128x128xbf16, #tpu.memory_space<vmem>>, %arg11: memref<1x128xf32, #tpu.memory_space<vmem>>, %arg12: memref<128x468xbf16, #tpu.memory_space<vmem>>, %arg13: memref<128x468xbf16, #tpu.memory_space<vmem>>, %arg14: memref<468x128xbf16, #tpu.memory_space<vmem>>, %arg15: memref<1x128xf32, #tpu.memory_space<vmem>>, %arg16: memref<1x128xf32, #tpu.memory_space<vmem>>, %arg17: memref<1x128xf32, #tpu.memory_space<vmem>>, %arg18: memref<1x128xf32, #tpu.memory_space<vmem>>, %arg19: memref<2x128xf32, #tpu.memory_space<vmem>>, %arg20: memref<2x16x128xf32, #tpu.memory_space<any>>, %arg21: memref<2x16x128xf32, #tpu.memory_space<any>>, %arg22: memref<2x16x128xf32, #tpu.memory_space<vmem>>, %arg23: memref<2x16x128xf32, #tpu.memory_space<vmem>>, %arg24: memref<2x1x128xf32, #tpu.memory_space<vmem>>, %arg25: memref<2x1x128xf32, #tpu.memory_space<vmem>>, %arg26: memref<4x!tpu.dma_semaphore, #tpu.memory_space<semaphore_mem>>) attributes {dimension_semantics = [], scalar_prefetch = 0 : i64, scratch_operands = 5 : i64, tpu.core_type = #tpu.core_type<tc>} {
    %c0 = arith.constant 0 : index
    %0 = memref.load %arg0[%c0] : memref<1xi32, #tpu.memory_space<smem>>
    %c0_i32 = arith.constant 0 : i32
    %1 = tpu.memref_slice %arg26[%c0_i32] : memref<4x!tpu.dma_semaphore, #tpu.memory_space<semaphore_mem>> -> memref<1x!tpu.dma_semaphore, #tpu.memory_space<semaphore_mem>>
    %2 = tpu.memref_squeeze %1 : memref<1x!tpu.dma_semaphore, #tpu.memory_space<semaphore_mem>> -> memref<!tpu.dma_semaphore, #tpu.memory_space<semaphore_mem>>
    tpu.enqueue_dma source(%arg2 : memref<2x16x128xf32, #tpu.memory_space<any>>) target(%arg22 : memref<2x16x128xf32, #tpu.memory_space<vmem>>) target_semaphore(%2 : memref<!tpu.dma_semaphore, #tpu.memory_space<semaphore_mem>>)
    %c1_i32 = arith.constant 1 : i32
    %3 = tpu.memref_slice %arg26[%c1_i32] : memref<4x!tpu.dma_semaphore, #tpu.memory_space<semaphore_mem>> -> memref<1x!tpu.dma_semaphore, #tpu.memory_space<semaphore_mem>>
    %4 = tpu.memref_squeeze %3 : memref<1x!tpu.dma_semaphore, #tpu.memory_space<semaphore_mem>> -> memref<!tpu.dma_semaphore, #tpu.memory_space<semaphore_mem>>
    tpu.enqueue_dma source(%arg3 : memref<2x16x128xf32, #tpu.memory_space<any>>) target(%arg23 : memref<2x16x128xf32, #tpu.memory_space<vmem>>) target_semaphore(%4 : memref<!tpu.dma_semaphore, #tpu.memory_space<semaphore_mem>>)
    %c0_0 = arith.constant 0 : index
    %c0_1 = arith.constant 0 : index
    %5 = vector.load %arg1[%c0_0, %c0_1] : memref<2x128xf32, #tpu.memory_space<vmem>>, vector<2x128xf32>
    %6 = arith.mulf %5, %5 : vector<2x128xf32>
    %cst = arith.constant dense<0.000000e+00> : vector<2xf32>
    %7 = vector.multi_reduction <add>, %6, %cst [1] : vector<2x128xf32> to vector<2xf32>
    %8 = vector.shape_cast %7 : vector<2xf32> to vector<2x1xf32>
    %cst_2 = arith.constant 1.280000e+02 : f32
    %9 = vector.broadcast %cst_2 : f32 to vector<2x1xf32>
    %10 = arith.divf %8, %9 : vector<2x1xf32>
    %cst_3 = arith.constant 9.99999974E-6 : f32
    %11 = vector.broadcast %cst_3 : f32 to vector<2x1xf32>
    %12 = arith.addf %10, %11 : vector<2x1xf32>
    %13 = math.rsqrt %12 : vector<2x1xf32>
    %14 = vector.broadcast %13 : vector<2x1xf32> to vector<2x128xf32>
    %15 = arith.mulf %5, %14 : vector<2x128xf32>
    %c0_4 = arith.constant 0 : index
    %c0_5 = arith.constant 0 : index
    %16 = vector.load %arg15[%c0_4, %c0_5] : memref<1x128xf32, #tpu.memory_space<vmem>>, vector<1x128xf32>
    %17 = vector.broadcast %16 : vector<1x128xf32> to vector<2x128xf32>
    %18 = arith.mulf %15, %17 : vector<2x128xf32>
    %19 = arith.truncf %18 : vector<2x128xf32> to vector<2x128xbf16>
    %c0_6 = arith.constant 0 : index
    %c0_7 = arith.constant 0 : index
    %20 = vector.load %arg4[%c0_6, %c0_7] : memref<128x128xbf16, #tpu.memory_space<vmem>>, vector<128x128xbf16>
    %cst_8 = arith.constant dense<0.000000e+00> : vector<2x128xf32>
    %21 = tpu.matmul %19, %20, %cst_8 {dimension_numbers = #tpu.dot_dimension_numbers<[1], [0], [0], [1], [0, 0, 1, 1], [], []>} : vector<2x128xbf16>, vector<128x128xbf16>, vector<2x128xf32> -> vector<2x128xf32>
    %c0_9 = arith.constant 0 : index
    %c0_10 = arith.constant 0 : index
    %22 = vector.load %arg5[%c0_9, %c0_10] : memref<1x128xf32, #tpu.memory_space<vmem>>, vector<1x128xf32>
    %23 = vector.broadcast %22 : vector<1x128xf32> to vector<2x128xf32>
    %24 = arith.addf %21, %23 : vector<2x128xf32>
    %c0_11 = arith.constant 0 : index
    %c0_12 = arith.constant 0 : index
    %25 = vector.load %arg6[%c0_11, %c0_12] : memref<128x128xbf16, #tpu.memory_space<vmem>>, vector<128x128xbf16>
    %cst_13 = arith.constant dense<0.000000e+00> : vector<2x128xf32>
    %26 = tpu.matmul %19, %25, %cst_13 {dimension_numbers = #tpu.dot_dimension_numbers<[1], [0], [0], [1], [0, 0, 1, 1], [], []>} : vector<2x128xbf16>, vector<128x128xbf16>, vector<2x128xf32> -> vector<2x128xf32>
    %c0_14 = arith.constant 0 : index
    %c0_15 = arith.constant 0 : index
    %27 = vector.load %arg7[%c0_14, %c0_15] : memref<1x128xf32, #tpu.memory_space<vmem>>, vector<1x128xf32>
    %28 = vector.broadcast %27 : vector<1x128xf32> to vector<2x128xf32>
    %29 = arith.addf %26, %28 : vector<2x128xf32>
    %c0_16 = arith.constant 0 : index
    %c0_17 = arith.constant 0 : index
    %30 = vector.load %arg8[%c0_16, %c0_17] : memref<128x128xbf16, #tpu.memory_space<vmem>>, vector<128x128xbf16>
    %cst_18 = arith.constant dense<0.000000e+00> : vector<2x128xf32>
    %31 = tpu.matmul %19, %30, %cst_18 {dimension_numbers = #tpu.dot_dimension_numbers<[1], [0], [0], [1], [0, 0, 1, 1], [], []>} : vector<2x128xbf16>, vector<128x128xbf16>, vector<2x128xf32> -> vector<2x128xf32>
    %c0_19 = arith.constant 0 : index
    %c0_20 = arith.constant 0 : index
    %32 = vector.load %arg9[%c0_19, %c0_20] : memref<1x128xf32, #tpu.memory_space<vmem>>, vector<1x128xf32>
    %33 = vector.broadcast %32 : vector<1x128xf32> to vector<2x128xf32>
    %34 = arith.addf %31, %33 : vector<2x128xf32>
    %35 = tpu.iota {dimensions = array<i32: 0>} : vector<128x128xi32>
    %36 = tpu.iota {dimensions = array<i32: 1>} : vector<128x128xi32>
    %c1_i32_21 = arith.constant 1 : i32
    %37 = vector.broadcast %c1_i32_21 : i32 to vector<128x128xi32>
    %38 = arith.addi %35, %37 : vector<128x128xi32>
    %c1_i32_22 = arith.constant 1 : i32
    %39 = vector.broadcast %c1_i32_22 : i32 to vector<128x128xi32>
    %40 = arith.andi %35, %39 : vector<128x128xi32>
    %c2_i32 = arith.constant 2 : i32
    %41 = vector.broadcast %c2_i32 : i32 to vector<128x128xi32>
    %42 = arith.muli %41, %40 : vector<128x128xi32>
    %43 = arith.subi %38, %42 : vector<128x128xi32>
    %44 = arith.cmpi eq, %36, %43 : vector<128x128xi32>
    %cst_23 = arith.constant 1.000000e+00 : f32
    %cst_24 = arith.constant 0.000000e+00 : f32
    %45 = vector.broadcast %cst_23 : f32 to vector<128x128xf32>
    %46 = vector.broadcast %cst_24 : f32 to vector<128x128xf32>
    %47 = arith.select %44, %45, %46 : vector<128x128xi1>, vector<128x128xf32>
    %48 = arith.truncf %47 : vector<128x128xf32> to vector<128x128xbf16>
    %c0_25 = arith.constant 0 : index
    %c0_26 = arith.constant 0 : index
    %49 = vector.load %arg17[%c0_25, %c0_26] : memref<1x128xf32, #tpu.memory_space<vmem>>, vector<1x128xf32>
    %c0_27 = arith.constant 0 : index
    %c0_28 = arith.constant 0 : index
    %50 = vector.load %arg18[%c0_27, %c0_28] : memref<1x128xf32, #tpu.memory_space<vmem>>, vector<1x128xf32>
    %51 = arith.truncf %24 : vector<2x128xf32> to vector<2x128xbf16>
    %cst_29 = arith.constant dense<0.000000e+00> : vector<2x128xf32>
    %52 = tpu.matmul %51, %48, %cst_29 {dimension_numbers = #tpu.dot_dimension_numbers<[1], [0], [0], [1], [0, 0, 1, 1], [], []>} : vector<2x128xbf16>, vector<128x128xbf16>, vector<2x128xf32> -> vector<2x128xf32>
    %53 = arith.truncf %29 : vector<2x128xf32> to vector<2x128xbf16>
    %cst_30 = arith.constant dense<0.000000e+00> : vector<2x128xf32>
    %54 = tpu.matmul %53, %48, %cst_30 {dimension_numbers = #tpu.dot_dimension_numbers<[1], [0], [0], [1], [0, 0, 1, 1], [], []>} : vector<2x128xbf16>, vector<128x128xbf16>, vector<2x128xf32> -> vector<2x128xf32>
    %55 = vector.broadcast %49 : vector<1x128xf32> to vector<2x128xf32>
    %56 = arith.mulf %24, %55 : vector<2x128xf32>
    %57 = vector.broadcast %50 : vector<1x128xf32> to vector<2x128xf32>
    %58 = arith.mulf %52, %57 : vector<2x128xf32>
    %59 = arith.addf %56, %58 : vector<2x128xf32>
    %60 = vector.broadcast %49 : vector<1x128xf32> to vector<2x128xf32>
    %61 = arith.mulf %29, %60 : vector<2x128xf32>
    %62 = vector.broadcast %50 : vector<1x128xf32> to vector<2x128xf32>
    %63 = arith.mulf %54, %62 : vector<2x128xf32>
    %64 = arith.addf %61, %63 : vector<2x128xf32>
    %65 = vector.shape_cast %64 : vector<2x128xf32> to vector<2x1x128xf32>
    %c0_31 = arith.constant 0 : index
    %c0_32 = arith.constant 0 : index
    %c0_33 = arith.constant 0 : index
    %66 = vector.load %arg24[%c0_31, %c0_32, %c0_33] : memref<2x1x128xf32, #tpu.memory_space<vmem>>, vector<2x1x128xf32>
    tpu.vector_store %arg24[%c0_31, %c0_32, %c0_33], %65 {strides = array<i32>} : memref<2x1x128xf32, #tpu.memory_space<vmem>>, vector<2x1x128xf32>,
    %67 = vector.shape_cast %34 : vector<2x128xf32> to vector<2x1x128xf32>
    %c0_34 = arith.constant 0 : index
    %c0_35 = arith.constant 0 : index
    %c0_36 = arith.constant 0 : index
    %68 = vector.load %arg25[%c0_34, %c0_35, %c0_36] : memref<2x1x128xf32, #tpu.memory_space<vmem>>, vector<2x1x128xf32>
    tpu.vector_store %arg25[%c0_34, %c0_35, %c0_36], %67 {strides = array<i32>} : memref<2x1x128xf32, #tpu.memory_space<vmem>>, vector<2x1x128xf32>,
    %c0_i32_37 = arith.constant 0 : i32
    %69 = tpu.memref_slice %arg26[%c0_i32_37] : memref<4x!tpu.dma_semaphore, #tpu.memory_space<semaphore_mem>> -> memref<1x!tpu.dma_semaphore, #tpu.memory_space<semaphore_mem>>
    %70 = tpu.memref_squeeze %69 : memref<1x!tpu.dma_semaphore, #tpu.memory_space<semaphore_mem>> -> memref<!tpu.dma_semaphore, #tpu.memory_space<semaphore_mem>>
    tpu.wait_dma2 semaphore(%70 : memref<!tpu.dma_semaphore, #tpu.memory_space<semaphore_mem>>) src(%arg2 : memref<2x16x128xf32, #tpu.memory_space<any>>) dst(%arg22 : memref<2x16x128xf32, #tpu.memory_space<vmem>>)
    %c1_i32_38 = arith.constant 1 : i32
    %71 = tpu.memref_slice %arg26[%c1_i32_38] : memref<4x!tpu.dma_semaphore, #tpu.memory_space<semaphore_mem>> -> memref<1x!tpu.dma_semaphore, #tpu.memory_space<semaphore_mem>>
    %72 = tpu.memref_squeeze %71 : memref<1x!tpu.dma_semaphore, #tpu.memory_space<semaphore_mem>> -> memref<!tpu.dma_semaphore, #tpu.memory_space<semaphore_mem>>
    tpu.wait_dma2 semaphore(%72 : memref<!tpu.dma_semaphore, #tpu.memory_space<semaphore_mem>>) src(%arg3 : memref<2x16x128xf32, #tpu.memory_space<any>>) dst(%arg23 : memref<2x16x128xf32, #tpu.memory_space<vmem>>)
    %c2_i32_39 = arith.constant 2 : i32
    %c0_i32_40 = arith.constant 0 : i32
    %c0_i32_41 = arith.constant 0 : i32
    %73 = tpu.memref_slice %arg20[%c0_i32_40, %0, %c0_i32_41] : memref<2x16x128xf32, #tpu.memory_space<any>> -> memref<2x1x128xf32, #tpu.memory_space<any>>
    %74 = tpu.memref_slice %arg26[%c2_i32_39] : memref<4x!tpu.dma_semaphore, #tpu.memory_space<semaphore_mem>> -> memref<1x!tpu.dma_semaphore, #tpu.memory_space<semaphore_mem>>
    %75 = tpu.memref_squeeze %74 : memref<1x!tpu.dma_semaphore, #tpu.memory_space<semaphore_mem>> -> memref<!tpu.dma_semaphore, #tpu.memory_space<semaphore_mem>>
    tpu.enqueue_dma source(%arg24 : memref<2x1x128xf32, #tpu.memory_space<vmem>>) target(%73 : memref<2x1x128xf32, #tpu.memory_space<any>>) target_semaphore(%75 : memref<!tpu.dma_semaphore, #tpu.memory_space<semaphore_mem>>)
    %c3_i32 = arith.constant 3 : i32
    %c0_i32_42 = arith.constant 0 : i32
    %c0_i32_43 = arith.constant 0 : i32
    %76 = tpu.memref_slice %arg21[%c0_i32_42, %0, %c0_i32_43] : memref<2x16x128xf32, #tpu.memory_space<any>> -> memref<2x1x128xf32, #tpu.memory_space<any>>
    %77 = tpu.memref_slice %arg26[%c3_i32] : memref<4x!tpu.dma_semaphore, #tpu.memory_space<semaphore_mem>> -> memref<1x!tpu.dma_semaphore, #tpu.memory_space<semaphore_mem>>
    %78 = tpu.memref_squeeze %77 : memref<1x!tpu.dma_semaphore, #tpu.memory_space<semaphore_mem>> -> memref<!tpu.dma_semaphore, #tpu.memory_space<semaphore_mem>>
    tpu.enqueue_dma source(%arg25 : memref<2x1x128xf32, #tpu.memory_space<vmem>>) target(%76 : memref<2x1x128xf32, #tpu.memory_space<any>>) target_semaphore(%78 : memref<!tpu.dma_semaphore, #tpu.memory_space<semaphore_mem>>)
    %79 = tpu.iota {dimensions = array<i32: 1>} : vector<1x16x1xi32>
    %80 = vector.broadcast %0 : i32 to vector<1x16x1xi32>
    %81 = arith.cmpi eq, %79, %80 : vector<1x16x1xi32>
    %82 = vector.shape_cast %64 : vector<2x128xf32> to vector<2x1x128xf32>
    %c0_44 = arith.constant 0 : index
    %c0_45 = arith.constant 0 : index
    %c0_46 = arith.constant 0 : index
    %83 = vector.load %arg22[%c0_44, %c0_45, %c0_46] : memref<2x16x128xf32, #tpu.memory_space<vmem>>, vector<2x16x128xf32>
    %84 = vector.shape_cast %81 : vector<1x16x1xi1> to vector<1x16x1xi1>
    %85 = vector.broadcast %84 : vector<1x16x1xi1> to vector<2x16x128xi1>
    %86 = vector.shape_cast %82 : vector<2x1x128xf32> to vector<2x1x128xf32>
    %87 = vector.broadcast %86 : vector<2x1x128xf32> to vector<2x16x128xf32>
    %88 = arith.select %85, %87, %83 : vector<2x16x128xi1>, vector<2x16x128xf32>
    %89 = vector.shape_cast %34 : vector<2x128xf32> to vector<2x1x128xf32>
    %c0_47 = arith.constant 0 : index
    %c0_48 = arith.constant 0 : index
    %c0_49 = arith.constant 0 : index
    %90 = vector.load %arg23[%c0_47, %c0_48, %c0_49] : memref<2x16x128xf32, #tpu.memory_space<vmem>>, vector<2x16x128xf32>
    %91 = vector.shape_cast %81 : vector<1x16x1xi1> to vector<1x16x1xi1>
    %92 = vector.broadcast %91 : vector<1x16x1xi1> to vector<2x16x128xi1>
    %93 = vector.shape_cast %89 : vector<2x1x128xf32> to vector<2x1x128xf32>
    %94 = vector.broadcast %93 : vector<2x1x128xf32> to vector<2x16x128xf32>
    %95 = arith.select %92, %94, %90 : vector<2x16x128xi1>, vector<2x16x128xf32>
    %96 = tpu.iota {dimensions = array<i32: 2>} : vector<1x1x16xi32>
    %97 = vector.broadcast %0 : i32 to vector<1x1x16xi32>
    %98 = arith.cmpi sle, %96, %97 : vector<1x1x16xi32>
    %99 = vector.extract_strided_slice %59 {offsets = [0, 0], sizes = [2, 32], strides = [1, 1]} : vector<2x128xf32> to vector<2x32xf32>
    %100 = vector.shape_cast %99 : vector<2x32xf32> to vector<2x1x32xf32>
    %101 = arith.truncf %100 : vector<2x1x32xf32> to vector<2x1x32xbf16>
    %102 = vector.extract_strided_slice %88 {offsets = [0, 0, 0], sizes = [2, 16, 32], strides = [1, 1, 1]} : vector<2x16x128xf32> to vector<2x16x32xf32>
    %103 = arith.truncf %102 : vector<2x16x32xf32> to vector<2x16x32xbf16>
    %104 = vector.extract_strided_slice %95 {offsets = [0, 0, 0], sizes = [2, 16, 32], strides = [1, 1, 1]} : vector<2x16x128xf32> to vector<2x16x32xf32>
    %105 = arith.truncf %104 : vector<2x16x32xf32> to vector<2x16x32xbf16>
    "tpu.trace_start"() <{level = 10 : i32, message = "bqd,bkd->bqk"}> : () -> ()
    %cst_50 = arith.constant dense<0.000000e+00> : vector<2x1x16xf32>
    %106 = tpu.matmul %101, %103, %cst_50 {dimension_numbers = #tpu.dot_dimension_numbers<[2], [2], [1], [1], [0, 0, 0, 1, 1, 1], [0], [0]>} : vector<2x1x32xbf16>, vector<2x16x32xbf16>, vector<2x1x16xf32> -> vector<2x1x16xf32>
    "tpu.trace_stop"() : () -> ()
    %cst_51 = arith.constant 0.176776692 : f32
    %107 = vector.broadcast %cst_51 : f32 to vector<2x1x16xf32>
    %108 = arith.mulf %106, %107 : vector<2x1x16xf32>
    %cst_52 = arith.constant 0xFF800000 : f32
    %109 = vector.shape_cast %98 : vector<1x1x16xi1> to vector<1x1x16xi1>
    %110 = vector.broadcast %109 : vector<1x1x16xi1> to vector<2x1x16xi1>
    %111 = vector.broadcast %cst_52 : f32 to vector<2x1x16xf32>
    %112 = arith.select %110, %108, %111 : vector<2x1x16xi1>, vector<2x1x16xf32>
    %cst_53 = arith.constant dense<0xFF800000> : vector<2x1xf32>
    %113 = vector.multi_reduction <maximumf>, %112, %cst_53 [2] : vector<2x1x16xf32> to vector<2x1xf32>
    %114 = vector.shape_cast %113 : vector<2x1xf32> to vector<2x1x1xf32>
    %115 = vector.broadcast %114 : vector<2x1x1xf32> to vector<2x1x16xf32>
    %116 = arith.subf %112, %115 : vector<2x1x16xf32>
    %117 = math.exp %116 : vector<2x1x16xf32>
    %cst_54 = arith.constant dense<0.000000e+00> : vector<2x1xf32>
    %118 = vector.multi_reduction <add>, %117, %cst_54 [2] : vector<2x1x16xf32> to vector<2x1xf32>
    %119 = vector.shape_cast %118 : vector<2x1xf32> to vector<2x1x1xf32>
    %120 = tpu.reciprocal %119 {approx = true} : vector<2x1x1xf32> -> vector<2x1x1xf32>
    %121 = vector.broadcast %120 : vector<2x1x1xf32> to vector<2x1x16xf32>
    %122 = arith.mulf %117, %121 : vector<2x1x16xf32>
    %123 = arith.truncf %122 : vector<2x1x16xf32> to vector<2x1x16xbf16>
    "tpu.trace_start"() <{level = 10 : i32, message = "bqk,bkd->bqd"}> : () -> ()
    %cst_55 = arith.constant dense<0.000000e+00> : vector<2x1x32xf32>
    %124 = tpu.matmul %123, %105, %cst_55 {dimension_numbers = #tpu.dot_dimension_numbers<[2], [1], [1], [2], [0, 0, 0, 1, 1, 2], [0], [0]>} : vector<2x1x16xbf16>, vector<2x16x32xbf16>, vector<2x1x32xf32> -> vector<2x1x32xf32>
    "tpu.trace_stop"() : () -> ()
    %125 = vector.shape_cast %124 : vector<2x1x32xf32> to vector<2x32xf32>
    %126 = vector.extract_strided_slice %59 {offsets = [0, 32], sizes = [2, 32], strides = [1, 1]} : vector<2x128xf32> to vector<2x32xf32>
    %127 = vector.shape_cast %126 : vector<2x32xf32> to vector<2x1x32xf32>
    %128 = arith.truncf %127 : vector<2x1x32xf32> to vector<2x1x32xbf16>
    %129 = vector.extract_strided_slice %88 {offsets = [0, 0, 32], sizes = [2, 16, 32], strides = [1, 1, 1]} : vector<2x16x128xf32> to vector<2x16x32xf32>
    %130 = arith.truncf %129 : vector<2x16x32xf32> to vector<2x16x32xbf16>
    %131 = vector.extract_strided_slice %95 {offsets = [0, 0, 32], sizes = [2, 16, 32], strides = [1, 1, 1]} : vector<2x16x128xf32> to vector<2x16x32xf32>
    %132 = arith.truncf %131 : vector<2x16x32xf32> to vector<2x16x32xbf16>
    "tpu.trace_start"() <{level = 10 : i32, message = "bqd,bkd->bqk"}> : () -> ()
    %cst_56 = arith.constant dense<0.000000e+00> : vector<2x1x16xf32>
    %133 = tpu.matmul %128, %130, %cst_56 {dimension_numbers = #tpu.dot_dimension_numbers<[2], [2], [1], [1], [0, 0, 0, 1, 1, 1], [0], [0]>} : vector<2x1x32xbf16>, vector<2x16x32xbf16>, vector<2x1x16xf32> -> vector<2x1x16xf32>
    "tpu.trace_stop"() : () -> ()
    %cst_57 = arith.constant 0.176776692 : f32
    %134 = vector.broadcast %cst_57 : f32 to vector<2x1x16xf32>
    %135 = arith.mulf %133, %134 : vector<2x1x16xf32>
    %cst_58 = arith.constant 0xFF800000 : f32
    %136 = vector.shape_cast %98 : vector<1x1x16xi1> to vector<1x1x16xi1>
    %137 = vector.broadcast %136 : vector<1x1x16xi1> to vector<2x1x16xi1>
    %138 = vector.broadcast %cst_58 : f32 to vector<2x1x16xf32>
    %139 = arith.select %137, %135, %138 : vector<2x1x16xi1>, vector<2x1x16xf32>
    %cst_59 = arith.constant dense<0xFF800000> : vector<2x1xf32>
    %140 = vector.multi_reduction <maximumf>, %139, %cst_59 [2] : vector<2x1x16xf32> to vector<2x1xf32>
    %141 = vector.shape_cast %140 : vector<2x1xf32> to vector<2x1x1xf32>
    %142 = vector.broadcast %141 : vector<2x1x1xf32> to vector<2x1x16xf32>
    %143 = arith.subf %139, %142 : vector<2x1x16xf32>
    %144 = math.exp %143 : vector<2x1x16xf32>
    %cst_60 = arith.constant dense<0.000000e+00> : vector<2x1xf32>
    %145 = vector.multi_reduction <add>, %144, %cst_60 [2] : vector<2x1x16xf32> to vector<2x1xf32>
    %146 = vector.shape_cast %145 : vector<2x1xf32> to vector<2x1x1xf32>
    %147 = tpu.reciprocal %146 {approx = true} : vector<2x1x1xf32> -> vector<2x1x1xf32>
    %148 = vector.broadcast %147 : vector<2x1x1xf32> to vector<2x1x16xf32>
    %149 = arith.mulf %144, %148 : vector<2x1x16xf32>
    %150 = arith.truncf %149 : vector<2x1x16xf32> to vector<2x1x16xbf16>
    "tpu.trace_start"() <{level = 10 : i32, message = "bqk,bkd->bqd"}> : () -> ()
    %cst_61 = arith.constant dense<0.000000e+00> : vector<2x1x32xf32>
    %151 = tpu.matmul %150, %132, %cst_61 {dimension_numbers = #tpu.dot_dimension_numbers<[2], [1], [1], [2], [0, 0, 0, 1, 1, 2], [0], [0]>} : vector<2x1x16xbf16>, vector<2x16x32xbf16>, vector<2x1x32xf32> -> vector<2x1x32xf32>
    "tpu.trace_stop"() : () -> ()
    %152 = vector.shape_cast %151 : vector<2x1x32xf32> to vector<2x32xf32>
    %153 = vector.extract_strided_slice %59 {offsets = [0, 64], sizes = [2, 32], strides = [1, 1]} : vector<2x128xf32> to vector<2x32xf32>
    %154 = vector.shape_cast %153 : vector<2x32xf32> to vector<2x1x32xf32>
    %155 = arith.truncf %154 : vector<2x1x32xf32> to vector<2x1x32xbf16>
    %156 = vector.extract_strided_slice %88 {offsets = [0, 0, 64], sizes = [2, 16, 32], strides = [1, 1, 1]} : vector<2x16x128xf32> to vector<2x16x32xf32>
    %157 = arith.truncf %156 : vector<2x16x32xf32> to vector<2x16x32xbf16>
    %158 = vector.extract_strided_slice %95 {offsets = [0, 0, 64], sizes = [2, 16, 32], strides = [1, 1, 1]} : vector<2x16x128xf32> to vector<2x16x32xf32>
    %159 = arith.truncf %158 : vector<2x16x32xf32> to vector<2x16x32xbf16>
    "tpu.trace_start"() <{level = 10 : i32, message = "bqd,bkd->bqk"}> : () -> ()
    %cst_62 = arith.constant dense<0.000000e+00> : vector<2x1x16xf32>
    %160 = tpu.matmul %155, %157, %cst_62 {dimension_numbers = #tpu.dot_dimension_numbers<[2], [2], [1], [1], [0, 0, 0, 1, 1, 1], [0], [0]>} : vector<2x1x32xbf16>, vector<2x16x32xbf16>, vector<2x1x16xf32> -> vector<2x1x16xf32>
    "tpu.trace_stop"() : () -> ()
    %cst_63 = arith.constant 0.176776692 : f32
    %161 = vector.broadcast %cst_63 : f32 to vector<2x1x16xf32>
    %162 = arith.mulf %160, %161 : vector<2x1x16xf32>
    %cst_64 = arith.constant 0xFF800000 : f32
    %163 = vector.shape_cast %98 : vector<1x1x16xi1> to vector<1x1x16xi1>
    %164 = vector.broadcast %163 : vector<1x1x16xi1> to vector<2x1x16xi1>
    %165 = vector.broadcast %cst_64 : f32 to vector<2x1x16xf32>
    %166 = arith.select %164, %162, %165 : vector<2x1x16xi1>, vector<2x1x16xf32>
    %cst_65 = arith.constant dense<0xFF800000> : vector<2x1xf32>
    %167 = vector.multi_reduction <maximumf>, %166, %cst_65 [2] : vector<2x1x16xf32> to vector<2x1xf32>
    %168 = vector.shape_cast %167 : vector<2x1xf32> to vector<2x1x1xf32>
    %169 = vector.broadcast %168 : vector<2x1x1xf32> to vector<2x1x16xf32>
    %170 = arith.subf %166, %169 : vector<2x1x16xf32>
    %171 = math.exp %170 : vector<2x1x16xf32>
    %cst_66 = arith.constant dense<0.000000e+00> : vector<2x1xf32>
    %172 = vector.multi_reduction <add>, %171, %cst_66 [2] : vector<2x1x16xf32> to vector<2x1xf32>
    %173 = vector.shape_cast %172 : vector<2x1xf32> to vector<2x1x1xf32>
    %174 = tpu.reciprocal %173 {approx = true} : vector<2x1x1xf32> -> vector<2x1x1xf32>
    %175 = vector.broadcast %174 : vector<2x1x1xf32> to vector<2x1x16xf32>
    %176 = arith.mulf %171, %175 : vector<2x1x16xf32>
    %177 = arith.truncf %176 : vector<2x1x16xf32> to vector<2x1x16xbf16>
    "tpu.trace_start"() <{level = 10 : i32, message = "bqk,bkd->bqd"}> : () -> ()
    %cst_67 = arith.constant dense<0.000000e+00> : vector<2x1x32xf32>
    %178 = tpu.matmul %177, %159, %cst_67 {dimension_numbers = #tpu.dot_dimension_numbers<[2], [1], [1], [2], [0, 0, 0, 1, 1, 2], [0], [0]>} : vector<2x1x16xbf16>, vector<2x16x32xbf16>, vector<2x1x32xf32> -> vector<2x1x32xf32>
    "tpu.trace_stop"() : () -> ()
    %179 = vector.shape_cast %178 : vector<2x1x32xf32> to vector<2x32xf32>
    %180 = vector.extract_strided_slice %59 {offsets = [0, 96], sizes = [2, 32], strides = [1, 1]} : vector<2x128xf32> to vector<2x32xf32>
    %181 = vector.shape_cast %180 : vector<2x32xf32> to vector<2x1x32xf32>
    %182 = arith.truncf %181 : vector<2x1x32xf32> to vector<2x1x32xbf16>
    %183 = vector.extract_strided_slice %88 {offsets = [0, 0, 96], sizes = [2, 16, 32], strides = [1, 1, 1]} : vector<2x16x128xf32> to vector<2x16x32xf32>
    %184 = arith.truncf %183 : vector<2x16x32xf32> to vector<2x16x32xbf16>
    %185 = vector.extract_strided_slice %95 {offsets = [0, 0, 96], sizes = [2, 16, 32], strides = [1, 1, 1]} : vector<2x16x128xf32> to vector<2x16x32xf32>
    %186 = arith.truncf %185 : vector<2x16x32xf32> to vector<2x16x32xbf16>
    "tpu.trace_start"() <{level = 10 : i32, message = "bqd,bkd->bqk"}> : () -> ()
    %cst_68 = arith.constant dense<0.000000e+00> : vector<2x1x16xf32>
    %187 = tpu.matmul %182, %184, %cst_68 {dimension_numbers = #tpu.dot_dimension_numbers<[2], [2], [1], [1], [0, 0, 0, 1, 1, 1], [0], [0]>} : vector<2x1x32xbf16>, vector<2x16x32xbf16>, vector<2x1x16xf32> -> vector<2x1x16xf32>
    "tpu.trace_stop"() : () -> ()
    %cst_69 = arith.constant 0.176776692 : f32
    %188 = vector.broadcast %cst_69 : f32 to vector<2x1x16xf32>
    %189 = arith.mulf %187, %188 : vector<2x1x16xf32>
    %cst_70 = arith.constant 0xFF800000 : f32
    %190 = vector.shape_cast %98 : vector<1x1x16xi1> to vector<1x1x16xi1>
    %191 = vector.broadcast %190 : vector<1x1x16xi1> to vector<2x1x16xi1>
    %192 = vector.broadcast %cst_70 : f32 to vector<2x1x16xf32>
    %193 = arith.select %191, %189, %192 : vector<2x1x16xi1>, vector<2x1x16xf32>
    %cst_71 = arith.constant dense<0xFF800000> : vector<2x1xf32>
    %194 = vector.multi_reduction <maximumf>, %193, %cst_71 [2] : vector<2x1x16xf32> to vector<2x1xf32>
    %195 = vector.shape_cast %194 : vector<2x1xf32> to vector<2x1x1xf32>
    %196 = vector.broadcast %195 : vector<2x1x1xf32> to vector<2x1x16xf32>
    %197 = arith.subf %193, %196 : vector<2x1x16xf32>
    %198 = math.exp %197 : vector<2x1x16xf32>
    %cst_72 = arith.constant dense<0.000000e+00> : vector<2x1xf32>
    %199 = vector.multi_reduction <add>, %198, %cst_72 [2] : vector<2x1x16xf32> to vector<2x1xf32>
    %200 = vector.shape_cast %199 : vector<2x1xf32> to vector<2x1x1xf32>
    %201 = tpu.reciprocal %200 {approx = true} : vector<2x1x1xf32> -> vector<2x1x1xf32>
    %202 = vector.broadcast %201 : vector<2x1x1xf32> to vector<2x1x16xf32>
    %203 = arith.mulf %198, %202 : vector<2x1x16xf32>
    %204 = arith.truncf %203 : vector<2x1x16xf32> to vector<2x1x16xbf16>
    "tpu.trace_start"() <{level = 10 : i32, message = "bqk,bkd->bqd"}> : () -> ()
    %cst_73 = arith.constant dense<0.000000e+00> : vector<2x1x32xf32>
    %205 = tpu.matmul %204, %186, %cst_73 {dimension_numbers = #tpu.dot_dimension_numbers<[2], [1], [1], [2], [0, 0, 0, 1, 1, 2], [0], [0]>} : vector<2x1x16xbf16>, vector<2x16x32xbf16>, vector<2x1x32xf32> -> vector<2x1x32xf32>
    "tpu.trace_stop"() : () -> ()
    %206 = vector.shape_cast %205 : vector<2x1x32xf32> to vector<2x32xf32>
    %207 = tpu.concatenate %125, %152, %179, %206 in 1 : vector<2x32xf32>, vector<2x32xf32>, vector<2x32xf32>, vector<2x32xf32> -> vector<2x128xf32>
    %208 = arith.truncf %207 : vector<2x128xf32> to vector<2x128xbf16>
    %c0_74 = arith.constant 0 : index
    %c0_75 = arith.constant 0 : index
    %209 = vector.load %arg10[%c0_74, %c0_75] : memref<128x128xbf16, #tpu.memory_space<vmem>>, vector<128x128xbf16>
    %cst_76 = arith.constant dense<0.000000e+00> : vector<2x128xf32>
    %210 = tpu.matmul %208, %209, %cst_76 {dimension_numbers = #tpu.dot_dimension_numbers<[1], [0], [0], [1], [0, 0, 1, 1], [], []>} : vector<2x128xbf16>, vector<128x128xbf16>, vector<2x128xf32> -> vector<2x128xf32>
    %c0_77 = arith.constant 0 : index
    %c0_78 = arith.constant 0 : index
    %211 = vector.load %arg11[%c0_77, %c0_78] : memref<1x128xf32, #tpu.memory_space<vmem>>, vector<1x128xf32>
    %212 = vector.broadcast %211 : vector<1x128xf32> to vector<2x128xf32>
    %213 = arith.addf %210, %212 : vector<2x128xf32>
    %214 = arith.addf %5, %213 : vector<2x128xf32>
    %215 = arith.mulf %214, %214 : vector<2x128xf32>
    %cst_79 = arith.constant dense<0.000000e+00> : vector<2xf32>
    %216 = vector.multi_reduction <add>, %215, %cst_79 [1] : vector<2x128xf32> to vector<2xf32>
    %217 = vector.shape_cast %216 : vector<2xf32> to vector<2x1xf32>
    %cst_80 = arith.constant 1.280000e+02 : f32
    %218 = vector.broadcast %cst_80 : f32 to vector<2x1xf32>
    %219 = arith.divf %217, %218 : vector<2x1xf32>
    %cst_81 = arith.constant 9.99999974E-6 : f32
    %220 = vector.broadcast %cst_81 : f32 to vector<2x1xf32>
    %221 = arith.addf %219, %220 : vector<2x1xf32>
    %222 = math.rsqrt %221 : vector<2x1xf32>
    %223 = vector.broadcast %222 : vector<2x1xf32> to vector<2x128xf32>
    %224 = arith.mulf %214, %223 : vector<2x128xf32>
    %c0_82 = arith.constant 0 : index
    %c0_83 = arith.constant 0 : index
    %225 = vector.load %arg16[%c0_82, %c0_83] : memref<1x128xf32, #tpu.memory_space<vmem>>, vector<1x128xf32>
    %226 = vector.broadcast %225 : vector<1x128xf32> to vector<2x128xf32>
    %227 = arith.mulf %224, %226 : vector<2x128xf32>
    %228 = arith.truncf %227 : vector<2x128xf32> to vector<2x128xbf16>
    %c0_84 = arith.constant 0 : index
    %c0_85 = arith.constant 0 : index
    %229 = vector.load %arg12[%c0_84, %c0_85] : memref<128x468xbf16, #tpu.memory_space<vmem>>, vector<128x468xbf16>
    %cst_86 = arith.constant dense<0.000000e+00> : vector<2x468xf32>
    %230 = tpu.matmul %228, %229, %cst_86 {dimension_numbers = #tpu.dot_dimension_numbers<[1], [0], [0], [1], [0, 0, 1, 1], [], []>} : vector<2x128xbf16>, vector<128x468xbf16>, vector<2x468xf32> -> vector<2x468xf32>
    %c0_87 = arith.constant 0 : index
    %c0_88 = arith.constant 0 : index
    %231 = vector.load %arg13[%c0_87, %c0_88] : memref<128x468xbf16, #tpu.memory_space<vmem>>, vector<128x468xbf16>
    %cst_89 = arith.constant dense<0.000000e+00> : vector<2x468xf32>
    %232 = tpu.matmul %228, %231, %cst_89 {dimension_numbers = #tpu.dot_dimension_numbers<[1], [0], [0], [1], [0, 0, 1, 1], [], []>} : vector<2x128xbf16>, vector<128x468xbf16>, vector<2x468xf32> -> vector<2x468xf32>
    %233 = arith.negf %230 : vector<2x468xf32>
    %234 = math.exp %233 : vector<2x468xf32>
    %cst_90 = arith.constant 1.000000e+00 : f32
    %235 = vector.broadcast %cst_90 : f32 to vector<2x468xf32>
    %236 = arith.addf %235, %234 : vector<2x468xf32>
    %237 = arith.divf %235, %236 : vector<2x468xf32>
    %238 = arith.mulf %230, %237 : vector<2x468xf32>
    %239 = arith.mulf %238, %232 : vector<2x468xf32>
    %240 = arith.truncf %239 : vector<2x468xf32> to vector<2x468xbf16>
    %c0_91 = arith.constant 0 : index
    %c0_92 = arith.constant 0 : index
    %241 = vector.load %arg14[%c0_91, %c0_92] : memref<468x128xbf16, #tpu.memory_space<vmem>>, vector<468x128xbf16>
    %cst_93 = arith.constant dense<0.000000e+00> : vector<2x128xf32>
    %242 = tpu.matmul %240, %241, %cst_93 {dimension_numbers = #tpu.dot_dimension_numbers<[1], [0], [0], [1], [0, 0, 1, 1], [], []>} : vector<2x468xbf16>, vector<468x128xbf16>, vector<2x128xf32> -> vector<2x128xf32>
    %243 = arith.addf %214, %242 : vector<2x128xf32>
    %c0_94 = arith.constant 0 : index
    %c0_95 = arith.constant 0 : index
    %244 = vector.load %arg19[%c0_94, %c0_95] : memref<2x128xf32, #tpu.memory_space<vmem>>, vector<2x128xf32>
    tpu.vector_store %arg19[%c0_94, %c0_95], %243 {strides = array<i32>} : memref<2x128xf32, #tpu.memory_space<vmem>>, vector<2x128xf32>,
    %c2_i32_96 = arith.constant 2 : i32
    %c0_i32_97 = arith.constant 0 : i32
    %c0_i32_98 = arith.constant 0 : i32
    %245 = tpu.memref_slice %arg20[%c0_i32_97, %0, %c0_i32_98] : memref<2x16x128xf32, #tpu.memory_space<any>> -> memref<2x1x128xf32, #tpu.memory_space<any>>
    %246 = tpu.memref_slice %arg26[%c2_i32_96] : memref<4x!tpu.dma_semaphore, #tpu.memory_space<semaphore_mem>> -> memref<1x!tpu.dma_semaphore, #tpu.memory_space<semaphore_mem>>
    %247 = tpu.memref_squeeze %246 : memref<1x!tpu.dma_semaphore, #tpu.memory_space<semaphore_mem>> -> memref<!tpu.dma_semaphore, #tpu.memory_space<semaphore_mem>>
    tpu.wait_dma2 semaphore(%247 : memref<!tpu.dma_semaphore, #tpu.memory_space<semaphore_mem>>) src(%arg24 : memref<2x1x128xf32, #tpu.memory_space<vmem>>) dst(%245 : memref<2x1x128xf32, #tpu.memory_space<any>>)
    %c3_i32_99 = arith.constant 3 : i32
    %c0_i32_100 = arith.constant 0 : i32
    %c0_i32_101 = arith.constant 0 : i32
    %248 = tpu.memref_slice %arg21[%c0_i32_100, %0, %c0_i32_101] : memref<2x16x128xf32, #tpu.memory_space<any>> -> memref<2x1x128xf32, #tpu.memory_space<any>>
    %249 = tpu.memref_slice %arg26[%c3_i32_99] : memref<4x!tpu.dma_semaphore, #tpu.memory_space<semaphore_mem>> -> memref<1x!tpu.dma_semaphore, #tpu.memory_space<semaphore_mem>>
    %250 = tpu.memref_squeeze %249 : memref<1x!tpu.dma_semaphore, #tpu.memory_space<semaphore_mem>> -> memref<!tpu.dma_semaphore, #tpu.memory_space<semaphore_mem>>
    tpu.wait_dma2 semaphore(%250 : memref<!tpu.dma_semaphore, #tpu.memory_space<semaphore_mem>>) src(%arg25 : memref<2x1x128xf32, #tpu.memory_space<vmem>>) dst(%248 : memref<2x1x128xf32, #tpu.memory_space<any>>)
    return
  }
}

</mosaic_0001>

<llo_original>
// kernel: tile.14
$region0: #{tile.14}
  #allocation0 [shape = 's32[1]{0}', space=sflag, size = 0x4, scoped, tag = 'scoped memory for tile.14']
  %s0 = inlined_call_operand.vmem [shape: f32[32], index: 0, kind: input, shape index: {}]
  %s1 = inlined_call_operand.vmem [shape: f32[4,32], index: 1, kind: output, shape index: {}]
  // Predicated region
  $region2: #{tile.14} parent=0 // pred_check
    _
  $region3: #{tile.14} parent=0 // pred_check_branch
    %3 = sbr.rel (0) target = $region5
  $region4: #{tile.14} parent=0 // pred_region
    _
  $region5: #{tile.14} parent=0 // pred_fallthru
    _
  %v4 = vld [vmem:[%s0] ss:$0 sm:$0xff]
  %5 = vst [vmem:[%s1] sm:$0xf] %v4

// kernel: tile.15
$region0: #{tile.15}
  %s0 = inlined_call_operand.vmem [shape: f32[4,32], index: 0, kind: input, shape index: {}]
  %s1 = inlined_call_operand.vmem [shape: f32[1,128], index: 1, kind: output, shape index: {}]
  $region1: #{tile.15} parent=0
    #allocation0 [shape = 'u8[4096]{0}', space=vmem, size = 0x1000, scoped, tag = 'scoped mem for output reshape']
    #allocation1 [shape = 'u8[4096]{0}', space=vmem, size = 0x1000, scoped, tag = 'scoped mem for input reshape']
    %s3 = ssub.s32 16, 1
    %v4 = vld [vmem:[%s0] sm:%s3]
    %5 = vst [vmem:[#allocation1] sm:%s3] %v4
    %v6 = vld [vmem:[#allocation1] sm:$0x1]
    %vm7 = vcmask 261120
    %8 = vst.msk [vmem:[#allocation0] sm:$0x1] %vm7, %v6
    %s9 = scalar_lea.vmem [#allocation1], 3
    %v10 = vld [vmem:[%s9] sm:$0x1]
    %11 = vrot.lane.b32.xlu0 %v10, 96
    %v12 = vpop.permute.xlu0 %11
    %vm13 = vcmask 1048320
    %14 = vst.msk [vmem:[#allocation0] sm:$0x1] %vm13, %v12
    %s15 = scalar_lea.vmem [#allocation1], 2
    %v16 = vld [vmem:[%s15] sm:$0x1]
    %17 = vrot.lane.b32.xlu0 %v16, 64
    %v18 = vpop.permute.xlu0 %17
    %vm19 = vcmask 785920
    %20 = vst.msk [vmem:[#allocation0] sm:$0x1] %vm19, %v18
    %s21 = scalar_lea.vmem [#allocation1], 1
    %v22 = vld [vmem:[%s21] sm:$0x1]
    %23 = vrot.lane.b32.xlu0 %v22, 32
    %v24 = vpop.permute.xlu0 %23
    %vm25 = vcmask 523520
    %26 = vst.msk [vmem:[#allocation0] sm:$0x1] %vm25, %v24
    %s28 = ssub.s32 2, 1
    %v29 = vld [vmem:[#allocation0] sm:%s28]
    %s31 = ssub.s32 2, 1
    %32 = vst [vmem:[%s1] sm:%s31] %v29

// kernel: tile.13
$region0: #{tile.13}
  %s0 = inlined_call_operand.vmem [shape: f32[16,2], index: 0, kind: input, shape index: {}]
  %s1 = inlined_call_operand.vmem [shape: f32[32], index: 1, kind: output, shape index: {}]
  $region1: #{tile.13} parent=0
    #allocation0 [shape = 'u8[4096]{0}', space=vmem, size = 0x1000, scoped, tag = 'scoped mem for output reshape']
    %v2 = vld [vmem:[%s0] sm:$0x1]
    %vm3 = vcmask 15360
    %4 = vst.msk [vmem:[#allocation0] sm:$0x1] %vm3, %v2
    %s5 = scalar_lea.vmem %s0, 15
    %v6 = vld [vmem:[%s5] sm:$0x1]
    %7 = vrot.lane.b32.xlu0 %v6, 30
    %v8 = vpop.permute.xlu0 %7
    %vm9 = vcmask 261360
    %10 = vst.msk [vmem:[#allocation0] sm:$0x1] %vm9, %v8
    %s11 = scalar_lea.vmem %s0, 14
    %v12 = vld [vmem:[%s11] sm:$0x1]
    %13 = vrot.lane.b32.xlu0 %v12, 28
    %v14 = vpop.permute.xlu0 %13
    %vm15 = vcmask 244960
    %16 = vst.msk [vmem:[#allocation0] sm:$0x1] %vm15, %v14
    %s17 = scalar_lea.vmem %s0, 13
    %v18 = vld [vmem:[%s17] sm:$0x1]
    %19 = vrot.lane.b32.xlu0 %v18, 26
    %v20 = vpop.permute.xlu0 %19
    %vm21 = vcmask 228560
    %22 = vst.msk [vmem:[#allocation0] sm:$0x1] %vm21, %v20
    %s23 = scalar_lea.vmem %s0, 12
    %v24 = vld [vmem:[%s23] sm:$0x1]
    %25 = vrot.lane.b32.xlu0 %v24, 24
    %v26 = vpop.permute.xlu0 %25
    %vm27 = vcmask 212160
    %28 = vst.msk [vmem:[#allocation0] sm:$0x1] %vm27, %v26
    %s29 = scalar_lea.vmem %s0, 11
    %v30 = vld [vmem:[%s29] sm:$0x1]
    %31 = vrot.lane.b32.xlu0 %v30, 22
    %v32 = vpop.permute.xlu0 %31
    %vm33 = vcmask 195760
    %34 = vst.msk [vmem:[#allocation0] sm:$0x1] %vm33, %v32
    %s35 = scalar_lea.vmem %s0, 10
    %v36 = vld [vmem:[%s35] sm:$0x1]
    %37 = vrot.lane.b32.xlu0 %v36, 20
    %v38 = vpop.permute.xlu0 %37
    %vm39 = vcmask 179360
    %40 = vst.msk [vmem:[#allocation0] sm:$0x1] %vm39, %v38
    %s41 = scalar_lea.vmem %s0, 9
    %v42 = vld [vmem:[%s41] sm:$0x1]
    %43 = vrot.lane.b32.xlu0 %v42, 18
    %v44 = vpop.permute.xlu0 %43
    %vm45 = vcmask 162960
    %46 = vst.msk [vmem:[#allocation0] sm:$0x1] %vm45, %v44
    %s47 = scalar_lea.vmem %s0, 8
    %v48 = vld [vmem:[%s47] sm:$0x1]
    %49 = vrot.lane.b32.xlu0 %v48, 16
    %v50 = vpop.permute.xlu0 %49
    %vm51 = vcmask 146560
    %52 = vst.msk [vmem:[#allocation0] sm:$0x1] %vm51, %v50
    %s53 = scalar_lea.vmem %s0, 7
    %v54 = vld [vmem:[%s53] sm:$0x1]
    %55 = vrot.lane.b32.xlu0 %v54, 14
    %v56 = vpop.permute.xlu0 %55
    %vm57 = vcmask 130160
    %58 = vst.msk [vmem:[#allocation0] sm:$0x1] %vm57, %v56
    %s59 = scalar_lea.vmem %s0, 6
    %v60 = vld [vmem:[%s59] sm:$0x1]
    %61 = vrot.lane.b32.xlu0 %v60, 12
    %v62 = vpop.permute.xlu0 %61
    %vm63 = vcmask 113760
    %64 = vst.msk [vmem:[#allocation0] sm:$0x1] %vm63, %v62
    %s65 = scalar_lea.vmem %s0, 5
    %v66 = vld [vmem:[%s65] sm:$0x1]
    %67 = vrot.lane.b32.xlu0 %v66, 10
    %v68 = vpop.permute.xlu0 %67
    %vm69 = vcmask 97360
    %70 = vst.msk [vmem:[#allocation0] sm:$0x1] %vm69, %v68
    %s71 = scalar_lea.vmem %s0, 4
    %v72 = vld [vmem:[%s71] sm:$0x1]
    %73 = vrot.lane.b32.xlu0 %v72, 8
    %v74 = vpop.permute.xlu0 %73
    %vm75 = vcmask 80960
    %76 = vst.msk [vmem:[#allocation0] sm:$0x1] %vm75, %v74
    %s77 = scalar_lea.vmem %s0, 3
    %v78 = vld [vmem:[%s77] sm:$0x1]
    %79 = vrot.lane.b32.xlu0 %v78, 6
    %v80 = vpop.permute.xlu0 %79
    %vm81 = vcmask 64560
    %82 = vst.msk [vmem:[#allocation0] sm:$0x1] %vm81, %v80
    %s83 = scalar_lea.vmem %s0, 2
    %v84 = vld [vmem:[%s83] sm:$0x1]
    %85 = vrot.lane.b32.xlu0 %v84, 4
    %v86 = vpop.permute.xlu0 %85
    %vm87 = vcmask 48160
    %88 = vst.msk [vmem:[#allocation0] sm:$0x1] %vm87, %v86
    %s89 = scalar_lea.vmem %s0, 1
    %v90 = vld [vmem:[%s89] sm:$0x1]
    %91 = vrot.lane.b32.xlu0 %v90, 2
    %v92 = vpop.permute.xlu0 %91
    %vm93 = vcmask 31760
    %94 = vst.msk [vmem:[#allocation0] sm:$0x1] %vm93, %v92
    %s96 = ssub.s32 2, 1
    %v97 = vld [vmem:[#allocation0] sm:%s96]
    %s99 = ssub.s32 2, 1
    %100 = vst [vmem:[%s1] sm:%s99] %v97

// kernel: transformer_forward.3
$region0: #{transformer_forward.3}
  #allocation0 [shape = 'u32[]', space=smem, size = 0x4, offset = 0x4, fixed_abs, tag = 'smem constant byte address 0x4 - core index']
  #allocation1 [shape = 'u32[72,128]{1,0:T(1,128)}', space=vmem, size = 0x9000, scoped, tag = 'internal scratch']
  #allocation2 [shape = 'f32[2,16,128]{2,1,0:T(8,128)}', space=vmem, size = 0x4000, scoped, tag = 'scratch operand']
  #allocation3 [shape = 'f32[2,16,128]{2,1,0:T(8,128)}', space=vmem, size = 0x4000, scoped, tag = 'scratch operand']
  #allocation4 [shape = 'f32[2,1,128]{2,1,0:T(1,128)}', space=vmem, size = 0x400, scoped, tag = 'scratch operand']
  #allocation5 [shape = 'f32[2,1,128]{2,1,0:T(1,128)}', space=vmem, size = 0x400, scoped, tag = 'scratch operand']
  #allocation6 [shape = 's32[4]{0}', space=sflag, size = 0x10, scoped, tag = 'scratch operand']
  #allocation7 [shape = 's32[1]{0:T(128)S(6)}', space=smem, size = 0x200, scoped, tag = 'scoped memory for transformer_forward.3']
  #allocation10 [shape = 's32[]', space=sflag, size = 0x4, offset = 0, fixed_abs, tag = 'sflag constant byte address 0x0 - dummy sync flag']
  #allocation11 [shape = 's32[]', space=sflag, size = 0x4, offset = 0, fixed_abs, tag = 'sflag constant byte address 0x0 - dummy sync flag']
  #allocation12 [shape = 's32[]', space=sflag, size = 0x4, offset = 0, fixed_abs, tag = 'sflag constant byte address 0x0 - dummy sync flag']
  #allocation13 [shape = 's32[]', space=sflag, size = 0x4, offset = 0, fixed_abs, tag = 'sflag constant byte address 0x0 - dummy sync flag']
  %s0 = inlined_call_operand.<no memory space> [shape: s32[1], index: 0, kind: input, shape index: {}]
  %s1 = inlined_call_operand.vmem [shape: f32[2,128], index: 1, kind: input, shape index: {}]
  %s2 = inlined_call_operand.vmem [shape: f32[2,16,128], index: 2, kind: input, shape index: {}, may-alias: {2,20}]
  %s3 = inlined_call_operand.vmem [shape: f32[2,16,128], index: 3, kind: input, shape index: {}, may-alias: {3,21}]
  %s4 = inlined_call_operand.vmem [shape: bf16[128,128], index: 4, kind: input, shape index: {}]
  %s5 = inlined_call_operand.vmem [shape: f32[1,128], index: 5, kind: input, shape index: {}]
  %s6 = inlined_call_operand.vmem [shape: bf16[128,128], index: 6, kind: input, shape index: {}]
  %s7 = inlined_call_operand.vmem [shape: f32[1,128], index: 7, kind: input, shape index: {}]
  %s8 = inlined_call_operand.vmem [shape: bf16[128,128], index: 8, kind: input, shape index: {}]
  %s9 = inlined_call_operand.vmem [shape: f32[1,128], index: 9, kind: input, shape index: {}]
  %s10 = inlined_call_operand.vmem [shape: bf16[128,128], index: 10, kind: input, shape index: {}]
  %s11 = inlined_call_operand.vmem [shape: f32[1,128], index: 11, kind: input, shape index: {}]
  %s12 = inlined_call_operand.vmem [shape: bf16[128,468], index: 12, kind: input, shape index: {}]
  %s13 = inlined_call_operand.vmem [shape: bf16[128,468], index: 13, kind: input, shape index: {}]
  %s14 = inlined_call_operand.vmem [shape: bf16[468,128], index: 14, kind: input, shape index: {}]
  %s15 = inlined_call_operand.vmem [shape: f32[1,128], index: 15, kind: input, shape index: {}]
  %s16 = inlined_call_operand.vmem [shape: f32[1,128], index: 16, kind: input, shape index: {}]
  %s17 = inlined_call_operand.vmem [shape: f32[1,128], index: 17, kind: input, shape index: {}]
  %s18 = inlined_call_operand.vmem [shape: f32[1,128], index: 18, kind: input, shape index: {}]
  %s19 = inlined_call_operand.hbm [shape: f32[2,128], index: 19, kind: output, shape index: {0}]
  %s20 = inlined_call_operand.vmem [shape: f32[2,16,128], index: 20, kind: output, shape index: {1}, may-alias: {2,20}]
  %s21 = inlined_call_operand.vmem [shape: f32[2,16,128], index: 21, kind: output, shape index: {2}, may-alias: {3,21}]
  %22 = xla_tuple %s19, %s20, %s21
  %s23 = sld [smem:[#allocation0]]
  $region176: #{transformer_forward.3} parent=0
    _
  %s25 = ssub.s32 1, %s23
  %s26 = scalar_select 0, %s25, %s23
  %27 = sst [smem:[#allocation7]] %s0
  $region1: #{transformer_forward.3} parent=0
    #allocation8 [shape = 'u8[1024]{0}', space=vmem, size = 0x400, scoped, tag = 'output window, operand 0, single buffered']
    #allocation9 [shape = 's32[1]{0}', space=sflag, size = 0x4, scoped, tag = 'scoped memory for transformer_forward.3']
    %28 = vsyncpa [#allocation9], 0
    // Predicated region
    $region2: #{transformer_forward.3} parent=1 // pred_check
      _
    $region3: #{transformer_forward.3} parent=1 // pred_check_branch
      %30 = sbr.rel (0) target = $region5
    $region4: #{transformer_forward.3} parent=1 // pred_region
      _
    $region5: #{transformer_forward.3} parent=1 // pred_fallthru
      _
    // Predicated region
    $region6: #{transformer_forward.3} parent=1 // pred_check
      _
    $region7: #{transformer_forward.3} parent=1 // pred_check_branch
      %32 = sbr.rel (0) target = $region9
    $region8: #{transformer_forward.3} parent=1 // pred_region
      _
    $region9: #{transformer_forward.3} parent=1 // pred_fallthru
      _
    // Predicated region
    $region10: #{transformer_forward.3} parent=1 // pred_check
      _
    $region11: #{transformer_forward.3} parent=1 // pred_check_branch
      %34 = sbr.rel (0) target = $region13
    $region12: #{transformer_forward.3} parent=1 // pred_region
      _
    $region13: #{transformer_forward.3} parent=1 // pred_fallthru
      _
    // Predicated region
    $region14: #{transformer_forward.3} parent=1 // pred_check
      _
    $region15: #{transformer_forward.3} parent=1 // pred_check_branch
      %36 = sbr.rel (0) target = $region17
    $region16: #{transformer_forward.3} parent=1 // pred_region
      _
    $region17: #{transformer_forward.3} parent=1 // pred_fallthru
      _
    // Predicated region
    $region18: #{transformer_forward.3} parent=1 // pred_check
      _
    $region19: #{transformer_forward.3} parent=1 // pred_check_branch
      %38 = sbr.rel (0) target = $region21
    $region20: #{transformer_forward.3} parent=1 // pred_region
      _
    $region21: #{transformer_forward.3} parent=1 // pred_fallthru
      _
    // Predicated region
    $region22: #{transformer_forward.3} parent=1 // pred_check
      _
    $region23: #{transformer_forward.3} parent=1 // pred_check_branch
      %40 = sbr.rel (0) target = $region25
    $region24: #{transformer_forward.3} parent=1 // pred_region
      _
    $region25: #{transformer_forward.3} parent=1 // pred_fallthru
      _
    // Predicated region
    $region26: #{transformer_forward.3} parent=1 // pred_check
      _
    $region27: #{transformer_forward.3} parent=1 // pred_check_branch
      %42 = sbr.rel (0) target = $region29
    $region28: #{transformer_forward.3} parent=1 // pred_region
      _
    $region29: #{transformer_forward.3} parent=1 // pred_fallthru
      _
    // Predicated region
    $region30: #{transformer_forward.3} parent=1 // pred_check
      _
    $region31: #{transformer_forward.3} parent=1 // pred_check_branch
      %44 = sbr.rel (0) target = $region33
    $region32: #{transformer_forward.3} parent=1 // pred_region
      _
    $region33: #{transformer_forward.3} parent=1 // pred_fallthru
      _
    // Predicated region
    $region34: #{transformer_forward.3} parent=1 // pred_check
      _
    $region35: #{transformer_forward.3} parent=1 // pred_check_branch
      %46 = sbr.rel (0) target = $region37
    $region36: #{transformer_forward.3} parent=1 // pred_region
      _
    $region37: #{transformer_forward.3} parent=1 // pred_fallthru
      _
    // Predicated region
    $region38: #{transformer_forward.3} parent=1 // pred_check
      _
    $region39: #{transformer_forward.3} parent=1 // pred_check_branch
      %48 = sbr.rel (0) target = $region41
    $region40: #{transformer_forward.3} parent=1 // pred_region
      _
    $region41: #{transformer_forward.3} parent=1 // pred_fallthru
      _
    // Predicated region
    $region42: #{transformer_forward.3} parent=1 // pred_check
      _
    $region43: #{transformer_forward.3} parent=1 // pred_check_branch
      %50 = sbr.rel (0) target = $region45
    $region44: #{transformer_forward.3} parent=1 // pred_region
      _
    $region45: #{transformer_forward.3} parent=1 // pred_fallthru
      _
    // Predicated region
    $region46: #{transformer_forward.3} parent=1 // pred_check
      _
    $region47: #{transformer_forward.3} parent=1 // pred_check_branch
      %52 = sbr.rel (0) target = $region49
    $region48: #{transformer_forward.3} parent=1 // pred_region
      _
    $region49: #{transformer_forward.3} parent=1 // pred_fallthru
      _
    // Predicated region
    $region50: #{transformer_forward.3} parent=1 // pred_check
      _
    $region51: #{transformer_forward.3} parent=1 // pred_check_branch
      %54 = sbr.rel (0) target = $region53
    $region52: #{transformer_forward.3} parent=1 // pred_region
      _
    $region53: #{transformer_forward.3} parent=1 // pred_fallthru
      _
    // Predicated region
    $region54: #{transformer_forward.3} parent=1 // pred_check
      _
    $region55: #{transformer_forward.3} parent=1 // pred_check_branch
      %56 = sbr.rel (0) target = $region57
    $region56: #{transformer_forward.3} parent=1 // pred_region
      _
    $region57: #{transformer_forward.3} parent=1 // pred_fallthru
      _
    // Predicated region
    $region58: #{transformer_forward.3} parent=1 // pred_check
      _
    $region59: #{transformer_forward.3} parent=1 // pred_check_branch
      %58 = sbr.rel (0) target = $region61
    $region60: #{transformer_forward.3} parent=1 // pred_region
      _
    $region61: #{transformer_forward.3} parent=1 // pred_fallthru
      _
    // Predicated region
    $region62: #{transformer_forward.3} parent=1 // pred_check
      _
    $region63: #{transformer_forward.3} parent=1 // pred_check_branch
      %60 = sbr.rel (0) target = $region65
    $region64: #{transformer_forward.3} parent=1 // pred_region
      _
    $region65: #{transformer_forward.3} parent=1 // pred_fallthru
      _
    // Predicated region
    $region66: #{transformer_forward.3} parent=1 // pred_check
      _
    $region67: #{transformer_forward.3} parent=1 // pred_check_branch
      %62 = sbr.rel (0) target = $region69
    $region68: #{transformer_forward.3} parent=1 // pred_region
      _
    $region69: #{transformer_forward.3} parent=1 // pred_fallthru
      _
    %s64 = sld [smem:[#allocation7]]
    // Predicated region
    $region70: #{transformer_forward.3} parent=1 // pred_check
      _
    $region71: #{transformer_forward.3} parent=1 // pred_check_branch
      %66 = sbr.rel (0) target = $region73
    $region72: #{transformer_forward.3} parent=1 // pred_region
      loop: start=0, step=1, limit=1
      $region74: #{transformer_forward.3} parent=72 // loop_pre_header
        _
      $region75: #{transformer_forward.3} parent=72 // loop_header
        %s68 = sphi 0, %s72
        %p69 = scmp.ge.s32.totalorder %s68, 1
        %s73 = sphi %s2, %s2
        %s74 = sphi [#allocation2], [#allocation2]
      $region76: #{transformer_forward.3} parent=72 // loop_header_branch
        %71 = sbr.rel (%p69) target = $region80
      $region77: #{transformer_forward.3} parent=72 // loop_body
        %v75 = vld [vmem:[%s73] sm:$0xff]
        %76 = vst [vmem:[%s74] sm:$0xff] %v75
        %v77 = vld [vmem:[%s73 + $0x8] sm:$0xff]
        %78 = vst [vmem:[%s74 + $0x8] sm:$0xff] %v77
        %v79 = vld [vmem:[%s73 + $0x10] sm:$0xff]
        %80 = vst [vmem:[%s74 + $0x10] sm:$0xff] %v79
        %v81 = vld [vmem:[%s73 + $0x18] sm:$0xff]
        %82 = vst [vmem:[%s74 + $0x18] sm:$0xff] %v81
      $region78: #{transformer_forward.3} parent=72 // loop_footer
        %s72 = sadd.s32 1, %s68
      $region79: #{transformer_forward.3} parent=72 // loop_footer_branch
        %67 = sbr.rel target = $region75
      $region80: #{transformer_forward.3} parent=72 // loop_exit
        _
    $region73: #{transformer_forward.3} parent=1 // pred_fallthru
      _
    // Predicated region
    $region81: #{transformer_forward.3} parent=1 // pred_check
      _
    $region82: #{transformer_forward.3} parent=1 // pred_check_branch
      %84 = sbr.rel target = $region84
    $region83: #{transformer_forward.3} parent=1 // pred_region
      _
    $region84: #{transformer_forward.3} parent=1 // pred_fallthru
      _
    // Predicated region
    $region85: #{transformer_forward.3} parent=1 // pred_check
      _
    $region86: #{transformer_forward.3} parent=1 // pred_check_branch
      %87 = sbr.rel (0) target = $region88
    $region87: #{transformer_forward.3} parent=1 // pred_region
      %88 = vsyncadd [#allocation6], 512
    $region88: #{transformer_forward.3} parent=1 // pred_fallthru
      _
    %s89 = scalar_lea.sflag [#allocation6], 1
    // Predicated region
    $region89: #{transformer_forward.3} parent=1 // pred_check
      _
    $region90: #{transformer_forward.3} parent=1 // pred_check_branch
      %91 = sbr.rel (0) target = $region92
    $region91: #{transformer_forward.3} parent=1 // pred_region
      loop: start=0, step=1, limit=1
      $region93: #{transformer_forward.3} parent=91 // loop_pre_header
        _
      $region94: #{transformer_forward.3} parent=91 // loop_header
        %s93 = sphi 0, %s97
        %p94 = scmp.ge.s32.totalorder %s93, 1
        %s98 = sphi %s3, %s3
        %s99 = sphi [#allocation3], [#allocation3]
      $region95: #{transformer_forward.3} parent=91 // loop_header_branch
        %96 = sbr.rel (%p94) target = $region99
      $region96: #{transformer_forward.3} parent=91 // loop_body
        %v100 = vld [vmem:[%s98] sm:$0xff]
        %101 = vst [vmem:[%s99] sm:$0xff] %v100
        %v102 = vld [vmem:[%s98 + $0x8] sm:$0xff]
        %103 = vst [vmem:[%s99 + $0x8] sm:$0xff] %v102
        %v104 = vld [vmem:[%s98 + $0x10] sm:$0xff]
        %105 = vst [vmem:[%s99 + $0x10] sm:$0xff] %v104
        %v106 = vld [vmem:[%s98 + $0x18] sm:$0xff]
        %107 = vst [vmem:[%s99 + $0x18] sm:$0xff] %v106
      $region97: #{transformer_forward.3} parent=91 // loop_footer
        %s97 = sadd.s32 1, %s93
      $region98: #{transformer_forward.3} parent=91 // loop_footer_branch
        %92 = sbr.rel target = $region94
      $region99: #{transformer_forward.3} parent=91 // loop_exit
        _
    $region92: #{transformer_forward.3} parent=1 // pred_fallthru
      _
    // Predicated region
    $region100: #{transformer_forward.3} parent=1 // pred_check
      _
    $region101: #{transformer_forward.3} parent=1 // pred_check_branch
      %109 = sbr.rel target = $region103
    $region102: #{transformer_forward.3} parent=1 // pred_region
      _
    $region103: #{transformer_forward.3} parent=1 // pred_fallthru
      _
    // Predicated region
    $region104: #{transformer_forward.3} parent=1 // pred_check
      _
    $region105: #{transformer_forward.3} parent=1 // pred_check_branch
      %112 = sbr.rel (0) target = $region107
    $region106: #{transformer_forward.3} parent=1 // pred_region
      %113 = vsyncadd %s89, 512
    $region107: #{transformer_forward.3} parent=1 // pred_fallthru
      _
    %v114 = vld [vmem:[%s1] sm:$0x3]
    %v115 = vmul.f32 %v114, %v114
    %vm116 = vcmask 1041408
    %v117 = vsel %vm116, %v115, 0.0
    %118 = vadd.xlane.f32.xlu0 %v117
    %v119 = vpop.xlane.xlu0 %118
    %v120 = vrcp.pop 128.0
    %v121 = vmul.f32 128.0, %v120
    %v122 = vsub.f32 1.0, %v121
    %v123 = vmul.f32 %v120, %v122
    %v124 = vadd.f32 %v120, %v123
    %vm125 = vweird.f32 %v120
    %v126 = vsel %vm125, %v120, %v124
    %v127 = vmul.f32 %v119, %v126
    %v128 = vadd.f32 %v127, 1e-05
    %v129 = vrsqrt.pop %v128
    %v130 = vmul.f32 %v129, %v128
    %v131 = vmul.f32 %v130, %v129
    %v132 = vmul.f32 0.5, %v131
    %v133 = vsub.f32 1.5, %v132
    %v134 = vmul.f32 %v129, %v133
    %vm135 = vweird.f32 %v128
    %vm136 = vweird.f32 %v129
    %vm137 = vmor %vm135, %vm136
    %v138 = vsel %vm137, %v129, %v134
    %v139 = vmul.f32 %v114, %v138
    %v140 = vld [vmem:[%s15] sm:$0x1]
    %v142 = vperm.slane %v140, 0
    %v144 = vmul.f32 %v139, %v142
    %v145 = vpack.c.bf16 %v144, %v144
    %v146 = vld [vmem:[%s4] sm:$0xf]
    %v147 = vld [vmem:[%s4 + $0x4] sm:$0xf]
    %v148 = vld [vmem:[%s4 + $0x8] sm:$0xf]
    %v149 = vld [vmem:[%s4 + $0xc] sm:$0xf]
    %v150 = vld [vmem:[%s4 + $0x10] sm:$0xf]
    %v151 = vld [vmem:[%s4 + $0x14] sm:$0xf]
    %v152 = vld [vmem:[%s4 + $0x18] sm:$0xf]
    %v153 = vld [vmem:[%s4 + $0x1c] sm:$0xf]
    %v154 = vld [vmem:[%s4 + $0x20] sm:$0xf]
    %v155 = vld [vmem:[%s4 + $0x24] sm:$0xf]
    %v156 = vld [vmem:[%s4 + $0x28] sm:$0xf]
    %v157 = vld [vmem:[%s4 + $0x2c] sm:$0xf]
    %v158 = vld [vmem:[%s4 + $0x30] sm:$0xf]
    %v159 = vld [vmem:[%s4 + $0x34] sm:$0xf]
    %v160 = vld [vmem:[%s4 + $0x38] sm:$0xf]
    %v161 = vld [vmem:[%s4 + $0x3c] sm:$0xf]
    %v162 = vld [vmem:[%s5] sm:$0x1]
    %v164 = vperm.slane %v162, 0
    %v182 = vunpack.c.l.b16 %v146
    %v183 = vunpack.c.l.b16 %v147
    %v184 = vunpack.c.l.b16 %v148
    %v185 = vunpack.c.l.b16 %v149
    %v186 = vunpack.c.l.b16 %v150
    %v187 = vunpack.c.l.b16 %v151
    %v188 = vunpack.c.l.b16 %v152
    %v189 = vunpack.c.l.b16 %v153
    %v190 = vunpack.c.l.b16 %v154
    %v191 = vunpack.c.l.b16 %v155
    %v192 = vunpack.c.l.b16 %v156
    %v193 = vunpack.c.l.b16 %v157
    %v194 = vunpack.c.l.b16 %v158
    %v195 = vunpack.c.l.b16 %v159
    %v196 = vunpack.c.l.b16 %v160
    %v197 = vunpack.c.l.b16 %v161
    %v198 = vpack.c.b16 %v183, %v182
    %v199 = vpack.c.b16 %v185, %v184
    %v200 = vpack.c.b16 %v187, %v186
    %v201 = vpack.c.b16 %v189, %v188
    %v202 = vpack.c.b16 %v191, %v190
    %v203 = vpack.c.b16 %v193, %v192
    %v204 = vpack.c.b16 %v195, %v194
    %v205 = vpack.c.b16 %v197, %v196
    %214 = vmatpush.bf16.msra.mxu0 %v205
    %215 = vmatpush.bf16.msra.mxu0 %v204
    %216 = vmatpush.bf16.msra.mxu0 %v203
    %217 = vmatpush.bf16.msra.mxu0 %v202
    %218 = vmatpush.bf16.msra.mxu0 %v201
    %219 = vmatpush.bf16.msra.mxu0 %v200
    %220 = vmatpush.bf16.msra.mxu0 %v199
    %221 = vmatpush.bf16.msra.mxu0 %v198
    %222 = vmatmul.bf16.gmra.mxu0 %v145
    %v223 = vpop.f32.mrf.mxu0
    %v224 = vadd.f32 %v164, %v223
    %v225 = vpop.f32.mrf.mxu0
    %226 = vdwg.mxu0
    %v227 = vld [vmem:[%s6] sm:$0xf]
    %v228 = vld [vmem:[%s6 + $0x4] sm:$0xf]
    %v229 = vld [vmem:[%s6 + $0x8] sm:$0xf]
    %v230 = vld [vmem:[%s6 + $0xc] sm:$0xf]
    %v231 = vld [vmem:[%s6 + $0x10] sm:$0xf]
    %v232 = vld [vmem:[%s6 + $0x14] sm:$0xf]
    %v233 = vld [vmem:[%s6 + $0x18] sm:$0xf]
    %v234 = vld [vmem:[%s6 + $0x1c] sm:$0xf]
    %v235 = vld [vmem:[%s6 + $0x20] sm:$0xf]
    %v236 = vld [vmem:[%s6 + $0x24] sm:$0xf]
    %v237 = vld [vmem:[%s6 + $0x28] sm:$0xf]
    %v238 = vld [vmem:[%s6 + $0x2c] sm:$0xf]
    %v239 = vld [vmem:[%s6 + $0x30] sm:$0xf]
    %v240 = vld [vmem:[%s6 + $0x34] sm:$0xf]
    %v241 = vld [vmem:[%s6 + $0x38] sm:$0xf]
    %v242 = vld [vmem:[%s6 + $0x3c] sm:$0xf]
    %v243 = vld [vmem:[%s7] sm:$0x1]
    %v245 = vperm.slane %v243, 0
    %v263 = vunpack.c.l.b16 %v227
    %v264 = vunpack.c.l.b16 %v228
    %v265 = vunpack.c.l.b16 %v229
    %v266 = vunpack.c.l.b16 %v230
    %v267 = vunpack.c.l.b16 %v231
    %v268 = vunpack.c.l.b16 %v232
    %v269 = vunpack.c.l.b16 %v233
    %v270 = vunpack.c.l.b16 %v234
    %v271 = vunpack.c.l.b16 %v235
    %v272 = vunpack.c.l.b16 %v236
    %v273 = vunpack.c.l.b16 %v237
    %v274 = vunpack.c.l.b16 %v238
    %v275 = vunpack.c.l.b16 %v239
    %v276 = vunpack.c.l.b16 %v240
    %v277 = vunpack.c.l.b16 %v241
    %v278 = vunpack.c.l.b16 %v242
    %v279 = vpack.c.b16 %v264, %v263
    %v280 = vpack.c.b16 %v266, %v265
    %v281 = vpack.c.b16 %v268, %v267
    %v282 = vpack.c.b16 %v270, %v269
    %v283 = vpack.c.b16 %v272, %v271
    %v284 = vpack.c.b16 %v274, %v273
    %v285 = vpack.c.b16 %v276, %v275
    %v286 = vpack.c.b16 %v278, %v277
    %295 = vmatpush.bf16.msra.mxu0 %v286
    %296 = vmatpush.bf16.msra.mxu0 %v285
    %297 = vmatpush.bf16.msra.mxu0 %v284
    %298 = vmatpush.bf16.msra.mxu0 %v283
    %299 = vmatpush.bf16.msra.mxu0 %v282
    %300 = vmatpush.bf16.msra.mxu0 %v281
    %301 = vmatpush.bf16.msra.mxu0 %v280
    %302 = vmatpush.bf16.msra.mxu0 %v279
    %303 = vmatmul.bf16.gmra.mxu0 %v145
    %v304 = vpop.f32.mrf.mxu0
    %v305 = vadd.f32 %v245, %v304
    %v306 = vpop.f32.mrf.mxu0
    %307 = vdwg.mxu0
    %v308 = vld [vmem:[%s8] sm:$0xf]
    %v309 = vld [vmem:[%s8 + $0x4] sm:$0xf]
    %v310 = vld [vmem:[%s8 + $0x8] sm:$0xf]
    %v311 = vld [vmem:[%s8 + $0xc] sm:$0xf]
    %v312 = vld [vmem:[%s8 + $0x10] sm:$0xf]
    %v313 = vld [vmem:[%s8 + $0x14] sm:$0xf]
    %v314 = vld [vmem:[%s8 + $0x18] sm:$0xf]
    %v315 = vld [vmem:[%s8 + $0x1c] sm:$0xf]
    %v316 = vld [vmem:[%s8 + $0x20] sm:$0xf]
    %v317 = vld [vmem:[%s8 + $0x24] sm:$0xf]
    %v318 = vld [vmem:[%s8 + $0x28] sm:$0xf]
    %v319 = vld [vmem:[%s8 + $0x2c] sm:$0xf]
    %v320 = vld [vmem:[%s8 + $0x30] sm:$0xf]
    %v321 = vld [vmem:[%s8 + $0x34] sm:$0xf]
    %v322 = vld [vmem:[%s8 + $0x38] sm:$0xf]
    %v323 = vld [vmem:[%s8 + $0x3c] sm:$0xf]
    %v324 = vld [vmem:[%s9] sm:$0x1]
    %v326 = vperm.slane %v324, 0
    %v344 = vunpack.c.l.b16 %v308
    %v345 = vunpack.c.l.b16 %v309
    %v346 = vunpack.c.l.b16 %v310
    %v347 = vunpack.c.l.b16 %v311
    %v348 = vunpack.c.l.b16 %v312
    %v349 = vunpack.c.l.b16 %v313
    %v350 = vunpack.c.l.b16 %v314
    %v351 = vunpack.c.l.b16 %v315
    %v352 = vunpack.c.l.b16 %v316
    %v353 = vunpack.c.l.b16 %v317
    %v354 = vunpack.c.l.b16 %v318
    %v355 = vunpack.c.l.b16 %v319
    %v356 = vunpack.c.l.b16 %v320
    %v357 = vunpack.c.l.b16 %v321
    %v358 = vunpack.c.l.b16 %v322
    %v359 = vunpack.c.l.b16 %v323
    %v360 = vpack.c.b16 %v345, %v344
    %v361 = vpack.c.b16 %v347, %v346
    %v362 = vpack.c.b16 %v349, %v348
    %v363 = vpack.c.b16 %v351, %v350
    %v364 = vpack.c.b16 %v353, %v352
    %v365 = vpack.c.b16 %v355, %v354
    %v366 = vpack.c.b16 %v357, %v356
    %v367 = vpack.c.b16 %v359, %v358
    %376 = vmatpush.bf16.msra.mxu0 %v367
    %377 = vmatpush.bf16.msra.mxu0 %v366
    %378 = vmatpush.bf16.msra.mxu0 %v365
    %379 = vmatpush.bf16.msra.mxu0 %v364
    %380 = vmatpush.bf16.msra.mxu0 %v363
    %381 = vmatpush.bf16.msra.mxu0 %v362
    %382 = vmatpush.bf16.msra.mxu0 %v361
    %383 = vmatpush.bf16.msra.mxu0 %v360
    %384 = vmatmul.bf16.gmra.mxu0 %v145
    %v385 = vpop.f32.mrf.mxu0
    %v386 = vadd.f32 %v326, %v385
    %v387 = vpop.f32.mrf.mxu0
    %388 = vdwg.mxu0
    %v389 = vlaneseq
    %v390 = vshrl.u32 %v389, 7
    %v391 = vadd.s32 %v390, 8
    %v392 = vadd.s32 %v390, 16
    %v393 = vadd.s32 %v390, 24
    %v394 = vadd.s32 %v390, 32
    %v395 = vadd.s32 %v390, 40
    %v396 = vadd.s32 %v390, 48
    %v397 = vadd.s32 %v390, 56
    %v398 = vadd.s32 %v390, 64
    %v399 = vadd.s32 %v390, 72
    %v400 = vadd.s32 %v390, 80
    %v401 = vadd.s32 %v390, 88
    %v402 = vadd.s32 %v390, 96
    %v403 = vadd.s32 %v390, 104
    %v404 = vadd.s32 %v390, 112
    %v405 = vadd.s32 %v390, 120
    %v406 = vlaneseq
    %v407 = vand.u32 %v406, 127
    %v408 = vadd.s32 %v390, 1
    %v409 = vadd.s32 %v391, 1
    %v410 = vadd.s32 %v392, 1
    %v411 = vadd.s32 %v393, 1
    %v412 = vadd.s32 %v394, 1
    %v413 = vadd.s32 %v395, 1
    %v414 = vadd.s32 %v396, 1
    %v415 = vadd.s32 %v397, 1
    %v416 = vadd.s32 %v398, 1
    %v417 = vadd.s32 %v399, 1
    %v418 = vadd.s32 %v400, 1
    %v419 = vadd.s32 %v401, 1
    %v420 = vadd.s32 %v402, 1
    %v421 = vadd.s32 %v403, 1
    %v422 = vadd.s32 %v404, 1
    %v423 = vadd.s32 %v405, 1
    %v424 = vand.u32 %v390, 1
    %v425 = vand.u32 %v391, 1
    %v426 = vand.u32 %v392, 1
    %v427 = vand.u32 %v393, 1
    %v428 = vand.u32 %v394, 1
    %v429 = vand.u32 %v395, 1
    %v430 = vand.u32 %v396, 1
    %v431 = vand.u32 %v397, 1
    %v432 = vand.u32 %v398, 1
    %v433 = vand.u32 %v399, 1
    %v434 = vand.u32 %v400, 1
    %v435 = vand.u32 %v401, 1
    %v436 = vand.u32 %v402, 1
    %v437 = vand.u32 %v403, 1
    %v438 = vand.u32 %v404, 1
    %v439 = vand.u32 %v405, 1
    %v440 = vmul.u32 %v424, 2
    %v441 = vmul.u32 %v425, 2
    %v442 = vmul.u32 %v426, 2
    %v443 = vmul.u32 %v427, 2
    %v444 = vmul.u32 %v428, 2
    %v445 = vmul.u32 %v429, 2
    %v446 = vmul.u32 %v430, 2
    %v447 = vmul.u32 %v431, 2
    %v448 = vmul.u32 %v432, 2
    %v449 = vmul.u32 %v433, 2
    %v450 = vmul.u32 %v434, 2
    %v451 = vmul.u32 %v435, 2
    %v452 = vmul.u32 %v436, 2
    %v453 = vmul.u32 %v437, 2
    %v454 = vmul.u32 %v438, 2
    %v455 = vmul.u32 %v439, 2
    %v456 = vsub.s32 %v408, %v440
    %v457 = vsub.s32 %v409, %v441
    %v458 = vsub.s32 %v410, %v442
    %v459 = vsub.s32 %v411, %v443
    %v460 = vsub.s32 %v412, %v444
    %v461 = vsub.s32 %v413, %v445
    %v462 = vsub.s32 %v414, %v446
    %v463 = vsub.s32 %v415, %v447
    %v464 = vsub.s32 %v416, %v448
    %v465 = vsub.s32 %v417, %v449
    %v466 = vsub.s32 %v418, %v450
    %v467 = vsub.s32 %v419, %v451
    %v468 = vsub.s32 %v420, %v452
    %v469 = vsub.s32 %v421, %v453
    %v470 = vsub.s32 %v422, %v454
    %v471 = vsub.s32 %v423, %v455
    %vm472 = vcmp.eq.s32.totalorder %v407, %v456
    %vm473 = vcmp.eq.s32.totalorder %v407, %v457
    %vm474 = vcmp.eq.s32.totalorder %v407, %v458
    %vm475 = vcmp.eq.s32.totalorder %v407, %v459
    %vm476 = vcmp.eq.s32.totalorder %v407, %v460
    %vm477 = vcmp.eq.s32.totalorder %v407, %v461
    %vm478 = vcmp.eq.s32.totalorder %v407, %v462
    %vm479 = vcmp.eq.s32.totalorder %v407, %v463
    %vm480 = vcmp.eq.s32.totalorder %v407, %v464
    %vm481 = vcmp.eq.s32.totalorder %v407, %v465
    %vm482 = vcmp.eq.s32.totalorder %v407, %v466
    %vm483 = vcmp.eq.s32.totalorder %v407, %v467
    %vm484 = vcmp.eq.s32.totalorder %v407, %v468
    %vm485 = vcmp.eq.s32.totalorder %v407, %v469
    %vm486 = vcmp.eq.s32.totalorder %v407, %v470
    %vm487 = vcmp.eq.s32.totalorder %v407, %v471
    %v488 = vsel %vm472, 1.0, 0.0
    %v489 = vsel %vm473, 1.0, 0.0
    %v490 = vsel %vm474, 1.0, 0.0
    %v491 = vsel %vm475, 1.0, 0.0
    %v492 = vsel %vm476, 1.0, 0.0
    %v493 = vsel %vm477, 1.0, 0.0
    %v494 = vsel %vm478, 1.0, 0.0
    %v495 = vsel %vm479, 1.0, 0.0
    %v496 = vsel %vm480, 1.0, 0.0
    %v497 = vsel %vm481, 1.0, 0.0
    %v498 = vsel %vm482, 1.0, 0.0
    %v499 = vsel %vm483, 1.0, 0.0
    %v500 = vsel %vm484, 1.0, 0.0
    %v501 = vsel %vm485, 1.0, 0.0
    %v502 = vsel %vm486, 1.0, 0.0
    %v503 = vsel %vm487, 1.0, 0.0
    %v504 = vpack.c.bf16 %v489, %v488
    %v505 = vpack.c.bf16 %v491, %v490
    %v506 = vpack.c.bf16 %v493, %v492
    %v507 = vpack.c.bf16 %v495, %v494
    %v508 = vpack.c.bf16 %v497, %v496
    %v509 = vpack.c.bf16 %v499, %v498
    %v510 = vpack.c.bf16 %v501, %v500
    %v511 = vpack.c.bf16 %v503, %v502
    %v512 = vld [vmem:[%s17] sm:$0x1]
    %v513 = vld [vmem:[%s18] sm:$0x1]
    %v514 = vpack.c.bf16 %v224, %v224
    %515 = vmatpush.bf16.msra.mxu0 %v511
    %516 = vmatpush.bf16.msra.mxu0 %v510
    %517 = vmatpush.bf16.msra.mxu0 %v509
    %518 = vmatpush.bf16.msra.mxu0 %v508
    %519 = vmatpush.bf16.msra.mxu0 %v507
    %520 = vmatpush.bf16.msra.mxu0 %v506
    %521 = vmatpush.bf16.msra.mxu0 %v505
    %522 = vmatpush.bf16.msra.mxu0 %v504
    %523 = vmatmul.bf16.gmra.mxu0 %v514
    %v524 = vpop.f32.mrf.mxu0
    %v525 = vadd.f32 0.0, %v524
    %v526 = vpop.f32.mrf.mxu0
    %527 = vdwg.mxu0
    %v528 = vpack.c.bf16 %v305, %v305
    %529 = vmatpush.bf16.msra.mxu0 %v511
    %530 = vmatpush.bf16.msra.mxu0 %v510
    %531 = vmatpush.bf16.msra.mxu0 %v509
    %532 = vmatpush.bf16.msra.mxu0 %v508
    %533 = vmatpush.bf16.msra.mxu0 %v507
    %534 = vmatpush.bf16.msra.mxu0 %v506
    %535 = vmatpush.bf16.msra.mxu0 %v505
    %536 = vmatpush.bf16.msra.mxu0 %v504
    %537 = vmatmul.bf16.gmra.mxu0 %v528
    %v538 = vpop.f32.mrf.mxu0
    %v539 = vadd.f32 0.0, %v538
    %v540 = vpop.f32.mrf.mxu0
    %541 = vdwg.mxu0
    %v543 = vperm.slane %v512, 0
    %v545 = vmul.f32 %v224, %v543
    %v547 = vperm.slane %v513, 0
    %v549 = vmul.f32 %v525, %v547
    %v550 = vadd.f32 %v545, %v549
    %v551 = vmul.f32 %v305, %v543
    %v552 = vmul.f32 %v539, %v547
    %v553 = vadd.f32 %v551, %v552
    %v555 = vrot.slane %v553, 1
    %557 = vst [vmem:[#allocation4] sm:$0x1] %v553
    %558 = vst [vmem:[#allocation4 + $0x1] sm:$0x1] %v555
    %v560 = vrot.slane %v386, 1
    %562 = vst [vmem:[#allocation5] sm:$0x1] %v386
    %563 = vst [vmem:[#allocation5 + $0x1] sm:$0x1] %v560
    %s564 = smul.u32 2, 16
    %s565 = smul.u32 %s564, 1
    %s566 = sshll.u32 %s565, 4
    %567 = dma.done [#allocation6], %s566
    %s568 = sshll.u32 %s565, 4
    %569 = dma.done %s89, %s568
    %s570 = scalar_lea.vmem %s20, %s64
    %s571 = scalar_lea.sflag [#allocation6], 2
    // Predicated region
    $region108: #{transformer_forward.3} parent=1 // pred_check
      _
    $region109: #{transformer_forward.3} parent=1 // pred_check_branch
      %573 = sbr.rel target = $region111
    $region110: #{transformer_forward.3} parent=1 // pred_region
      // Predicated region
      $region123: #{transformer_forward.3} parent=110 // pred_check
        _
      $region124: #{transformer_forward.3} parent=110 // pred_check_branch
        %591 = sbr.rel (0) target = $region126
      $region125: #{transformer_forward.3} parent=110 // pred_region
        %s593 = ssub.s32 2, 1
        loop: start=0, step=1, limit=1
        $region127: #{transformer_forward.3} parent=125 // loop_pre_header
          _
        $region128: #{transformer_forward.3} parent=125 // loop_header
          %s595 = sphi 0, %s599
          %p596 = scmp.ge.s32.totalorder %s595, 1
          %s600 = sphi [#allocation4], [#allocation4]
          %s601 = sphi %s570, %s570
        $region129: #{transformer_forward.3} parent=125 // loop_header_branch
          %598 = sbr.rel (%p596) target = $region133
        $region130: #{transformer_forward.3} parent=125 // loop_body
          %v602 = vld [vmem:[%s600] sm:%s593]
          %603 = vst [vmem:[%s601] sm:%s593] %v602
          %v604 = vld [vmem:[%s600 + $0x1] sm:%s593]
          %605 = vst [vmem:[%s601 + $0x10] sm:%s593] %v604
        $region131: #{transformer_forward.3} parent=125 // loop_footer
          %s599 = sadd.s32 1, %s595
        $region132: #{transformer_forward.3} parent=125 // loop_footer_branch
          %594 = sbr.rel target = $region128
        $region133: #{transformer_forward.3} parent=125 // loop_exit
          _
      $region126: #{transformer_forward.3} parent=110 // pred_fallthru
        _
    $region111: #{transformer_forward.3} parent=1 // pred_fallthru
      _
    // Predicated region
    $region112: #{transformer_forward.3} parent=1 // pred_check
      _
    $region113: #{transformer_forward.3} parent=1 // pred_check_branch
      %575 = sbr.rel (0) target = $region115
    $region114: #{transformer_forward.3} parent=1 // pred_region
      %s577 = ssub.s32 2, 1
      loop: start=0, step=1, limit=1
      $region116: #{transformer_forward.3} parent=114 // loop_pre_header
        _
      $region117: #{transformer_forward.3} parent=114 // loop_header
        %s579 = sphi 0, %s583
        %p580 = scmp.ge.s32.totalorder %s579, 1
        %s584 = sphi [#allocation4], [#allocation4]
        %s585 = sphi %s570, %s570
      $region118: #{transformer_forward.3} parent=114 // loop_header_branch
        %582 = sbr.rel (%p580) target = $region122
      $region119: #{transformer_forward.3} parent=114 // loop_body
        %v586 = vld [vmem:[%s584] sm:%s577]
        %587 = vst [vmem:[%s585] sm:%s577] %v586
        %v588 = vld [vmem:[%s584 + $0x1] sm:%s577]
        %589 = vst [vmem:[%s585 + $0x10] sm:%s577] %v588
      $region120: #{transformer_forward.3} parent=114 // loop_footer
        %s583 = sadd.s32 1, %s579
      $region121: #{transformer_forward.3} parent=114 // loop_footer_branch
        %578 = sbr.rel target = $region117
      $region122: #{transformer_forward.3} parent=114 // loop_exit
        _
    $region115: #{transformer_forward.3} parent=1 // pred_fallthru
      _
    // Predicated region
    $region134: #{transformer_forward.3} parent=1 // pred_check
      _
    $region135: #{transformer_forward.3} parent=1 // pred_check_branch
      %608 = sbr.rel (0) target = $region137
    $region136: #{transformer_forward.3} parent=1 // pred_region
      %609 = vsyncadd %s571, 32
    $region137: #{transformer_forward.3} parent=1 // pred_fallthru
      _
    %s610 = scalar_lea.vmem %s21, %s64
    %s611 = scalar_lea.sflag [#allocation6], 3
    // Predicated region
    $region138: #{transformer_forward.3} parent=1 // pred_check
      _
    $region139: #{transformer_forward.3} parent=1 // pred_check_branch
      %613 = sbr.rel target = $region141
    $region140: #{transformer_forward.3} parent=1 // pred_region
      // Predicated region
      $region153: #{transformer_forward.3} parent=140 // pred_check
        _
      $region154: #{transformer_forward.3} parent=140 // pred_check_branch
        %631 = sbr.rel (0) target = $region156
      $region155: #{transformer_forward.3} parent=140 // pred_region
        %s633 = ssub.s32 2, 1
        loop: start=0, step=1, limit=1
        $region157: #{transformer_forward.3} parent=155 // loop_pre_header
          _
        $region158: #{transformer_forward.3} parent=155 // loop_header
          %s635 = sphi 0, %s639
          %p636 = scmp.ge.s32.totalorder %s635, 1
          %s640 = sphi [#allocation5], [#allocation5]
          %s641 = sphi %s610, %s610
        $region159: #{transformer_forward.3} parent=155 // loop_header_branch
          %638 = sbr.rel (%p636) target = $region163
        $region160: #{transformer_forward.3} parent=155 // loop_body
          %v642 = vld [vmem:[%s640] sm:%s633]
          %643 = vst [vmem:[%s641] sm:%s633] %v642
          %v644 = vld [vmem:[%s640 + $0x1] sm:%s633]
          %645 = vst [vmem:[%s641 + $0x10] sm:%s633] %v644
        $region161: #{transformer_forward.3} parent=155 // loop_footer
          %s639 = sadd.s32 1, %s635
        $region162: #{transformer_forward.3} parent=155 // loop_footer_branch
          %634 = sbr.rel target = $region158
        $region163: #{transformer_forward.3} parent=155 // loop_exit
          _
      $region156: #{transformer_forward.3} parent=140 // pred_fallthru
        _
    $region141: #{transformer_forward.3} parent=1 // pred_fallthru
      _
    // Predicated region
    $region142: #{transformer_forward.3} parent=1 // pred_check
      _
    $region143: #{transformer_forward.3} parent=1 // pred_check_branch
      %615 = sbr.rel (0) target = $region145
    $region144: #{transformer_forward.3} parent=1 // pred_region
      %s617 = ssub.s32 2, 1
      loop: start=0, step=1, limit=1
      $region146: #{transformer_forward.3} parent=144 // loop_pre_header
        _
      $region147: #{transformer_forward.3} parent=144 // loop_header
        %s619 = sphi 0, %s623
        %p620 = scmp.ge.s32.totalorder %s619, 1
        %s624 = sphi [#allocation5], [#allocation5]
        %s625 = sphi %s610, %s610
      $region148: #{transformer_forward.3} parent=144 // loop_header_branch
        %622 = sbr.rel (%p620) target = $region152
      $region149: #{transformer_forward.3} parent=144 // loop_body
        %v626 = vld [vmem:[%s624] sm:%s617]
        %627 = vst [vmem:[%s625] sm:%s617] %v626
        %v628 = vld [vmem:[%s624 + $0x1] sm:%s617]
        %629 = vst [vmem:[%s625 + $0x10] sm:%s617] %v628
      $region150: #{transformer_forward.3} parent=144 // loop_footer
        %s623 = sadd.s32 1, %s619
      $region151: #{transformer_forward.3} parent=144 // loop_footer_branch
        %618 = sbr.rel target = $region147
      $region152: #{transformer_forward.3} parent=144 // loop_exit
        _
    $region145: #{transformer_forward.3} parent=1 // pred_fallthru
      _
    // Predicated region
    $region164: #{transformer_forward.3} parent=1 // pred_check
      _
    $region165: #{transformer_forward.3} parent=1 // pred_check_branch
      %648 = sbr.rel (0) target = $region167
    $region166: #{transformer_forward.3} parent=1 // pred_region
      %649 = vsyncadd %s611, 32
    $region167: #{transformer_forward.3} parent=1 // pred_fallthru
      _
    %v650 = vstv %s64
    %vm651 = vcmp.eq.s32.totalorder %v390, %v650
    %vm652 = vcmp.eq.s32.totalorder %v391, %v650
    %v653 = vld [vmem:[#allocation2] sm:$0xff]
    %v654 = vld [vmem:[#allocation2 + $0x8] sm:$0xff]
    %v655 = vld [vmem:[#allocation2 + $0x10] sm:$0xff]
    %v656 = vld [vmem:[#allocation2 + $0x18] sm:$0xff]
    %v657 = vsel %vm651, 1, 0
    %v658 = vsel %vm652, 1, 0
    %vm659 = vcmp.eq.s32.totalorder %v657, 1
    %vm660 = vcmp.eq.s32.totalorder %v658, 1
    %v661 = vperm.slane %v553, 0
    %v662 = vperm.slane %v555, 0
    %v665 = vsel %vm659, %v661, %v653
    %v666 = vsel %vm660, %v661, %v654
    %v667 = vsel %vm659, %v662, %v655
    %v668 = vsel %vm660, %v662, %v656
    %v669 = vld [vmem:[#allocation3] sm:$0xff]
    %v670 = vld [vmem:[#allocation3 + $0x8] sm:$0xff]
    %v671 = vld [vmem:[#allocation3 + $0x10] sm:$0xff]
    %v672 = vld [vmem:[#allocation3 + $0x18] sm:$0xff]
    %v673 = vperm.slane %v386, 0
    %v674 = vperm.slane %v560, 0
    %v677 = vsel %vm659, %v673, %v669
    %v678 = vsel %vm660, %v673, %v670
    %v679 = vsel %vm659, %v674, %v671
    %v680 = vsel %vm660, %v674, %v672
    %vm681 = vcmp.le.s32.totalorder %v407, %v650
    %v683 = vrot.slane %v550, 1
    %v685 = vpack.c.bf16 %v550, %v550
    %v686 = vpack.c.bf16 %v683, %v683
    %v687 = vpack.c.bf16 %v665, %v665
    %v688 = vpack.c.bf16 %v666, %v666
    %v689 = vpack.c.bf16 %v667, %v667
    %v690 = vpack.c.bf16 %v668, %v668
    %v691 = vpack.c.bf16 %v677, %v677
    %v692 = vpack.c.bf16 %v678, %v678
    %v693 = vpack.c.bf16 %v679, %v679
    %v694 = vpack.c.bf16 %v680, %v680
    %v697 = vunpack.c.l.b16 %v687
    %v698 = vunpack.c.l.b16 %v688
    %v699 = vpack.c.b16 %v698, %v697
    %vm700 = vcmask 261120
    %v702 = vsel %vm700, %v685, 0
    %v705 = vsel %vm700, %v699, 0
    %707 = vmatpush.bf16.xpose.msra.mxu0 0
    %708 = vmatpush.bf16.xpose.msra.mxu0 0
    %709 = vmatpush.bf16.xpose.msra.mxu0 0
    %710 = vmatpush.bf16.xpose.msra.mxu0 0
    %711 = vmatpush.bf16.xpose.msra.mxu0 0
    %712 = vmatpush.bf16.xpose.msra.mxu0 0
    %713 = vmatpush.bf16.xpose.msra.mxu0 0
    %714 = vmatpush.bf16.xpose.msra.mxu0 %v705
    %715 = vmatmul.bf16.gmra.mxu0 %v702
    %v716 = vpop.f32.mrf.mxu0
    %v717 = vadd.f32 0.0, %v716
    %v718 = vpop.f32.mrf.mxu0
    %719 = vdwg.mxu0
    %v722 = vunpack.c.l.b16 %v689
    %v723 = vunpack.c.l.b16 %v690
    %v724 = vpack.c.b16 %v723, %v722
    %v726 = vsel %vm700, %v686, 0
    %v729 = vsel %vm700, %v724, 0
    %731 = vmatpush.bf16.xpose.msra.mxu0 0
    %732 = vmatpush.bf16.xpose.msra.mxu0 0
    %733 = vmatpush.bf16.xpose.msra.mxu0 0
    %734 = vmatpush.bf16.xpose.msra.mxu0 0
    %735 = vmatpush.bf16.xpose.msra.mxu0 0
    %736 = vmatpush.bf16.xpose.msra.mxu0 0
    %737 = vmatpush.bf16.xpose.msra.mxu0 0
    %738 = vmatpush.bf16.xpose.msra.mxu0 %v729
    %739 = vmatmul.bf16.gmra.mxu0 %v726
    %v740 = vpop.f32.mrf.mxu0
    %v741 = vadd.f32 0.0, %v740
    %v742 = vpop.f32.mrf.mxu0
    %743 = vdwg.mxu0
    %v744 = vmul.f32 %v717, 0.17677669
    %v745 = vmul.f32 %v741, 0.17677669
    %v746 = vsel %vm681, 1, 0
    %vm747 = vcmp.eq.s32.totalorder %v746, 1
    %v748 = vsel %vm747, %v744, -inf
    %v749 = vsel %vm747, %v745, -inf
    %vm750 = vcmask 122880
    %v751 = vsel %vm750, %v748, -inf
    %752 = vmax.xlane.f32.xlu0 %v751
    %v753 = vpop.xlane.xlu0 %752
    %v754 = vsel %vm750, %v749, -inf
    %755 = vmax.xlane.f32.xlu0 %v754
    %v756 = vpop.xlane.xlu0 %755
    %v757 = vsub.f32 %v748, %v753
    %v758 = vsub.f32 %v749, %v756
    %v759 = vmul.f32 %v757, 1.442695
    %v760 = vpow.pop %v759
    %v761 = vmul.f32 %v758, 1.442695
    %v762 = vpow.pop %v761
    %v763 = vsel %vm750, %v760, 0.0
    %764 = vadd.xlane.f32.xlu0 %v763
    %v765 = vpop.xlane.xlu0 %764
    %v766 = vsel %vm750, %v762, 0.0
    %767 = vadd.xlane.f32.xlu0 %v766
    %v768 = vpop.xlane.xlu0 %767
    %v769 = vrcp.pop %v765
    %v770 = vrcp.pop %v768
    %v771 = vmul.f32 %v760, %v769
    %v772 = vmul.f32 %v762, %v770
    %v773 = vpack.c.bf16 %v771, %v771
    %v774 = vpack.c.bf16 %v772, %v772
    %v777 = vunpack.c.l.b16 %v691
    %v778 = vunpack.c.l.b16 %v692
    %v779 = vpack.c.b16 %v778, %v777
    %vm781 = vcmask 130048
    %v783 = vsel %vm781, %v773, 0
    %785 = vmatpush.bf16.msra.mxu0 0
    %786 = vmatpush.bf16.msra.mxu0 0
    %787 = vmatpush.bf16.msra.mxu0 0
    %788 = vmatpush.bf16.msra.mxu0 0
    %789 = vmatpush.bf16.msra.mxu0 0
    %790 = vmatpush.bf16.msra.mxu0 0
    %791 = vmatpush.bf16.msra.mxu0 0
    %792 = vmatpush.bf16.msra.mxu0 %v779
    %793 = vmatmul.bf16.gmra.mxu0 %v783
    %v794 = vpop.f32.mrf.mxu0
    %v795 = vadd.f32 0.0, %v794
    %v796 = vpop.f32.mrf.mxu0
    %797 = vdwg.mxu0
    %v800 = vunpack.c.l.b16 %v693
    %v801 = vunpack.c.l.b16 %v694
    %v802 = vpack.c.b16 %v801, %v800
    %v805 = vsel %vm781, %v774, 0
    %807 = vmatpush.bf16.msra.mxu0 0
    %808 = vmatpush.bf16.msra.mxu0 0
    %809 = vmatpush.bf16.msra.mxu0 0
    %810 = vmatpush.bf16.msra.mxu0 0
    %811 = vmatpush.bf16.msra.mxu0 0
    %812 = vmatpush.bf16.msra.mxu0 0
    %813 = vmatpush.bf16.msra.mxu0 0
    %814 = vmatpush.bf16.msra.mxu0 %v802
    %815 = vmatmul.bf16.gmra.mxu0 %v805
    %v816 = vpop.f32.mrf.mxu0
    %v817 = vadd.f32 0.0, %v816
    %v818 = vpop.f32.mrf.mxu0
    %819 = vdwg.mxu0
    %v821 = vunpack.c.l.b16 %v685
    %v822 = vpack.c.b16 %v821, %v821
    %823 = vrot.lane.b32.xlu0 %v822, 96
    %v824 = vpop.permute.xlu0 %823
    %825 = vrot.lane.b32.xlu0 %v699, 96
    %v826 = vpop.permute.xlu0 %825
    %v828 = vsel %vm700, %v824, 0
    %v831 = vsel %vm700, %v826, 0
    %833 = vmatpush.bf16.xpose.msra.mxu0 0
    %834 = vmatpush.bf16.xpose.msra.mxu0 0
    %835 = vmatpush.bf16.xpose.msra.mxu0 0
    %836 = vmatpush.bf16.xpose.msra.mxu0 0
    %837 = vmatpush.bf16.xpose.msra.mxu0 0
    %838 = vmatpush.bf16.xpose.msra.mxu0 0
    %839 = vmatpush.bf16.xpose.msra.mxu0 0
    %840 = vmatpush.bf16.xpose.msra.mxu0 %v831
    %841 = vmatmul.bf16.gmra.mxu0 %v828
    %v842 = vpop.f32.mrf.mxu0
    %v843 = vadd.f32 0.0, %v842
    %v844 = vpop.f32.mrf.mxu0
    %845 = vdwg.mxu0
    %v847 = vunpack.c.l.b16 %v686
    %v848 = vpack.c.b16 %v847, %v847
    %849 = vrot.lane.b32.xlu0 %v848, 96
    %v850 = vpop.permute.xlu0 %849
    %851 = vrot.lane.b32.xlu0 %v724, 96
    %v852 = vpop.permute.xlu0 %851
    %v854 = vsel %vm700, %v850, 0
    %v857 = vsel %vm700, %v852, 0
    %859 = vmatpush.bf16.xpose.msra.mxu0 0
    %860 = vmatpush.bf16.xpose.msra.mxu0 0
    %861 = vmatpush.bf16.xpose.msra.mxu0 0
    %862 = vmatpush.bf16.xpose.msra.mxu0 0
    %863 = vmatpush.bf16.xpose.msra.mxu0 0
    %864 = vmatpush.bf16.xpose.msra.mxu0 0
    %865 = vmatpush.bf16.xpose.msra.mxu0 0
    %866 = vmatpush.bf16.xpose.msra.mxu0 %v857
    %867 = vmatmul.bf16.gmra.mxu0 %v854
    %v868 = vpop.f32.mrf.mxu0
    %v869 = vadd.f32 0.0, %v868
    %v870 = vpop.f32.mrf.mxu0
    %871 = vdwg.mxu0
    %v872 = vmul.f32 %v843, 0.17677669
    %v873 = vmul.f32 %v869, 0.17677669
    %v874 = vsel %vm747, %v872, -inf
    %v875 = vsel %vm747, %v873, -inf
    %v876 = vsel %vm750, %v874, -inf
    %877 = vmax.xlane.f32.xlu0 %v876
    %v878 = vpop.xlane.xlu0 %877
    %v879 = vsel %vm750, %v875, -inf
    %880 = vmax.xlane.f32.xlu0 %v879
    %v881 = vpop.xlane.xlu0 %880
    %v882 = vsub.f32 %v874, %v878
    %v883 = vsub.f32 %v875, %v881
    %v884 = vmul.f32 %v882, 1.442695
    %v885 = vpow.pop %v884
    %v886 = vmul.f32 %v883, 1.442695
    %v887 = vpow.pop %v886
    %v888 = vsel %vm750, %v885, 0.0
    %889 = vadd.xlane.f32.xlu0 %v888
    %v890 = vpop.xlane.xlu0 %889
    %v891 = vsel %vm750, %v887, 0.0
    %892 = vadd.xlane.f32.xlu0 %v891
    %v893 = vpop.xlane.xlu0 %892
    %v894 = vrcp.pop %v890
    %v895 = vrcp.pop %v893
    %v896 = vmul.f32 %v885, %v894
    %v897 = vmul.f32 %v887, %v895
    %v898 = vpack.c.bf16 %v896, %v896
    %v899 = vpack.c.bf16 %v897, %v897
    %900 = vrot.lane.b32.xlu0 %v779, 96
    %v901 = vpop.permute.xlu0 %900
    %v904 = vsel %vm781, %v898, 0
    %906 = vmatpush.bf16.msra.mxu0 0
    %907 = vmatpush.bf16.msra.mxu0 0
    %908 = vmatpush.bf16.msra.mxu0 0
    %909 = vmatpush.bf16.msra.mxu0 0
    %910 = vmatpush.bf16.msra.mxu0 0
    %911 = vmatpush.bf16.msra.mxu0 0
    %912 = vmatpush.bf16.msra.mxu0 0
    %913 = vmatpush.bf16.msra.mxu0 %v901
    %914 = vmatmul.bf16.gmra.mxu0 %v904
    %v915 = vpop.f32.mrf.mxu0
    %v916 = vadd.f32 0.0, %v915
    %v917 = vpop.f32.mrf.mxu0
    %918 = vdwg.mxu0
    %919 = vrot.lane.b32.xlu0 %v802, 96
    %v920 = vpop.permute.xlu0 %919
    %v923 = vsel %vm781, %v899, 0
    %925 = vmatpush.bf16.msra.mxu0 0
    %926 = vmatpush.bf16.msra.mxu0 0
    %927 = vmatpush.bf16.msra.mxu0 0
    %928 = vmatpush.bf16.msra.mxu0 0
    %929 = vmatpush.bf16.msra.mxu0 0
    %930 = vmatpush.bf16.msra.mxu0 0
    %931 = vmatpush.bf16.msra.mxu0 0
    %932 = vmatpush.bf16.msra.mxu0 %v920
    %933 = vmatmul.bf16.gmra.mxu0 %v923
    %v934 = vpop.f32.mrf.mxu0
    %v935 = vadd.f32 0.0, %v934
    %v936 = vpop.f32.mrf.mxu0
    %937 = vdwg.mxu0
    %938 = vrot.lane.b32.xlu0 %v822, 64
    %v939 = vpop.permute.xlu0 %938
    %940 = vrot.lane.b32.xlu0 %v699, 64
    %v941 = vpop.permute.xlu0 %940
    %v943 = vsel %vm700, %v939, 0
    %v946 = vsel %vm700, %v941, 0
    %948 = vmatpush.bf16.xpose.msra.mxu0 0
    %949 = vmatpush.bf16.xpose.msra.mxu0 0
    %950 = vmatpush.bf16.xpose.msra.mxu0 0
    %951 = vmatpush.bf16.xpose.msra.mxu0 0
    %952 = vmatpush.bf16.xpose.msra.mxu0 0
    %953 = vmatpush.bf16.xpose.msra.mxu0 0
    %954 = vmatpush.bf16.xpose.msra.mxu0 0
    %955 = vmatpush.bf16.xpose.msra.mxu0 %v946
    %956 = vmatmul.bf16.gmra.mxu0 %v943
    %v957 = vpop.f32.mrf.mxu0
    %v958 = vadd.f32 0.0, %v957
    %v959 = vpop.f32.mrf.mxu0
    %960 = vdwg.mxu0
    %961 = vrot.lane.b32.xlu0 %v848, 64
    %v962 = vpop.permute.xlu0 %961
    %963 = vrot.lane.b32.xlu0 %v724, 64
    %v964 = vpop.permute.xlu0 %963
    %v966 = vsel %vm700, %v962, 0
    %v969 = vsel %vm700, %v964, 0
    %971 = vmatpush.bf16.xpose.msra.mxu0 0
    %972 = vmatpush.bf16.xpose.msra.mxu0 0
    %973 = vmatpush.bf16.xpose.msra.mxu0 0
    %974 = vmatpush.bf16.xpose.msra.mxu0 0
    %975 = vmatpush.bf16.xpose.msra.mxu0 0
    %976 = vmatpush.bf16.xpose.msra.mxu0 0
    %977 = vmatpush.bf16.xpose.msra.mxu0 0
    %978 = vmatpush.bf16.xpose.msra.mxu0 %v969
    %979 = vmatmul.bf16.gmra.mxu0 %v966
    %v980 = vpop.f32.mrf.mxu0
    %v981 = vadd.f32 0.0, %v980
    %v982 = vpop.f32.mrf.mxu0
    %983 = vdwg.mxu0
    %v984 = vmul.f32 %v958, 0.17677669
    %v985 = vmul.f32 %v981, 0.17677669
    %v986 = vsel %vm747, %v984, -inf
    %v987 = vsel %vm747, %v985, -inf
    %v988 = vsel %vm750, %v986, -inf
    %989 = vmax.xlane.f32.xlu0 %v988
    %v990 = vpop.xlane.xlu0 %989
    %v991 = vsel %vm750, %v987, -inf
    %992 = vmax.xlane.f32.xlu0 %v991
    %v993 = vpop.xlane.xlu0 %992
    %v994 = vsub.f32 %v986, %v990
    %v995 = vsub.f32 %v987, %v993
    %v996 = vmul.f32 %v994, 1.442695
    %v997 = vpow.pop %v996
    %v998 = vmul.f32 %v995, 1.442695
    %v999 = vpow.pop %v998
    %v1000 = vsel %vm750, %v997, 0.0
    %1001 = vadd.xlane.f32.xlu0 %v1000
    %v1002 = vpop.xlane.xlu0 %1001
    %v1003 = vsel %vm750, %v999, 0.0
    %1004 = vadd.xlane.f32.xlu0 %v1003
    %v1005 = vpop.xlane.xlu0 %1004
    %v1006 = vrcp.pop %v1002
    %v1007 = vrcp.pop %v1005
    %v1008 = vmul.f32 %v997, %v1006
    %v1009 = vmul.f32 %v999, %v1007
    %v1010 = vpack.c.bf16 %v1008, %v1008
    %v1011 = vpack.c.bf16 %v1009, %v1009
    %1012 = vrot.lane.b32.xlu0 %v779, 64
    %v1013 = vpop.permute.xlu0 %1012
    %v1016 = vsel %vm781, %v1010, 0
    %1018 = vmatpush.bf16.msra.mxu0 0
    %1019 = vmatpush.bf16.msra.mxu0 0
    %1020 = vmatpush.bf16.msra.mxu0 0
    %1021 = vmatpush.bf16.msra.mxu0 0
    %1022 = vmatpush.bf16.msra.mxu0 0
    %1023 = vmatpush.bf16.msra.mxu0 0
    %1024 = vmatpush.bf16.msra.mxu0 0
    %1025 = vmatpush.bf16.msra.mxu0 %v1013
    %1026 = vmatmul.bf16.gmra.mxu0 %v1016
    %v1027 = vpop.f32.mrf.mxu0
    %v1028 = vadd.f32 0.0, %v1027
    %v1029 = vpop.f32.mrf.mxu0
    %1030 = vdwg.mxu0
    %1031 = vrot.lane.b32.xlu0 %v802, 64
    %v1032 = vpop.permute.xlu0 %1031
    %v1035 = vsel %vm781, %v1011, 0
    %1037 = vmatpush.bf16.msra.mxu0 0
    %1038 = vmatpush.bf16.msra.mxu0 0
    %1039 = vmatpush.bf16.msra.mxu0 0
    %1040 = vmatpush.bf16.msra.mxu0 0
    %1041 = vmatpush.bf16.msra.mxu0 0
    %1042 = vmatpush.bf16.msra.mxu0 0
    %1043 = vmatpush.bf16.msra.mxu0 0
    %1044 = vmatpush.bf16.msra.mxu0 %v1032
    %1045 = vmatmul.bf16.gmra.mxu0 %v1035
    %v1046 = vpop.f32.mrf.mxu0
    %v1047 = vadd.f32 0.0, %v1046
    %v1048 = vpop.f32.mrf.mxu0
    %1049 = vdwg.mxu0
    %1050 = vrot.lane.b32.xlu0 %v822, 32
    %v1051 = vpop.permute.xlu0 %1050
    %1052 = vrot.lane.b32.xlu0 %v699, 32
    %v1053 = vpop.permute.xlu0 %1052
    %v1055 = vsel %vm700, %v1051, 0
    %v1058 = vsel %vm700, %v1053, 0
    %1060 = vmatpush.bf16.xpose.msra.mxu0 0
    %1061 = vmatpush.bf16.xpose.msra.mxu0 0
    %1062 = vmatpush.bf16.xpose.msra.mxu0 0
    %1063 = vmatpush.bf16.xpose.msra.mxu0 0
    %1064 = vmatpush.bf16.xpose.msra.mxu0 0
    %1065 = vmatpush.bf16.xpose.msra.mxu0 0
    %1066 = vmatpush.bf16.xpose.msra.mxu0 0
    %1067 = vmatpush.bf16.xpose.msra.mxu0 %v1058
    %1068 = vmatmul.bf16.gmra.mxu0 %v1055
    %v1069 = vpop.f32.mrf.mxu0
    %v1070 = vadd.f32 0.0, %v1069
    %v1071 = vpop.f32.mrf.mxu0
    %1072 = vdwg.mxu0
    %1073 = vrot.lane.b32.xlu0 %v848, 32
    %v1074 = vpop.permute.xlu0 %1073
    %1075 = vrot.lane.b32.xlu0 %v724, 32
    %v1076 = vpop.permute.xlu0 %1075
    %v1078 = vsel %vm700, %v1074, 0
    %v1081 = vsel %vm700, %v1076, 0
    %1083 = vmatpush.bf16.xpose.msra.mxu0 0
    %1084 = vmatpush.bf16.xpose.msra.mxu0 0
    %1085 = vmatpush.bf16.xpose.msra.mxu0 0
    %1086 = vmatpush.bf16.xpose.msra.mxu0 0
    %1087 = vmatpush.bf16.xpose.msra.mxu0 0
    %1088 = vmatpush.bf16.xpose.msra.mxu0 0
    %1089 = vmatpush.bf16.xpose.msra.mxu0 0
    %1090 = vmatpush.bf16.xpose.msra.mxu0 %v1081
    %1091 = vmatmul.bf16.gmra.mxu0 %v1078
    %v1092 = vpop.f32.mrf.mxu0
    %v1093 = vadd.f32 0.0, %v1092
    %v1094 = vpop.f32.mrf.mxu0
    %1095 = vdwg.mxu0
    %v1096 = vmul.f32 %v1070, 0.17677669
    %v1097 = vmul.f32 %v1093, 0.17677669
    %v1098 = vsel %vm747, %v1096, -inf
    %v1099 = vsel %vm747, %v1097, -inf
    %v1100 = vsel %vm750, %v1098, -inf
    %1101 = vmax.xlane.f32.xlu0 %v1100
    %v1102 = vpop.xlane.xlu0 %1101
    %v1103 = vsel %vm750, %v1099, -inf
    %1104 = vmax.xlane.f32.xlu0 %v1103
    %v1105 = vpop.xlane.xlu0 %1104
    %v1106 = vsub.f32 %v1098, %v1102
    %v1107 = vsub.f32 %v1099, %v1105
    %v1108 = vmul.f32 %v1106, 1.442695
    %v1109 = vpow.pop %v1108
    %v1110 = vmul.f32 %v1107, 1.442695
    %v1111 = vpow.pop %v1110
    %v1112 = vsel %vm750, %v1109, 0.0
    %1113 = vadd.xlane.f32.xlu0 %v1112
    %v1114 = vpop.xlane.xlu0 %1113
    %v1115 = vsel %vm750, %v1111, 0.0
    %1116 = vadd.xlane.f32.xlu0 %v1115
    %v1117 = vpop.xlane.xlu0 %1116
    %v1118 = vrcp.pop %v1114
    %v1119 = vrcp.pop %v1117
    %v1120 = vmul.f32 %v1109, %v1118
    %v1121 = vmul.f32 %v1111, %v1119
    %v1122 = vpack.c.bf16 %v1120, %v1120
    %v1123 = vpack.c.bf16 %v1121, %v1121
    %1124 = vrot.lane.b32.xlu0 %v779, 32
    %v1125 = vpop.permute.xlu0 %1124
    %v1128 = vsel %vm781, %v1122, 0
    %1130 = vmatpush.bf16.msra.mxu0 0
    %1131 = vmatpush.bf16.msra.mxu0 0
    %1132 = vmatpush.bf16.msra.mxu0 0
    %1133 = vmatpush.bf16.msra.mxu0 0
    %1134 = vmatpush.bf16.msra.mxu0 0
    %1135 = vmatpush.bf16.msra.mxu0 0
    %1136 = vmatpush.bf16.msra.mxu0 0
    %1137 = vmatpush.bf16.msra.mxu0 %v1125
    %1138 = vmatmul.bf16.gmra.mxu0 %v1128
    %v1139 = vpop.f32.mrf.mxu0
    %v1140 = vadd.f32 0.0, %v1139
    %v1141 = vpop.f32.mrf.mxu0
    %1142 = vdwg.mxu0
    %1143 = vrot.lane.b32.xlu0 %v802, 32
    %v1144 = vpop.permute.xlu0 %1143
    %v1147 = vsel %vm781, %v1123, 0
    %1149 = vmatpush.bf16.msra.mxu0 0
    %1150 = vmatpush.bf16.msra.mxu0 0
    %1151 = vmatpush.bf16.msra.mxu0 0
    %1152 = vmatpush.bf16.msra.mxu0 0
    %1153 = vmatpush.bf16.msra.mxu0 0
    %1154 = vmatpush.bf16.msra.mxu0 0
    %1155 = vmatpush.bf16.msra.mxu0 0
    %1156 = vmatpush.bf16.msra.mxu0 %v1144
    %1157 = vmatmul.bf16.gmra.mxu0 %v1147
    %v1158 = vpop.f32.mrf.mxu0
    %v1159 = vadd.f32 0.0, %v1158
    %v1160 = vpop.f32.mrf.mxu0
    %1161 = vdwg.mxu0
    %v1164 = vrot.slane %v817, 7
    %vm1165 = vcmask 1041409
    %v1166 = vsel %vm1165, %v1164, %v795
    %v1170 = vrot.slane %v935, 7
    %v1171 = vsel %vm1165, %v1170, %v916
    %1172 = vrot.lane.b32.xlu0 %v1171, 32
    %v1173 = vpop.permute.xlu0 %1172
    %v1177 = vrot.slane %v1047, 7
    %v1178 = vsel %vm1165, %v1177, %v1028
    %1179 = vrot.lane.b32.xlu0 %v1178, 64
    %v1180 = vpop.permute.xlu0 %1179
    %v1184 = vrot.slane %v1159, 7
    %v1185 = vsel %vm1165, %v1184, %v1140
    %1186 = vrot.lane.b32.xlu0 %v1185, 96
    %v1187 = vpop.permute.xlu0 %1186
    %v1189 = vsel %vm700, %v1166, %v1173
    %vm1190 = vcmask 523264
    %v1191 = vsel %vm1190, %v1189, %v1180
    %vm1192 = vcmask 785408
    %v1193 = vsel %vm1192, %v1191, %v1187
    %v1194 = vpack.c.bf16 %v1193, %v1193
    %v1195 = vld [vmem:[%s10] sm:$0xf]
    %v1196 = vld [vmem:[%s10 + $0x4] sm:$0xf]
    %v1197 = vld [vmem:[%s10 + $0x8] sm:$0xf]
    %v1198 = vld [vmem:[%s10 + $0xc] sm:$0xf]
    %v1199 = vld [vmem:[%s10 + $0x10] sm:$0xf]
    %v1200 = vld [vmem:[%s10 + $0x14] sm:$0xf]
    %v1201 = vld [vmem:[%s10 + $0x18] sm:$0xf]
    %v1202 = vld [vmem:[%s10 + $0x1c] sm:$0xf]
    %v1203 = vld [vmem:[%s10 + $0x20] sm:$0xf]
    %v1204 = vld [vmem:[%s10 + $0x24] sm:$0xf]
    %v1205 = vld [vmem:[%s10 + $0x28] sm:$0xf]
    %v1206 = vld [vmem:[%s10 + $0x2c] sm:$0xf]
    %v1207 = vld [vmem:[%s10 + $0x30] sm:$0xf]
    %v1208 = vld [vmem:[%s10 + $0x34] sm:$0xf]
    %v1209 = vld [vmem:[%s10 + $0x38] sm:$0xf]
    %v1210 = vld [vmem:[%s10 + $0x3c] sm:$0xf]
    %v1211 = vld [vmem:[%s11] sm:$0x1]
    %v1213 = vperm.slane %v1211, 0
    %v1231 = vunpack.c.l.b16 %v1195
    %v1232 = vunpack.c.l.b16 %v1196
    %v1233 = vunpack.c.l.b16 %v1197
    %v1234 = vunpack.c.l.b16 %v1198
    %v1235 = vunpack.c.l.b16 %v1199
    %v1236 = vunpack.c.l.b16 %v1200
    %v1237 = vunpack.c.l.b16 %v1201
    %v1238 = vunpack.c.l.b16 %v1202
    %v1239 = vunpack.c.l.b16 %v1203
    %v1240 = vunpack.c.l.b16 %v1204
    %v1241 = vunpack.c.l.b16 %v1205
    %v1242 = vunpack.c.l.b16 %v1206
    %v1243 = vunpack.c.l.b16 %v1207
    %v1244 = vunpack.c.l.b16 %v1208
    %v1245 = vunpack.c.l.b16 %v1209
    %v1246 = vunpack.c.l.b16 %v1210
    %v1247 = vpack.c.b16 %v1232, %v1231
    %v1248 = vpack.c.b16 %v1234, %v1233
    %v1249 = vpack.c.b16 %v1236, %v1235
    %v1250 = vpack.c.b16 %v1238, %v1237
    %v1251 = vpack.c.b16 %v1240, %v1239
    %v1252 = vpack.c.b16 %v1242, %v1241
    %v1253 = vpack.c.b16 %v1244, %v1243
    %v1254 = vpack.c.b16 %v1246, %v1245
    %1263 = vmatpush.bf16.msra.mxu0 %v1254
    %1264 = vmatpush.bf16.msra.mxu0 %v1253
    %1265 = vmatpush.bf16.msra.mxu0 %v1252
    %1266 = vmatpush.bf16.msra.mxu0 %v1251
    %1267 = vmatpush.bf16.msra.mxu0 %v1250
    %1268 = vmatpush.bf16.msra.mxu0 %v1249
    %1269 = vmatpush.bf16.msra.mxu0 %v1248
    %1270 = vmatpush.bf16.msra.mxu0 %v1247
    %1271 = vmatmul.bf16.gmra.mxu0 %v1194
    %v1272 = vpop.f32.mrf.mxu0
    %v1273 = vadd.f32 %v1213, %v1272
    %v1274 = vpop.f32.mrf.mxu0
    %1275 = vdwg.mxu0
    %v1276 = vadd.f32 %v114, %v1273
    %v1277 = vmul.f32 %v1276, %v1276
    %v1278 = vsel %vm116, %v1277, 0.0
    %1279 = vadd.xlane.f32.xlu0 %v1278
    %v1280 = vpop.xlane.xlu0 %1279
    %v1281 = vmul.f32 %v1280, %v126
    %v1282 = vadd.f32 %v1281, 1e-05
    %v1283 = vrsqrt.pop %v1282
    %v1284 = vmul.f32 %v1283, %v1282
    %v1285 = vmul.f32 %v1284, %v1283
    %v1286 = vmul.f32 0.5, %v1285
    %v1287 = vsub.f32 1.5, %v1286
    %v1288 = vmul.f32 %v1283, %v1287
    %vm1289 = vweird.f32 %v1282
    %vm1290 = vweird.f32 %v1283
    %vm1291 = vmor %vm1289, %vm1290
    %v1292 = vsel %vm1291, %v1283, %v1288
    %v1293 = vmul.f32 %v1276, %v1292
    %v1294 = vld [vmem:[%s16] sm:$0x1]
    %v1296 = vperm.slane %v1294, 0
    %v1298 = vmul.f32 %v1293, %v1296
    %v1299 = vpack.c.bf16 %v1298, %v1298
    %v1300 = vld [vmem:[%s12] sm:$0xff]
    %v1301 = vld [vmem:[%s12 + $0x8] sm:$0xff]
    %v1302 = vld [vmem:[%s12 + $0x10] sm:$0xff]
    %v1303 = vld [vmem:[%s12 + $0x18] sm:$0xff]
    %v1304 = vld [vmem:[%s12 + $0x20] sm:$0xff]
    %v1305 = vld [vmem:[%s12 + $0x28] sm:$0xff]
    %v1306 = vld [vmem:[%s12 + $0x30] sm:$0xff]
    %v1307 = vld [vmem:[%s12 + $0x38] sm:$0xff]
    %v1308 = vld [vmem:[%s12 + $0x40] sm:$0xff]
    %v1309 = vld [vmem:[%s12 + $0x48] sm:$0xff]
    %v1310 = vld [vmem:[%s12 + $0x50] sm:$0xff]
    %v1311 = vld [vmem:[%s12 + $0x58] sm:$0xff]
    %v1312 = vld [vmem:[%s12 + $0x60] sm:$0xff]
    %v1313 = vld [vmem:[%s12 + $0x68] sm:$0xff]
    %v1314 = vld [vmem:[%s12 + $0x70] sm:$0xff]
    %v1315 = vld [vmem:[%s12 + $0x78] sm:$0xff]
    %v1316 = vld [vmem:[%s12 + $0x80] sm:$0xff]
    %v1317 = vld [vmem:[%s12 + $0x88] sm:$0xff]
    %v1318 = vld [vmem:[%s12 + $0x90] sm:$0xff]
    %v1319 = vld [vmem:[%s12 + $0x98] sm:$0xff]
    %v1320 = vld [vmem:[%s12 + $0xa0] sm:$0xff]
    %v1321 = vld [vmem:[%s12 + $0xa8] sm:$0xff]
    %v1322 = vld [vmem:[%s12 + $0xb0] sm:$0xff]
    %v1323 = vld [vmem:[%s12 + $0xb8] sm:$0xff]
    %v1324 = vld [vmem:[%s12 + $0xc0] sm:$0xff]
    %v1325 = vld [vmem:[%s12 + $0xc8] sm:$0xff]
    %v1326 = vld [vmem:[%s12 + $0xd0] sm:$0xff]
    %v1327 = vld [vmem:[%s12 + $0xd8] sm:$0xff]
    %v1328 = vld [vmem:[%s12 + $0xe0] sm:$0xff]
    %v1329 = vld [vmem:[%s12 + $0xe8] sm:$0xff]
    %v1330 = vld [vmem:[%s12 + $0xf0] sm:$0xff]
    %v1331 = vld [vmem:[%s12 + $0xf8] sm:$0xff]
    %v1364 = vunpack.c.l.b16 %v1300
    %v1365 = vunpack.c.h.b16 %v1300
    %v1366 = vunpack.c.l.b16 %v1301
    %v1367 = vunpack.c.h.b16 %v1301
    %v1368 = vunpack.c.l.b16 %v1302
    %v1369 = vunpack.c.h.b16 %v1302
    %v1370 = vunpack.c.l.b16 %v1303
    %v1371 = vunpack.c.h.b16 %v1303
    %v1372 = vunpack.c.l.b16 %v1304
    %v1373 = vunpack.c.h.b16 %v1304
    %v1374 = vunpack.c.l.b16 %v1305
    %v1375 = vunpack.c.h.b16 %v1305
    %v1376 = vunpack.c.l.b16 %v1306
    %v1377 = vunpack.c.h.b16 %v1306
    %v1378 = vunpack.c.l.b16 %v1307
    %v1379 = vunpack.c.h.b16 %v1307
    %v1380 = vunpack.c.l.b16 %v1308
    %v1381 = vunpack.c.h.b16 %v1308
    %v1382 = vunpack.c.l.b16 %v1309
    %v1383 = vunpack.c.h.b16 %v1309
    %v1384 = vunpack.c.l.b16 %v1310
    %v1385 = vunpack.c.h.b16 %v1310
    %v1386 = vunpack.c.l.b16 %v1311
    %v1387 = vunpack.c.h.b16 %v1311
    %v1388 = vunpack.c.l.b16 %v1312
    %v1389 = vunpack.c.h.b16 %v1312
    %v1390 = vunpack.c.l.b16 %v1313
    %v1391 = vunpack.c.h.b16 %v1313
    %v1392 = vunpack.c.l.b16 %v1314
    %v1393 = vunpack.c.h.b16 %v1314
    %v1394 = vunpack.c.l.b16 %v1315
    %v1395 = vunpack.c.h.b16 %v1315
    %v1396 = vunpack.c.l.b16 %v1316
    %v1397 = vunpack.c.h.b16 %v1316
    %v1398 = vunpack.c.l.b16 %v1317
    %v1399 = vunpack.c.h.b16 %v1317
    %v1400 = vunpack.c.l.b16 %v1318
    %v1401 = vunpack.c.h.b16 %v1318
    %v1402 = vunpack.c.l.b16 %v1319
    %v1403 = vunpack.c.h.b16 %v1319
    %v1404 = vunpack.c.l.b16 %v1320
    %v1405 = vunpack.c.h.b16 %v1320
    %v1406 = vunpack.c.l.b16 %v1321
    %v1407 = vunpack.c.h.b16 %v1321
    %v1408 = vunpack.c.l.b16 %v1322
    %v1409 = vunpack.c.h.b16 %v1322
    %v1410 = vunpack.c.l.b16 %v1323
    %v1411 = vunpack.c.h.b16 %v1323
    %v1412 = vunpack.c.l.b16 %v1324
    %v1413 = vunpack.c.h.b16 %v1324
    %v1414 = vunpack.c.l.b16 %v1325
    %v1415 = vunpack.c.h.b16 %v1325
    %v1416 = vunpack.c.l.b16 %v1326
    %v1417 = vunpack.c.h.b16 %v1326
    %v1418 = vunpack.c.l.b16 %v1327
    %v1419 = vunpack.c.h.b16 %v1327
    %v1420 = vunpack.c.l.b16 %v1328
    %v1421 = vunpack.c.h.b16 %v1328
    %v1422 = vunpack.c.l.b16 %v1329
    %v1423 = vunpack.c.h.b16 %v1329
    %v1424 = vunpack.c.l.b16 %v1330
    %v1425 = vunpack.c.h.b16 %v1330
    %v1426 = vunpack.c.l.b16 %v1331
    %v1427 = vunpack.c.h.b16 %v1331
    %v1428 = vpack.c.b16 %v1368, %v1364
    %v1429 = vpack.c.b16 %v1369, %v1365
    %v1430 = vpack.c.b16 %v1370, %v1366
    %v1431 = vpack.c.b16 %v1371, %v1367
    %v1432 = vpack.c.b16 %v1376, %v1372
    %v1433 = vpack.c.b16 %v1377, %v1373
    %v1434 = vpack.c.b16 %v1378, %v1374
    %v1435 = vpack.c.b16 %v1379, %v1375
    %v1436 = vpack.c.b16 %v1384, %v1380
    %v1437 = vpack.c.b16 %v1385, %v1381
    %v1438 = vpack.c.b16 %v1386, %v1382
    %v1439 = vpack.c.b16 %v1387, %v1383
    %v1440 = vpack.c.b16 %v1392, %v1388
    %v1441 = vpack.c.b16 %v1393, %v1389
    %v1442 = vpack.c.b16 %v1394, %v1390
    %v1443 = vpack.c.b16 %v1395, %v1391
    %v1444 = vpack.c.b16 %v1400, %v1396
    %v1445 = vpack.c.b16 %v1401, %v1397
    %v1446 = vpack.c.b16 %v1402, %v1398
    %v1447 = vpack.c.b16 %v1403, %v1399
    %v1448 = vpack.c.b16 %v1408, %v1404
    %v1449 = vpack.c.b16 %v1409, %v1405
    %v1450 = vpack.c.b16 %v1410, %v1406
    %v1451 = vpack.c.b16 %v1411, %v1407
    %v1452 = vpack.c.b16 %v1416, %v1412
    %v1453 = vpack.c.b16 %v1417, %v1413
    %v1454 = vpack.c.b16 %v1418, %v1414
    %v1455 = vpack.c.b16 %v1419, %v1415
    %v1456 = vpack.c.b16 %v1424, %v1420
    %v1457 = vpack.c.b16 %v1425, %v1421
    %v1458 = vpack.c.b16 %v1426, %v1422
    %v1459 = vpack.c.b16 %v1427, %v1423
    %1492 = vmatpush.bf16.msra.mxu0 %v1456
    %1493 = vmatpush.bf16.msra.mxu0 %v1452
    %1494 = vmatpush.bf16.msra.mxu0 %v1448
    %1495 = vmatpush.bf16.msra.mxu0 %v1444
    %1496 = vmatpush.bf16.msra.mxu0 %v1440
    %1497 = vmatpush.bf16.msra.mxu0 %v1436
    %1498 = vmatpush.bf16.msra.mxu0 %v1432
    %1499 = vmatpush.bf16.msra.mxu0 %v1428
    %1500 = vmatmul.bf16.gmra.mxu0 %v1299
    %v1501 = vpop.f32.mrf.mxu0
    %v1502 = vadd.f32 0.0, %v1501
    %v1503 = vpop.f32.mrf.mxu0
    %1504 = vdwg.mxu0
    %1505 = vmatpush.bf16.msra.mxu0 %v1457
    %1506 = vmatpush.bf16.msra.mxu0 %v1453
    %1507 = vmatpush.bf16.msra.mxu0 %v1449
    %1508 = vmatpush.bf16.msra.mxu0 %v1445
    %1509 = vmatpush.bf16.msra.mxu0 %v1441
    %1510 = vmatpush.bf16.msra.mxu0 %v1437
    %1511 = vmatpush.bf16.msra.mxu0 %v1433
    %1512 = vmatpush.bf16.msra.mxu0 %v1429
    %1513 = vmatmul.bf16.gmra.mxu0 %v1299
    %v1514 = vpop.f32.mrf.mxu0
    %v1515 = vadd.f32 0.0, %v1514
    %v1516 = vpop.f32.mrf.mxu0
    %1517 = vdwg.mxu0
    %1518 = vmatpush.bf16.msra.mxu0 %v1458
    %1519 = vmatpush.bf16.msra.mxu0 %v1454
    %1520 = vmatpush.bf16.msra.mxu0 %v1450
    %1521 = vmatpush.bf16.msra.mxu0 %v1446
    %1522 = vmatpush.bf16.msra.mxu0 %v1442
    %1523 = vmatpush.bf16.msra.mxu0 %v1438
    %1524 = vmatpush.bf16.msra.mxu0 %v1434
    %1525 = vmatpush.bf16.msra.mxu0 %v1430
    %1526 = vmatmul.bf16.gmra.mxu0 %v1299
    %v1527 = vpop.f32.mrf.mxu0
    %v1528 = vadd.f32 0.0, %v1527
    %v1529 = vpop.f32.mrf.mxu0
    %1530 = vdwg.mxu0
    %1531 = vmatpush.bf16.msra.mxu0 %v1459
    %1532 = vmatpush.bf16.msra.mxu0 %v1455
    %1533 = vmatpush.bf16.msra.mxu0 %v1451
    %1534 = vmatpush.bf16.msra.mxu0 %v1447
    %1535 = vmatpush.bf16.msra.mxu0 %v1443
    %1536 = vmatpush.bf16.msra.mxu0 %v1439
    %1537 = vmatpush.bf16.msra.mxu0 %v1435
    %1538 = vmatpush.bf16.msra.mxu0 %v1431
    %1539 = vmatmul.bf16.gmra.mxu0 %v1299
    %v1540 = vpop.f32.mrf.mxu0
    %v1541 = vadd.f32 0.0, %v1540
    %v1542 = vpop.f32.mrf.mxu0
    %1543 = vdwg.mxu0
    %v1544 = vld [vmem:[%s13] sm:$0xff]
    %v1545 = vld [vmem:[%s13 + $0x8] sm:$0xff]
    %v1546 = vld [vmem:[%s13 + $0x10] sm:$0xff]
    %v1547 = vld [vmem:[%s13 + $0x18] sm:$0xff]
    %v1548 = vld [vmem:[%s13 + $0x20] sm:$0xff]
    %v1549 = vld [vmem:[%s13 + $0x28] sm:$0xff]
    %v1550 = vld [vmem:[%s13 + $0x30] sm:$0xff]
    %v1551 = vld [vmem:[%s13 + $0x38] sm:$0xff]
    %v1552 = vld [vmem:[%s13 + $0x40] sm:$0xff]
    %v1553 = vld [vmem:[%s13 + $0x48] sm:$0xff]
    %v1554 = vld [vmem:[%s13 + $0x50] sm:$0xff]
    %v1555 = vld [vmem:[%s13 + $0x58] sm:$0xff]
    %v1556 = vld [vmem:[%s13 + $0x60] sm:$0xff]
    %v1557 = vld [vmem:[%s13 + $0x68] sm:$0xff]
    %v1558 = vld [vmem:[%s13 + $0x70] sm:$0xff]
    %v1559 = vld [vmem:[%s13 + $0x78] sm:$0xff]
    %v1560 = vld [vmem:[%s13 + $0x80] sm:$0xff]
    %v1561 = vld [vmem:[%s13 + $0x88] sm:$0xff]
    %v1562 = vld [vmem:[%s13 + $0x90] sm:$0xff]
    %v1563 = vld [vmem:[%s13 + $0x98] sm:$0xff]
    %v1564 = vld [vmem:[%s13 + $0xa0] sm:$0xff]
    %v1565 = vld [vmem:[%s13 + $0xa8] sm:$0xff]
    %v1566 = vld [vmem:[%s13 + $0xb0] sm:$0xff]
    %v1567 = vld [vmem:[%s13 + $0xb8] sm:$0xff]
    %v1568 = vld [vmem:[%s13 + $0xc0] sm:$0xff]
    %v1569 = vld [vmem:[%s13 + $0xc8] sm:$0xff]
    %v1570 = vld [vmem:[%s13 + $0xd0] sm:$0xff]
    %v1571 = vld [vmem:[%s13 + $0xd8] sm:$0xff]
    %v1572 = vld [vmem:[%s13 + $0xe0] sm:$0xff]
    %v1573 = vld [vmem:[%s13 + $0xe8] sm:$0xff]
    %v1574 = vld [vmem:[%s13 + $0xf0] sm:$0xff]
    %v1575 = vld [vmem:[%s13 + $0xf8] sm:$0xff]
    %v1608 = vunpack.c.l.b16 %v1544
    %v1609 = vunpack.c.h.b16 %v1544
    %v1610 = vunpack.c.l.b16 %v1545
    %v1611 = vunpack.c.h.b16 %v1545
    %v1612 = vunpack.c.l.b16 %v1546
    %v1613 = vunpack.c.h.b16 %v1546
    %v1614 = vunpack.c.l.b16 %v1547
    %v1615 = vunpack.c.h.b16 %v1547
    %v1616 = vunpack.c.l.b16 %v1548
    %v1617 = vunpack.c.h.b16 %v1548
    %v1618 = vunpack.c.l.b16 %v1549
    %v1619 = vunpack.c.h.b16 %v1549
    %v1620 = vunpack.c.l.b16 %v1550
    %v1621 = vunpack.c.h.b16 %v1550
    %v1622 = vunpack.c.l.b16 %v1551
    %v1623 = vunpack.c.h.b16 %v1551
    %v1624 = vunpack.c.l.b16 %v1552
    %v1625 = vunpack.c.h.b16 %v1552
    %v1626 = vunpack.c.l.b16 %v1553
    %v1627 = vunpack.c.h.b16 %v1553
    %v1628 = vunpack.c.l.b16 %v1554
    %v1629 = vunpack.c.h.b16 %v1554
    %v1630 = vunpack.c.l.b16 %v1555
    %v1631 = vunpack.c.h.b16 %v1555
    %v1632 = vunpack.c.l.b16 %v1556
    %v1633 = vunpack.c.h.b16 %v1556
    %v1634 = vunpack.c.l.b16 %v1557
    %v1635 = vunpack.c.h.b16 %v1557
    %v1636 = vunpack.c.l.b16 %v1558
    %v1637 = vunpack.c.h.b16 %v1558
    %v1638 = vunpack.c.l.b16 %v1559
    %v1639 = vunpack.c.h.b16 %v1559
    %v1640 = vunpack.c.l.b16 %v1560
    %v1641 = vunpack.c.h.b16 %v1560
    %v1642 = vunpack.c.l.b16 %v1561
    %v1643 = vunpack.c.h.b16 %v1561
    %v1644 = vunpack.c.l.b16 %v1562
    %v1645 = vunpack.c.h.b16 %v1562
    %v1646 = vunpack.c.l.b16 %v1563
    %v1647 = vunpack.c.h.b16 %v1563
    %v1648 = vunpack.c.l.b16 %v1564
    %v1649 = vunpack.c.h.b16 %v1564
    %v1650 = vunpack.c.l.b16 %v1565
    %v1651 = vunpack.c.h.b16 %v1565
    %v1652 = vunpack.c.l.b16 %v1566
    %v1653 = vunpack.c.h.b16 %v1566
    %v1654 = vunpack.c.l.b16 %v1567
    %v1655 = vunpack.c.h.b16 %v1567
    %v1656 = vunpack.c.l.b16 %v1568
    %v1657 = vunpack.c.h.b16 %v1568
    %v1658 = vunpack.c.l.b16 %v1569
    %v1659 = vunpack.c.h.b16 %v1569
    %v1660 = vunpack.c.l.b16 %v1570
    %v1661 = vunpack.c.h.b16 %v1570
    %v1662 = vunpack.c.l.b16 %v1571
    %v1663 = vunpack.c.h.b16 %v1571
    %v1664 = vunpack.c.l.b16 %v1572
    %v1665 = vunpack.c.h.b16 %v1572
    %v1666 = vunpack.c.l.b16 %v1573
    %v1667 = vunpack.c.h.b16 %v1573
    %v1668 = vunpack.c.l.b16 %v1574
    %v1669 = vunpack.c.h.b16 %v1574
    %v1670 = vunpack.c.l.b16 %v1575
    %v1671 = vunpack.c.h.b16 %v1575
    %v1672 = vpack.c.b16 %v1612, %v1608
    %v1673 = vpack.c.b16 %v1613, %v1609
    %v1674 = vpack.c.b16 %v1614, %v1610
    %v1675 = vpack.c.b16 %v1615, %v1611
    %v1676 = vpack.c.b16 %v1620, %v1616
    %v1677 = vpack.c.b16 %v1621, %v1617
    %v1678 = vpack.c.b16 %v1622, %v1618
    %v1679 = vpack.c.b16 %v1623, %v1619
    %v1680 = vpack.c.b16 %v1628, %v1624
    %v1681 = vpack.c.b16 %v1629, %v1625
    %v1682 = vpack.c.b16 %v1630, %v1626
    %v1683 = vpack.c.b16 %v1631, %v1627
    %v1684 = vpack.c.b16 %v1636, %v1632
    %v1685 = vpack.c.b16 %v1637, %v1633
    %v1686 = vpack.c.b16 %v1638, %v1634
    %v1687 = vpack.c.b16 %v1639, %v1635
    %v1688 = vpack.c.b16 %v1644, %v1640
    %v1689 = vpack.c.b16 %v1645, %v1641
    %v1690 = vpack.c.b16 %v1646, %v1642
    %v1691 = vpack.c.b16 %v1647, %v1643
    %v1692 = vpack.c.b16 %v1652, %v1648
    %v1693 = vpack.c.b16 %v1653, %v1649
    %v1694 = vpack.c.b16 %v1654, %v1650
    %v1695 = vpack.c.b16 %v1655, %v1651
    %v1696 = vpack.c.b16 %v1660, %v1656
    %v1697 = vpack.c.b16 %v1661, %v1657
    %v1698 = vpack.c.b16 %v1662, %v1658
    %v1699 = vpack.c.b16 %v1663, %v1659
    %v1700 = vpack.c.b16 %v1668, %v1664
    %v1701 = vpack.c.b16 %v1669, %v1665
    %v1702 = vpack.c.b16 %v1670, %v1666
    %v1703 = vpack.c.b16 %v1671, %v1667
    %1736 = vmatpush.bf16.msra.mxu0 %v1700
    %1737 = vmatpush.bf16.msra.mxu0 %v1696
    %1738 = vmatpush.bf16.msra.mxu0 %v1692
    %1739 = vmatpush.bf16.msra.mxu0 %v1688
    %1740 = vmatpush.bf16.msra.mxu0 %v1684
    %1741 = vmatpush.bf16.msra.mxu0 %v1680
    %1742 = vmatpush.bf16.msra.mxu0 %v1676
    %1743 = vmatpush.bf16.msra.mxu0 %v1672
    %1744 = vmatmul.bf16.gmra.mxu0 %v1299
    %v1745 = vpop.f32.mrf.mxu0
    %v1746 = vadd.f32 0.0, %v1745
    %v1747 = vpop.f32.mrf.mxu0
    %1748 = vdwg.mxu0
    %1749 = vmatpush.bf16.msra.mxu0 %v1701
    %1750 = vmatpush.bf16.msra.mxu0 %v1697
    %1751 = vmatpush.bf16.msra.mxu0 %v1693
    %1752 = vmatpush.bf16.msra.mxu0 %v1689
    %1753 = vmatpush.bf16.msra.mxu0 %v1685
    %1754 = vmatpush.bf16.msra.mxu0 %v1681
    %1755 = vmatpush.bf16.msra.mxu0 %v1677
    %1756 = vmatpush.bf16.msra.mxu0 %v1673
    %1757 = vmatmul.bf16.gmra.mxu0 %v1299
    %v1758 = vpop.f32.mrf.mxu0
    %v1759 = vadd.f32 0.0, %v1758
    %v1760 = vpop.f32.mrf.mxu0
    %1761 = vdwg.mxu0
    %1762 = vmatpush.bf16.msra.mxu0 %v1702
    %1763 = vmatpush.bf16.msra.mxu0 %v1698
    %1764 = vmatpush.bf16.msra.mxu0 %v1694
    %1765 = vmatpush.bf16.msra.mxu0 %v1690
    %1766 = vmatpush.bf16.msra.mxu0 %v1686
    %1767 = vmatpush.bf16.msra.mxu0 %v1682
    %1768 = vmatpush.bf16.msra.mxu0 %v1678
    %1769 = vmatpush.bf16.msra.mxu0 %v1674
    %1770 = vmatmul.bf16.gmra.mxu0 %v1299
    %v1771 = vpop.f32.mrf.mxu0
    %v1772 = vadd.f32 0.0, %v1771
    %v1773 = vpop.f32.mrf.mxu0
    %1774 = vdwg.mxu0
    %1775 = vmatpush.bf16.msra.mxu0 %v1703
    %1776 = vmatpush.bf16.msra.mxu0 %v1699
    %1777 = vmatpush.bf16.msra.mxu0 %v1695
    %1778 = vmatpush.bf16.msra.mxu0 %v1691
    %1779 = vmatpush.bf16.msra.mxu0 %v1687
    %1780 = vmatpush.bf16.msra.mxu0 %v1683
    %1781 = vmatpush.bf16.msra.mxu0 %v1679
    %1782 = vmatpush.bf16.msra.mxu0 %v1675
    %1783 = vmatmul.bf16.gmra.mxu0 %v1299
    %v1784 = vpop.f32.mrf.mxu0
    %v1785 = vadd.f32 0.0, %v1784
    %v1786 = vpop.f32.mrf.mxu0
    %1787 = vdwg.mxu0
    %v1788 = vxor.u32 %v1502, 2147483648
    %v1789 = vxor.u32 %v1515, 2147483648
    %v1790 = vxor.u32 %v1528, 2147483648
    %v1791 = vxor.u32 %v1541, 2147483648
    %v1792 = vmul.f32 %v1788, 1.442695
    %v1793 = vpow.pop %v1792
    %v1794 = vmul.f32 %v1789, 1.442695
    %v1795 = vpow.pop %v1794
    %v1796 = vmul.f32 %v1790, 1.442695
    %v1797 = vpow.pop %v1796
    %v1798 = vmul.f32 %v1791, 1.442695
    %v1799 = vpow.pop %v1798
    %v1800 = vadd.f32 %v1793, 1.0
    %v1801 = vadd.f32 %v1795, 1.0
    %v1802 = vadd.f32 %v1797, 1.0
    %v1803 = vadd.f32 %v1799, 1.0
    %v1804 = vrcp.pop %v1800
    %v1805 = vmul.f32 %v1800, %v1804
    %v1806 = vsub.f32 1.0, %v1805
    %v1807 = vmul.f32 %v1804, %v1806
    %v1808 = vadd.f32 %v1804, %v1807
    %vm1809 = vweird.f32 %v1800
    %vm1810 = vweird.f32 %v1804
    %vm1811 = vmor %vm1809, %vm1810
    %v1812 = vsel %vm1811, %v1804, %v1808
    %v1813 = vand.u32 2147483647, %v1800
    %vm1814 = vcmp.eq.f32.partialorder %v1813, 8.507059e+37
    %v1815 = vand.u32 %v1800, 2147483648
    %v1816 = vor.u32 1.1754944e-38, %v1815
    %v1817 = vsel %vm1814, %v1816, %v1812
    %v1818 = vmul.f32 1.0, %v1817
    %v1819 = vrcp.pop %v1801
    %v1820 = vmul.f32 %v1801, %v1819
    %v1821 = vsub.f32 1.0, %v1820
    %v1822 = vmul.f32 %v1819, %v1821
    %v1823 = vadd.f32 %v1819, %v1822
    %vm1824 = vweird.f32 %v1801
    %vm1825 = vweird.f32 %v1819
    %vm1826 = vmor %vm1824, %vm1825
    %v1827 = vsel %vm1826, %v1819, %v1823
    %v1828 = vand.u32 2147483647, %v1801
    %vm1829 = vcmp.eq.f32.partialorder %v1828, 8.507059e+37
    %v1830 = vand.u32 %v1801, 2147483648
    %v1831 = vor.u32 1.1754944e-38, %v1830
    %v1832 = vsel %vm1829, %v1831, %v1827
    %v1833 = vmul.f32 1.0, %v1832
    %v1834 = vrcp.pop %v1802
    %v1835 = vmul.f32 %v1802, %v1834
    %v1836 = vsub.f32 1.0, %v1835
    %v1837 = vmul.f32 %v1834, %v1836
    %v1838 = vadd.f32 %v1834, %v1837
    %vm1839 = vweird.f32 %v1802
    %vm1840 = vweird.f32 %v1834
    %vm1841 = vmor %vm1839, %vm1840
    %v1842 = vsel %vm1841, %v1834, %v1838
    %v1843 = vand.u32 2147483647, %v1802
    %vm1844 = vcmp.eq.f32.partialorder %v1843, 8.507059e+37
    %v1845 = vand.u32 %v1802, 2147483648
    %v1846 = vor.u32 1.1754944e-38, %v1845
    %v1847 = vsel %vm1844, %v1846, %v1842
    %v1848 = vmul.f32 1.0, %v1847
    %v1849 = vrcp.pop %v1803
    %v1850 = vmul.f32 %v1803, %v1849
    %v1851 = vsub.f32 1.0, %v1850
    %v1852 = vmul.f32 %v1849, %v1851
    %v1853 = vadd.f32 %v1849, %v1852
    %vm1854 = vweird.f32 %v1803
    %vm1855 = vweird.f32 %v1849
    %vm1856 = vmor %vm1854, %vm1855
    %v1857 = vsel %vm1856, %v1849, %v1853
    %v1858 = vand.u32 2147483647, %v1803
    %vm1859 = vcmp.eq.f32.partialorder %v1858, 8.507059e+37
    %v1860 = vand.u32 %v1803, 2147483648
    %v1861 = vor.u32 1.1754944e-38, %v1860
    %v1862 = vsel %vm1859, %v1861, %v1857
    %v1863 = vmul.f32 1.0, %v1862
    %v1864 = vmul.f32 %v1502, %v1818
    %v1865 = vmul.f32 %v1515, %v1833
    %v1866 = vmul.f32 %v1528, %v1848
    %v1867 = vmul.f32 %v1541, %v1863
    %v1868 = vmul.f32 %v1864, %v1746
    %v1869 = vmul.f32 %v1865, %v1759
    %v1870 = vmul.f32 %v1866, %v1772
    %v1871 = vmul.f32 %v1867, %v1785
    %v1872 = vpack.c.bf16 %v1868, %v1868
    %v1873 = vpack.c.bf16 %v1869, %v1869
    %v1874 = vpack.c.bf16 %v1870, %v1870
    %v1875 = vpack.c.bf16 %v1871, %v1871
    %v1876 = vld [vmem:[%s14] sm:$0xf]
    %v1877 = vld [vmem:[%s14 + $0x4] sm:$0xf]
    %v1878 = vld [vmem:[%s14 + $0x8] sm:$0xf]
    %v1879 = vld [vmem:[%s14 + $0xc] sm:$0xf]
    %v1880 = vld [vmem:[%s14 + $0x10] sm:$0xf]
    %v1881 = vld [vmem:[%s14 + $0x14] sm:$0xf]
    %v1882 = vld [vmem:[%s14 + $0x18] sm:$0xf]
    %v1883 = vld [vmem:[%s14 + $0x1c] sm:$0xf]
    %v1884 = vld [vmem:[%s14 + $0x20] sm:$0xf]
    %v1885 = vld [vmem:[%s14 + $0x24] sm:$0xf]
    %v1886 = vld [vmem:[%s14 + $0x28] sm:$0xf]
    %v1887 = vld [vmem:[%s14 + $0x2c] sm:$0xf]
    %v1888 = vld [vmem:[%s14 + $0x30] sm:$0xf]
    %v1889 = vld [vmem:[%s14 + $0x34] sm:$0xf]
    %v1890 = vld [vmem:[%s14 + $0x38] sm:$0xf]
    %v1891 = vld [vmem:[%s14 + $0x3c] sm:$0xf]
    %v1892 = vld [vmem:[%s14 + $0x40] sm:$0xf]
    %v1893 = vld [vmem:[%s14 + $0x44] sm:$0xf]
    %v1894 = vld [vmem:[%s14 + $0x48] sm:$0xf]
    %v1895 = vld [vmem:[%s14 + $0x4c] sm:$0xf]
    %v1896 = vld [vmem:[%s14 + $0x50] sm:$0xf]
    %v1897 = vld [vmem:[%s14 + $0x54] sm:$0xf]
    %v1898 = vld [vmem:[%s14 + $0x58] sm:$0xf]
    %v1899 = vld [vmem:[%s14 + $0x5c] sm:$0xf]
    %v1900 = vld [vmem:[%s14 + $0x60] sm:$0xf]
    %v1901 = vld [vmem:[%s14 + $0x64] sm:$0xf]
    %v1902 = vld [vmem:[%s14 + $0x68] sm:$0xf]
    %v1903 = vld [vmem:[%s14 + $0x6c] sm:$0xf]
    %v1904 = vld [vmem:[%s14 + $0x70] sm:$0xf]
    %v1905 = vld [vmem:[%s14 + $0x74] sm:$0xf]
    %v1906 = vld [vmem:[%s14 + $0x78] sm:$0xf]
    %v1907 = vld [vmem:[%s14 + $0x7c] sm:$0xf]
    %v1908 = vld [vmem:[%s14 + $0x80] sm:$0xf]
    %v1909 = vld [vmem:[%s14 + $0x84] sm:$0xf]
    %v1910 = vld [vmem:[%s14 + $0x88] sm:$0xf]
    %v1911 = vld [vmem:[%s14 + $0x8c] sm:$0xf]
    %v1912 = vld [vmem:[%s14 + $0x90] sm:$0xf]
    %v1913 = vld [vmem:[%s14 + $0x94] sm:$0xf]
    %v1914 = vld [vmem:[%s14 + $0x98] sm:$0xf]
    %v1915 = vld [vmem:[%s14 + $0x9c] sm:$0xf]
    %v1916 = vld [vmem:[%s14 + $0xa0] sm:$0xf]
    %v1917 = vld [vmem:[%s14 + $0xa4] sm:$0xf]
    %v1918 = vld [vmem:[%s14 + $0xa8] sm:$0xf]
    %v1919 = vld [vmem:[%s14 + $0xac] sm:$0xf]
    %v1920 = vld [vmem:[%s14 + $0xb0] sm:$0xf]
    %v1921 = vld [vmem:[%s14 + $0xb4] sm:$0xf]
    %v1922 = vld [vmem:[%s14 + $0xb8] sm:$0xf]
    %v1923 = vld [vmem:[%s14 + $0xbc] sm:$0xf]
    %v1924 = vld [vmem:[%s14 + $0xc0] sm:$0xf]
    %v1925 = vld [vmem:[%s14 + $0xc4] sm:$0xf]
    %v1926 = vld [vmem:[%s14 + $0xc8] sm:$0xf]
    %v1927 = vld [vmem:[%s14 + $0xcc] sm:$0xf]
    %v1928 = vld [vmem:[%s14 + $0xd0] sm:$0xf]
    %v1929 = vld [vmem:[%s14 + $0xd4] sm:$0xf]
    %v1930 = vld [vmem:[%s14 + $0xd8] sm:$0xf]
    %v1931 = vld [vmem:[%s14 + $0xdc] sm:$0xf]
    %v1932 = vld [vmem:[%s14 + $0xe0] sm:$0xf]
    %v1933 = vld [vmem:[%s14 + $0xe4] sm:$0xf]
    %v1934 = vld [vmem:[%s14 + $0xe8] sm:$0x3]
    %v1994 = vunpack.c.l.b16 %v1876
    %v1995 = vunpack.c.l.b16 %v1877
    %v1996 = vunpack.c.l.b16 %v1878
    %v1997 = vunpack.c.l.b16 %v1879
    %v1998 = vunpack.c.l.b16 %v1880
    %v1999 = vunpack.c.l.b16 %v1881
    %v2000 = vunpack.c.l.b16 %v1882
    %v2001 = vunpack.c.l.b16 %v1883
    %v2002 = vunpack.c.l.b16 %v1884
    %v2003 = vunpack.c.l.b16 %v1885
    %v2004 = vunpack.c.l.b16 %v1886
    %v2005 = vunpack.c.l.b16 %v1887
    %v2006 = vunpack.c.l.b16 %v1888
    %v2007 = vunpack.c.l.b16 %v1889
    %v2008 = vunpack.c.l.b16 %v1890
    %v2009 = vunpack.c.l.b16 %v1891
    %v2010 = vunpack.c.l.b16 %v1892
    %v2011 = vunpack.c.l.b16 %v1893
    %v2012 = vunpack.c.l.b16 %v1894
    %v2013 = vunpack.c.l.b16 %v1895
    %v2014 = vunpack.c.l.b16 %v1896
    %v2015 = vunpack.c.l.b16 %v1897
    %v2016 = vunpack.c.l.b16 %v1898
    %v2017 = vunpack.c.l.b16 %v1899
    %v2018 = vunpack.c.l.b16 %v1900
    %v2019 = vunpack.c.l.b16 %v1901
    %v2020 = vunpack.c.l.b16 %v1902
    %v2021 = vunpack.c.l.b16 %v1903
    %v2022 = vunpack.c.l.b16 %v1904
    %v2023 = vunpack.c.l.b16 %v1905
    %v2024 = vunpack.c.l.b16 %v1906
    %v2025 = vunpack.c.l.b16 %v1907
    %v2026 = vunpack.c.l.b16 %v1908
    %v2027 = vunpack.c.l.b16 %v1909
    %v2028 = vunpack.c.l.b16 %v1910
    %v2029 = vunpack.c.l.b16 %v1911
    %v2030 = vunpack.c.l.b16 %v1912
    %v2031 = vunpack.c.l.b16 %v1913
    %v2032 = vunpack.c.l.b16 %v1914
    %v2033 = vunpack.c.l.b16 %v1915
    %v2034 = vunpack.c.l.b16 %v1916
    %v2035 = vunpack.c.l.b16 %v1917
    %v2036 = vunpack.c.l.b16 %v1918
    %v2037 = vunpack.c.l.b16 %v1919
    %v2038 = vunpack.c.l.b16 %v1920
    %v2039 = vunpack.c.l.b16 %v1921
    %v2040 = vunpack.c.l.b16 %v1922
    %v2041 = vunpack.c.l.b16 %v1923
    %v2042 = vunpack.c.l.b16 %v1924
    %v2043 = vunpack.c.l.b16 %v1925
    %v2044 = vunpack.c.l.b16 %v1926
    %v2045 = vunpack.c.l.b16 %v1927
    %v2046 = vunpack.c.l.b16 %v1928
    %v2047 = vunpack.c.l.b16 %v1929
    %v2048 = vunpack.c.l.b16 %v1930
    %v2049 = vunpack.c.l.b16 %v1931
    %v2050 = vunpack.c.l.b16 %v1932
    %v2051 = vunpack.c.l.b16 %v1933
    %v2052 = vunpack.c.l.b16 %v1934
    %v2053 = vpack.c.b16 %v1995, %v1994
    %v2054 = vpack.c.b16 %v1997, %v1996
    %v2055 = vpack.c.b16 %v1999, %v1998
    %v2056 = vpack.c.b16 %v2001, %v2000
    %v2057 = vpack.c.b16 %v2003, %v2002
    %v2058 = vpack.c.b16 %v2005, %v2004
    %v2059 = vpack.c.b16 %v2007, %v2006
    %v2060 = vpack.c.b16 %v2009, %v2008
    %v2061 = vpack.c.b16 %v2011, %v2010
    %v2062 = vpack.c.b16 %v2013, %v2012
    %v2063 = vpack.c.b16 %v2015, %v2014
    %v2064 = vpack.c.b16 %v2017, %v2016
    %v2065 = vpack.c.b16 %v2019, %v2018
    %v2066 = vpack.c.b16 %v2021, %v2020
    %v2067 = vpack.c.b16 %v2023, %v2022
    %v2068 = vpack.c.b16 %v2025, %v2024
    %v2069 = vpack.c.b16 %v2027, %v2026
    %v2070 = vpack.c.b16 %v2029, %v2028
    %v2071 = vpack.c.b16 %v2031, %v2030
    %v2072 = vpack.c.b16 %v2033, %v2032
    %v2073 = vpack.c.b16 %v2035, %v2034
    %v2074 = vpack.c.b16 %v2037, %v2036
    %v2075 = vpack.c.b16 %v2039, %v2038
    %v2076 = vpack.c.b16 %v2041, %v2040
    %v2077 = vpack.c.b16 %v2043, %v2042
    %v2078 = vpack.c.b16 %v2045, %v2044
    %v2079 = vpack.c.b16 %v2047, %v2046
    %v2080 = vpack.c.b16 %v2049, %v2048
    %v2081 = vpack.c.b16 %v2051, %v2050
    %v2082 = vpack.c.b16 %v2052, %v2052
    %vm2112 = vcmask 687104
    %v2114 = vsel %vm2112, %v1875, 0
    %v2117 = vsel %vm116, %v2082, 0
    %2119 = vmatpush.bf16.msra.mxu0 %v2060
    %2120 = vmatpush.bf16.msra.mxu0 %v2059
    %2121 = vmatpush.bf16.msra.mxu0 %v2058
    %2122 = vmatpush.bf16.msra.mxu0 %v2057
    %2123 = vmatpush.bf16.msra.mxu0 %v2056
    %2124 = vmatpush.bf16.msra.mxu0 %v2055
    %2125 = vmatpush.bf16.msra.mxu0 %v2054
    %2126 = vmatpush.bf16.msra.mxu0 %v2053
    %2127 = vmatmul.bf16.gmra.mxu0 %v1872
    %v2128 = vpop.f32.mrf.mxu0
    %v2129 = vadd.f32 0.0, %v2128
    %v2130 = vpop.f32.mrf.mxu0
    %2131 = vdwg.mxu0
    %2132 = vmatpush.bf16.msra.mxu0 %v2068
    %2133 = vmatpush.bf16.msra.mxu0 %v2067
    %2134 = vmatpush.bf16.msra.mxu0 %v2066
    %2135 = vmatpush.bf16.msra.mxu0 %v2065
    %2136 = vmatpush.bf16.msra.mxu0 %v2064
    %2137 = vmatpush.bf16.msra.mxu0 %v2063
    %2138 = vmatpush.bf16.msra.mxu0 %v2062
    %2139 = vmatpush.bf16.msra.mxu0 %v2061
    %2140 = vmatmul.bf16.gmra.mxu0 %v1873
    %v2141 = vpop.f32.mrf.mxu0
    %v2142 = vadd.f32 %v2129, %v2141
    %v2143 = vpop.f32.mrf.mxu0
    %2144 = vdwg.mxu0
    %2145 = vmatpush.bf16.msra.mxu0 %v2076
    %2146 = vmatpush.bf16.msra.mxu0 %v2075
    %2147 = vmatpush.bf16.msra.mxu0 %v2074
    %2148 = vmatpush.bf16.msra.mxu0 %v2073
    %2149 = vmatpush.bf16.msra.mxu0 %v2072
    %2150 = vmatpush.bf16.msra.mxu0 %v2071
    %2151 = vmatpush.bf16.msra.mxu0 %v2070
    %2152 = vmatpush.bf16.msra.mxu0 %v2069
    %2153 = vmatmul.bf16.gmra.mxu0 %v1874
    %v2154 = vpop.f32.mrf.mxu0
    %v2155 = vadd.f32 %v2142, %v2154
    %v2156 = vpop.f32.mrf.mxu0
    %2157 = vdwg.mxu0
    %2158 = vmatpush.bf16.msra.mxu0 0
    %2159 = vmatpush.bf16.msra.mxu0 0
    %2160 = vmatpush.bf16.msra.mxu0 %v2117
    %2161 = vmatpush.bf16.msra.mxu0 %v2081
    %2162 = vmatpush.bf16.msra.mxu0 %v2080
    %2163 = vmatpush.bf16.msra.mxu0 %v2079
    %2164 = vmatpush.bf16.msra.mxu0 %v2078
    %2165 = vmatpush.bf16.msra.mxu0 %v2077
    %2166 = vmatmul.bf16.gmra.mxu0 %v2114
    %v2167 = vpop.f32.mrf.mxu0
    %v2168 = vadd.f32 %v2155, %v2167
    %v2169 = vpop.f32.mrf.mxu0
    %2170 = vdwg.mxu0
    %v2171 = vadd.f32 %v1276, %v2168
    %2172 = vst [vmem:[#allocation8] sm:$0x3] %v2171
    %s2173 = smul.u32 2, 1
    %s2174 = smul.u32 %s2173, 1
    %s2175 = sshll.u32 %s2174, 4
    %2176 = dma.done %s571, %s2175
    %s2177 = sshll.u32 %s2174, 4
    %2178 = dma.done %s611, %s2177
    // Predicated region
    $region168: #{transformer_forward.3} parent=1 // pred_check
      _
    $region169: #{transformer_forward.3} parent=1 // pred_check_branch
      %2180 = sbr.rel (0) target = $region171
    $region170: #{transformer_forward.3} parent=1 // pred_region
      %2182 = vsyncadd [#allocation9], 0
      %s2184 = sshll.u32 [#allocation8], 4
      %s2185 = int_to_ptr.vmem [resolvable:$true] %s2184
      %s2186 = sshll.u32 %s19, 4
      %s2187 = int_to_ptr.hbm [resolvable:$true] %s2186
      %2189 = dma.vmem_to_hbm [thread:$0]  %s2185, 32, %s2187, [#allocation9]
    $region171: #{transformer_forward.3} parent=1 // pred_fallthru
      _
    // Predicated region
    $region172: #{transformer_forward.3} parent=1 // pred_check
      _
    $region173: #{transformer_forward.3} parent=1 // pred_check_branch
      %2191 = sbr.rel (0) target = $region175
    $region174: #{transformer_forward.3} parent=1 // pred_region
      %2193 = dma.done [#allocation9], 32
    $region175: #{transformer_forward.3} parent=1 // pred_fallthru
      _
    %2194 = vsyncpa [#allocation9], 1
  %2195 = vsyncmov [#allocation6]
  %s2196 = vpop.sfrf %2195
  %p2197 = scmp.eq.s32.totalorder %s2196, 0
  %p2198 = pneg %p2197
  %2200 = shalt.err (%p2198)
  %s2201 = scalar_lea.sflag [#allocation6], 1
  %2202 = vsyncmov %s2201
  %s2203 = vpop.sfrf %2202
  %p2204 = scmp.eq.s32.totalorder %s2203, 0
  %p2205 = pneg %p2204
  %2207 = shalt.err (%p2205)
  %s2208 = scalar_lea.sflag [#allocation6], 2
  %2209 = vsyncmov %s2208
  %s2210 = vpop.sfrf %2209
  %p2211 = scmp.eq.s32.totalorder %s2210, 0
  %p2212 = pneg %p2211
  %2214 = shalt.err (%p2212)
  %s2215 = scalar_lea.sflag [#allocation6], 3
  %2216 = vsyncmov %s2215
  %s2217 = vpop.sfrf %2216
  %p2218 = scmp.eq.s32.totalorder %s2217, 0
  %p2219 = pneg %p2218
  %2221 = shalt.err (%p2219)

// kernel: transformer_forward.2
$region0: #{transformer_forward.2}
  #allocation0 [shape = 'u32[]', space=smem, size = 0x4, offset = 0x4, fixed_abs, tag = 'smem constant byte address 0x4 - core index']
  #allocation1 [shape = 'u32[72,128]{1,0:T(1,128)}', space=vmem, size = 0x9000, scoped, tag = 'internal scratch']
  #allocation2 [shape = 'f32[2,16,128]{2,1,0:T(8,128)}', space=vmem, size = 0x4000, scoped, tag = 'scratch operand']
  #allocation3 [shape = 'f32[2,16,128]{2,1,0:T(8,128)}', space=vmem, size = 0x4000, scoped, tag = 'scratch operand']
  #allocation4 [shape = 'f32[2,1,128]{2,1,0:T(1,128)}', space=vmem, size = 0x400, scoped, tag = 'scratch operand']
  #allocation5 [shape = 'f32[2,1,128]{2,1,0:T(1,128)}', space=vmem, size = 0x400, scoped, tag = 'scratch operand']
  #allocation6 [shape = 's32[4]{0}', space=sflag, size = 0x10, scoped, tag = 'scratch operand']
  #allocation7 [shape = 's32[1]{0:T(128)S(6)}', space=smem, size = 0x200, scoped, tag = 'scoped memory for transformer_forward.2']
  #allocation8 [shape = 's32[]', space=sflag, size = 0x4, offset = 0, fixed_abs, tag = 'sflag constant byte address 0x0 - dummy sync flag']
  #allocation9 [shape = 's32[]', space=sflag, size = 0x4, offset = 0, fixed_abs, tag = 'sflag constant byte address 0x0 - dummy sync flag']
  #allocation10 [shape = 's32[]', space=sflag, size = 0x4, offset = 0, fixed_abs, tag = 'sflag constant byte address 0x0 - dummy sync flag']
  #allocation11 [shape = 's32[]', space=sflag, size = 0x4, offset = 0, fixed_abs, tag = 'sflag constant byte address 0x0 - dummy sync flag']
  %s0 = inlined_call_operand.<no memory space> [shape: s32[1], index: 0, kind: input, shape index: {}]
  %s1 = inlined_call_operand.vmem [shape: f32[2,128], index: 1, kind: input, shape index: {}]
  %s2 = inlined_call_operand.vmem [shape: f32[2,16,128], index: 2, kind: input, shape index: {}, may-alias: {2,20}]
  %s3 = inlined_call_operand.vmem [shape: f32[2,16,128], index: 3, kind: input, shape index: {}, may-alias: {3,21}]
  %s4 = inlined_call_operand.vmem [shape: bf16[128,128], index: 4, kind: input, shape index: {}]
  %s5 = inlined_call_operand.vmem [shape: f32[1,128], index: 5, kind: input, shape index: {}]
  %s6 = inlined_call_operand.vmem [shape: bf16[128,128], index: 6, kind: input, shape index: {}]
  %s7 = inlined_call_operand.vmem [shape: f32[1,128], index: 7, kind: input, shape index: {}]
  %s8 = inlined_call_operand.vmem [shape: bf16[128,128], index: 8, kind: input, shape index: {}]
  %s9 = inlined_call_operand.vmem [shape: f32[1,128], index: 9, kind: input, shape index: {}]
  %s10 = inlined_call_operand.vmem [shape: bf16[128,128], index: 10, kind: input, shape index: {}]
  %s11 = inlined_call_operand.vmem [shape: f32[1,128], index: 11, kind: input, shape index: {}]
  %s12 = inlined_call_operand.vmem [shape: bf16[128,468], index: 12, kind: input, shape index: {}]
  %s13 = inlined_call_operand.vmem [shape: bf16[128,468], index: 13, kind: input, shape index: {}]
  %s14 = inlined_call_operand.vmem [shape: bf16[468,128], index: 14, kind: input, shape index: {}]
  %s15 = inlined_call_operand.vmem [shape: f32[1,128], index: 15, kind: input, shape index: {}]
  %s16 = inlined_call_operand.vmem [shape: f32[1,128], index: 16, kind: input, shape index: {}]
  %s17 = inlined_call_operand.vmem [shape: f32[1,128], index: 17, kind: input, shape index: {}]
  %s18 = inlined_call_operand.vmem [shape: f32[1,128], index: 18, kind: input, shape index: {}]
  %s19 = inlined_call_operand.vmem [shape: f32[2,128], index: 19, kind: output, shape index: {0}]
  %s20 = inlined_call_operand.vmem [shape: f32[2,16,128], index: 20, kind: output, shape index: {1}, may-alias: {2,20}]
  %s21 = inlined_call_operand.vmem [shape: f32[2,16,128], index: 21, kind: output, shape index: {2}, may-alias: {3,21}]
  %22 = xla_tuple %s19, %s20, %s21
  %s23 = sld [smem:[#allocation0]]
  $region176: #{transformer_forward.2} parent=0
    _
  %s25 = ssub.s32 1, %s23
  %s26 = scalar_select 0, %s25, %s23
  %27 = sst [smem:[#allocation7]] %s0
  // Predicated region
  $region2: #{transformer_forward.2} parent=0 // pred_check
    _
  $region3: #{transformer_forward.2} parent=0 // pred_check_branch
    %29 = sbr.rel (0) target = $region5
  $region4: #{transformer_forward.2} parent=0 // pred_region
    _
  $region5: #{transformer_forward.2} parent=0 // pred_fallthru
    _
  // Predicated region
  $region6: #{transformer_forward.2} parent=0 // pred_check
    _
  $region7: #{transformer_forward.2} parent=0 // pred_check_branch
    %31 = sbr.rel (0) target = $region9
  $region8: #{transformer_forward.2} parent=0 // pred_region
    _
  $region9: #{transformer_forward.2} parent=0 // pred_fallthru
    _
  // Predicated region
  $region10: #{transformer_forward.2} parent=0 // pred_check
    _
  $region11: #{transformer_forward.2} parent=0 // pred_check_branch
    %33 = sbr.rel (0) target = $region13
  $region12: #{transformer_forward.2} parent=0 // pred_region
    _
  $region13: #{transformer_forward.2} parent=0 // pred_fallthru
    _
  // Predicated region
  $region14: #{transformer_forward.2} parent=0 // pred_check
    _
  $region15: #{transformer_forward.2} parent=0 // pred_check_branch
    %35 = sbr.rel (0) target = $region17
  $region16: #{transformer_forward.2} parent=0 // pred_region
    _
  $region17: #{transformer_forward.2} parent=0 // pred_fallthru
    _
  // Predicated region
  $region18: #{transformer_forward.2} parent=0 // pred_check
    _
  $region19: #{transformer_forward.2} parent=0 // pred_check_branch
    %37 = sbr.rel (0) target = $region21
  $region20: #{transformer_forward.2} parent=0 // pred_region
    _
  $region21: #{transformer_forward.2} parent=0 // pred_fallthru
    _
  // Predicated region
  $region22: #{transformer_forward.2} parent=0 // pred_check
    _
  $region23: #{transformer_forward.2} parent=0 // pred_check_branch
    %39 = sbr.rel (0) target = $region25
  $region24: #{transformer_forward.2} parent=0 // pred_region
    _
  $region25: #{transformer_forward.2} parent=0 // pred_fallthru
    _
  // Predicated region
  $region26: #{transformer_forward.2} parent=0 // pred_check
    _
  $region27: #{transformer_forward.2} parent=0 // pred_check_branch
    %41 = sbr.rel (0) target = $region29
  $region28: #{transformer_forward.2} parent=0 // pred_region
    _
  $region29: #{transformer_forward.2} parent=0 // pred_fallthru
    _
  // Predicated region
  $region30: #{transformer_forward.2} parent=0 // pred_check
    _
  $region31: #{transformer_forward.2} parent=0 // pred_check_branch
    %43 = sbr.rel (0) target = $region33
  $region32: #{transformer_forward.2} parent=0 // pred_region
    _
  $region33: #{transformer_forward.2} parent=0 // pred_fallthru
    _
  // Predicated region
  $region34: #{transformer_forward.2} parent=0 // pred_check
    _
  $region35: #{transformer_forward.2} parent=0 // pred_check_branch
    %45 = sbr.rel (0) target = $region37
  $region36: #{transformer_forward.2} parent=0 // pred_region
    _
  $region37: #{transformer_forward.2} parent=0 // pred_fallthru
    _
  // Predicated region
  $region38: #{transformer_forward.2} parent=0 // pred_check
    _
  $region39: #{transformer_forward.2} parent=0 // pred_check_branch
    %47 = sbr.rel (0) target = $region41
  $region40: #{transformer_forward.2} parent=0 // pred_region
    _
  $region41: #{transformer_forward.2} parent=0 // pred_fallthru
    _
  // Predicated region
  $region42: #{transformer_forward.2} parent=0 // pred_check
    _
  $region43: #{transformer_forward.2} parent=0 // pred_check_branch
    %49 = sbr.rel (0) target = $region45
  $region44: #{transformer_forward.2} parent=0 // pred_region
    _
  $region45: #{transformer_forward.2} parent=0 // pred_fallthru
    _
  // Predicated region
  $region46: #{transformer_forward.2} parent=0 // pred_check
    _
  $region47: #{transformer_forward.2} parent=0 // pred_check_branch
    %51 = sbr.rel (0) target = $region49
  $region48: #{transformer_forward.2} parent=0 // pred_region
    _
  $region49: #{transformer_forward.2} parent=0 // pred_fallthru
    _
  // Predicated region
  $region50: #{transformer_forward.2} parent=0 // pred_check
    _
  $region51: #{transformer_forward.2} parent=0 // pred_check_branch
    %53 = sbr.rel (0) target = $region53
  $region52: #{transformer_forward.2} parent=0 // pred_region
    _
  $region53: #{transformer_forward.2} parent=0 // pred_fallthru
    _
  // Predicated region
  $region54: #{transformer_forward.2} parent=0 // pred_check
    _
  $region55: #{transformer_forward.2} parent=0 // pred_check_branch
    %55 = sbr.rel (0) target = $region57
  $region56: #{transformer_forward.2} parent=0 // pred_region
    _
  $region57: #{transformer_forward.2} parent=0 // pred_fallthru
    _
  // Predicated region
  $region58: #{transformer_forward.2} parent=0 // pred_check
    _
  $region59: #{transformer_forward.2} parent=0 // pred_check_branch
    %57 = sbr.rel (0) target = $region61
  $region60: #{transformer_forward.2} parent=0 // pred_region
    _
  $region61: #{transformer_forward.2} parent=0 // pred_fallthru
    _
  // Predicated region
  $region62: #{transformer_forward.2} parent=0 // pred_check
    _
  $region63: #{transformer_forward.2} parent=0 // pred_check_branch
    %59 = sbr.rel (0) target = $region65
  $region64: #{transformer_forward.2} parent=0 // pred_region
    _
  $region65: #{transformer_forward.2} parent=0 // pred_fallthru
    _
  // Predicated region
  $region66: #{transformer_forward.2} parent=0 // pred_check
    _
  $region67: #{transformer_forward.2} parent=0 // pred_check_branch
    %61 = sbr.rel (0) target = $region69
  $region68: #{transformer_forward.2} parent=0 // pred_region
    _
  $region69: #{transformer_forward.2} parent=0 // pred_fallthru
    _
  %s63 = sld [smem:[#allocation7]]
  // Predicated region
  $region70: #{transformer_forward.2} parent=0 // pred_check
    _
  $region71: #{transformer_forward.2} parent=0 // pred_check_branch
    %65 = sbr.rel (0) target = $region73
  $region72: #{transformer_forward.2} parent=0 // pred_region
    loop: start=0, step=1, limit=1
    $region74: #{transformer_forward.2} parent=72 // loop_pre_header
      _
    $region75: #{transformer_forward.2} parent=72 // loop_header
      %s67 = sphi 0, %s71
      %p68 = scmp.ge.s32.totalorder %s67, 1
      %s72 = sphi %s2, %s2
      %s73 = sphi [#allocation2], [#allocation2]
    $region76: #{transformer_forward.2} parent=72 // loop_header_branch
      %70 = sbr.rel (%p68) target = $region80
    $region77: #{transformer_forward.2} parent=72 // loop_body
      %v74 = vld [vmem:[%s72] sm:$0xff]
      %75 = vst [vmem:[%s73] sm:$0xff] %v74
      %v76 = vld [vmem:[%s72 + $0x8] sm:$0xff]
      %77 = vst [vmem:[%s73 + $0x8] sm:$0xff] %v76
      %v78 = vld [vmem:[%s72 + $0x10] sm:$0xff]
      %79 = vst [vmem:[%s73 + $0x10] sm:$0xff] %v78
      %v80 = vld [vmem:[%s72 + $0x18] sm:$0xff]
      %81 = vst [vmem:[%s73 + $0x18] sm:$0xff] %v80
    $region78: #{transformer_forward.2} parent=72 // loop_footer
      %s71 = sadd.s32 1, %s67
    $region79: #{transformer_forward.2} parent=72 // loop_footer_branch
      %66 = sbr.rel target = $region75
    $region80: #{transformer_forward.2} parent=72 // loop_exit
      _
  $region73: #{transformer_forward.2} parent=0 // pred_fallthru
    _
  // Predicated region
  $region81: #{transformer_forward.2} parent=0 // pred_check
    _
  $region82: #{transformer_forward.2} parent=0 // pred_check_branch
    %83 = sbr.rel target = $region84
  $region83: #{transformer_forward.2} parent=0 // pred_region
    _
  $region84: #{transformer_forward.2} parent=0 // pred_fallthru
    _
  // Predicated region
  $region85: #{transformer_forward.2} parent=0 // pred_check
    _
  $region86: #{transformer_forward.2} parent=0 // pred_check_branch
    %86 = sbr.rel (0) target = $region88
  $region87: #{transformer_forward.2} parent=0 // pred_region
    %87 = vsyncadd [#allocation6], 512
  $region88: #{transformer_forward.2} parent=0 // pred_fallthru
    _
  %s88 = scalar_lea.sflag [#allocation6], 1
  // Predicated region
  $region89: #{transformer_forward.2} parent=0 // pred_check
    _
  $region90: #{transformer_forward.2} parent=0 // pred_check_branch
    %90 = sbr.rel (0) target = $region92
  $region91: #{transformer_forward.2} parent=0 // pred_region
    loop: start=0, step=1, limit=1
    $region93: #{transformer_forward.2} parent=91 // loop_pre_header
      _
    $region94: #{transformer_forward.2} parent=91 // loop_header
      %s92 = sphi 0, %s96
      %p93 = scmp.ge.s32.totalorder %s92, 1
      %s97 = sphi %s3, %s3
      %s98 = sphi [#allocation3], [#allocation3]
    $region95: #{transformer_forward.2} parent=91 // loop_header_branch
      %95 = sbr.rel (%p93) target = $region99
    $region96: #{transformer_forward.2} parent=91 // loop_body
      %v99 = vld [vmem:[%s97] sm:$0xff]
      %100 = vst [vmem:[%s98] sm:$0xff] %v99
      %v101 = vld [vmem:[%s97 + $0x8] sm:$0xff]
      %102 = vst [vmem:[%s98 + $0x8] sm:$0xff] %v101
      %v103 = vld [vmem:[%s97 + $0x10] sm:$0xff]
      %104 = vst [vmem:[%s98 + $0x10] sm:$0xff] %v103
      %v105 = vld [vmem:[%s97 + $0x18] sm:$0xff]
      %106 = vst [vmem:[%s98 + $0x18] sm:$0xff] %v105
    $region97: #{transformer_forward.2} parent=91 // loop_footer
      %s96 = sadd.s32 1, %s92
    $region98: #{transformer_forward.2} parent=91 // loop_footer_branch
      %91 = sbr.rel target = $region94
    $region99: #{transformer_forward.2} parent=91 // loop_exit
      _
  $region92: #{transformer_forward.2} parent=0 // pred_fallthru
    _
  // Predicated region
  $region100: #{transformer_forward.2} parent=0 // pred_check
    _
  $region101: #{transformer_forward.2} parent=0 // pred_check_branch
    %108 = sbr.rel target = $region103
  $region102: #{transformer_forward.2} parent=0 // pred_region
    _
  $region103: #{transformer_forward.2} parent=0 // pred_fallthru
    _
  // Predicated region
  $region104: #{transformer_forward.2} parent=0 // pred_check
    _
  $region105: #{transformer_forward.2} parent=0 // pred_check_branch
    %111 = sbr.rel (0) target = $region107
  $region106: #{transformer_forward.2} parent=0 // pred_region
    %112 = vsyncadd %s88, 512
  $region107: #{transformer_forward.2} parent=0 // pred_fallthru
    _
  %v113 = vld [vmem:[%s1] sm:$0x3]
  %v114 = vmul.f32 %v113, %v113
  %vm115 = vcmask 1041408
  %v116 = vsel %vm115, %v114, 0.0
  %117 = vadd.xlane.f32.xlu0 %v116
  %v118 = vpop.xlane.xlu0 %117
  %v119 = vrcp.pop 128.0
  %v120 = vmul.f32 128.0, %v119
  %v121 = vsub.f32 1.0, %v120
  %v122 = vmul.f32 %v119, %v121
  %v123 = vadd.f32 %v119, %v122
  %vm124 = vweird.f32 %v119
  %v125 = vsel %vm124, %v119, %v123
  %v126 = vmul.f32 %v118, %v125
  %v127 = vadd.f32 %v126, 1e-05
  %v128 = vrsqrt.pop %v127
  %v129 = vmul.f32 %v128, %v127
  %v130 = vmul.f32 %v129, %v128
  %v131 = vmul.f32 0.5, %v130
  %v132 = vsub.f32 1.5, %v131
  %v133 = vmul.f32 %v128, %v132
  %vm134 = vweird.f32 %v127
  %vm135 = vweird.f32 %v128
  %vm136 = vmor %vm134, %vm135
  %v137 = vsel %vm136, %v128, %v133
  %v138 = vmul.f32 %v113, %v137
  %v139 = vld [vmem:[%s15] sm:$0x1]
  %v141 = vperm.slane %v139, 0
  %v143 = vmul.f32 %v138, %v141
  %v144 = vpack.c.bf16 %v143, %v143
  %v145 = vld [vmem:[%s4] sm:$0xf]
  %v146 = vld [vmem:[%s4 + $0x4] sm:$0xf]
  %v147 = vld [vmem:[%s4 + $0x8] sm:$0xf]
  %v148 = vld [vmem:[%s4 + $0xc] sm:$0xf]
  %v149 = vld [vmem:[%s4 + $0x10] sm:$0xf]
  %v150 = vld [vmem:[%s4 + $0x14] sm:$0xf]
  %v151 = vld [vmem:[%s4 + $0x18] sm:$0xf]
  %v152 = vld [vmem:[%s4 + $0x1c] sm:$0xf]
  %v153 = vld [vmem:[%s4 + $0x20] sm:$0xf]
  %v154 = vld [vmem:[%s4 + $0x24] sm:$0xf]
  %v155 = vld [vmem:[%s4 + $0x28] sm:$0xf]
  %v156 = vld [vmem:[%s4 + $0x2c] sm:$0xf]
  %v157 = vld [vmem:[%s4 + $0x30] sm:$0xf]
  %v158 = vld [vmem:[%s4 + $0x34] sm:$0xf]
  %v159 = vld [vmem:[%s4 + $0x38] sm:$0xf]
  %v160 = vld [vmem:[%s4 + $0x3c] sm:$0xf]
  %v161 = vld [vmem:[%s5] sm:$0x1]
  %v163 = vperm.slane %v161, 0
  %v181 = vunpack.c.l.b16 %v145
  %v182 = vunpack.c.l.b16 %v146
  %v183 = vunpack.c.l.b16 %v147
  %v184 = vunpack.c.l.b16 %v148
  %v185 = vunpack.c.l.b16 %v149
  %v186 = vunpack.c.l.b16 %v150
  %v187 = vunpack.c.l.b16 %v151
  %v188 = vunpack.c.l.b16 %v152
  %v189 = vunpack.c.l.b16 %v153
  %v190 = vunpack.c.l.b16 %v154
  %v191 = vunpack.c.l.b16 %v155
  %v192 = vunpack.c.l.b16 %v156
  %v193 = vunpack.c.l.b16 %v157
  %v194 = vunpack.c.l.b16 %v158
  %v195 = vunpack.c.l.b16 %v159
  %v196 = vunpack.c.l.b16 %v160
  %v197 = vpack.c.b16 %v182, %v181
  %v198 = vpack.c.b16 %v184, %v183
  %v199 = vpack.c.b16 %v186, %v185
  %v200 = vpack.c.b16 %v188, %v187
  %v201 = vpack.c.b16 %v190, %v189
  %v202 = vpack.c.b16 %v192, %v191
  %v203 = vpack.c.b16 %v194, %v193
  %v204 = vpack.c.b16 %v196, %v195
  %213 = vmatpush.bf16.msra.mxu0 %v204
  %214 = vmatpush.bf16.msra.mxu0 %v203
  %215 = vmatpush.bf16.msra.mxu0 %v202
  %216 = vmatpush.bf16.msra.mxu0 %v201
  %217 = vmatpush.bf16.msra.mxu0 %v200
  %218 = vmatpush.bf16.msra.mxu0 %v199
  %219 = vmatpush.bf16.msra.mxu0 %v198
  %220 = vmatpush.bf16.msra.mxu0 %v197
  %221 = vmatmul.bf16.gmra.mxu0 %v144
  %v222 = vpop.f32.mrf.mxu0
  %v223 = vadd.f32 %v163, %v222
  %v224 = vpop.f32.mrf.mxu0
  %225 = vdwg.mxu0
  %v226 = vld [vmem:[%s6] sm:$0xf]
  %v227 = vld [vmem:[%s6 + $0x4] sm:$0xf]
  %v228 = vld [vmem:[%s6 + $0x8] sm:$0xf]
  %v229 = vld [vmem:[%s6 + $0xc] sm:$0xf]
  %v230 = vld [vmem:[%s6 + $0x10] sm:$0xf]
  %v231 = vld [vmem:[%s6 + $0x14] sm:$0xf]
  %v232 = vld [vmem:[%s6 + $0x18] sm:$0xf]
  %v233 = vld [vmem:[%s6 + $0x1c] sm:$0xf]
  %v234 = vld [vmem:[%s6 + $0x20] sm:$0xf]
  %v235 = vld [vmem:[%s6 + $0x24] sm:$0xf]
  %v236 = vld [vmem:[%s6 + $0x28] sm:$0xf]
  %v237 = vld [vmem:[%s6 + $0x2c] sm:$0xf]
  %v238 = vld [vmem:[%s6 + $0x30] sm:$0xf]
  %v239 = vld [vmem:[%s6 + $0x34] sm:$0xf]
  %v240 = vld [vmem:[%s6 + $0x38] sm:$0xf]
  %v241 = vld [vmem:[%s6 + $0x3c] sm:$0xf]
  %v242 = vld [vmem:[%s7] sm:$0x1]
  %v244 = vperm.slane %v242, 0
  %v262 = vunpack.c.l.b16 %v226
  %v263 = vunpack.c.l.b16 %v227
  %v264 = vunpack.c.l.b16 %v228
  %v265 = vunpack.c.l.b16 %v229
  %v266 = vunpack.c.l.b16 %v230
  %v267 = vunpack.c.l.b16 %v231
  %v268 = vunpack.c.l.b16 %v232
  %v269 = vunpack.c.l.b16 %v233
  %v270 = vunpack.c.l.b16 %v234
  %v271 = vunpack.c.l.b16 %v235
  %v272 = vunpack.c.l.b16 %v236
  %v273 = vunpack.c.l.b16 %v237
  %v274 = vunpack.c.l.b16 %v238
  %v275 = vunpack.c.l.b16 %v239
  %v276 = vunpack.c.l.b16 %v240
  %v277 = vunpack.c.l.b16 %v241
  %v278 = vpack.c.b16 %v263, %v262
  %v279 = vpack.c.b16 %v265, %v264
  %v280 = vpack.c.b16 %v267, %v266
  %v281 = vpack.c.b16 %v269, %v268
  %v282 = vpack.c.b16 %v271, %v270
  %v283 = vpack.c.b16 %v273, %v272
  %v284 = vpack.c.b16 %v275, %v274
  %v285 = vpack.c.b16 %v277, %v276
  %294 = vmatpush.bf16.msra.mxu0 %v285
  %295 = vmatpush.bf16.msra.mxu0 %v284
  %296 = vmatpush.bf16.msra.mxu0 %v283
  %297 = vmatpush.bf16.msra.mxu0 %v282
  %298 = vmatpush.bf16.msra.mxu0 %v281
  %299 = vmatpush.bf16.msra.mxu0 %v280
  %300 = vmatpush.bf16.msra.mxu0 %v279
  %301 = vmatpush.bf16.msra.mxu0 %v278
  %302 = vmatmul.bf16.gmra.mxu0 %v144
  %v303 = vpop.f32.mrf.mxu0
  %v304 = vadd.f32 %v244, %v303
  %v305 = vpop.f32.mrf.mxu0
  %306 = vdwg.mxu0
  %v307 = vld [vmem:[%s8] sm:$0xf]
  %v308 = vld [vmem:[%s8 + $0x4] sm:$0xf]
  %v309 = vld [vmem:[%s8 + $0x8] sm:$0xf]
  %v310 = vld [vmem:[%s8 + $0xc] sm:$0xf]
  %v311 = vld [vmem:[%s8 + $0x10] sm:$0xf]
  %v312 = vld [vmem:[%s8 + $0x14] sm:$0xf]
  %v313 = vld [vmem:[%s8 + $0x18] sm:$0xf]
  %v314 = vld [vmem:[%s8 + $0x1c] sm:$0xf]
  %v315 = vld [vmem:[%s8 + $0x20] sm:$0xf]
  %v316 = vld [vmem:[%s8 + $0x24] sm:$0xf]
  %v317 = vld [vmem:[%s8 + $0x28] sm:$0xf]
  %v318 = vld [vmem:[%s8 + $0x2c] sm:$0xf]
  %v319 = vld [vmem:[%s8 + $0x30] sm:$0xf]
  %v320 = vld [vmem:[%s8 + $0x34] sm:$0xf]
  %v321 = vld [vmem:[%s8 + $0x38] sm:$0xf]
  %v322 = vld [vmem:[%s8 + $0x3c] sm:$0xf]
  %v323 = vld [vmem:[%s9] sm:$0x1]
  %v325 = vperm.slane %v323, 0
  %v343 = vunpack.c.l.b16 %v307
  %v344 = vunpack.c.l.b16 %v308
  %v345 = vunpack.c.l.b16 %v309
  %v346 = vunpack.c.l.b16 %v310
  %v347 = vunpack.c.l.b16 %v311
  %v348 = vunpack.c.l.b16 %v312
  %v349 = vunpack.c.l.b16 %v313
  %v350 = vunpack.c.l.b16 %v314
  %v351 = vunpack.c.l.b16 %v315
  %v352 = vunpack.c.l.b16 %v316
  %v353 = vunpack.c.l.b16 %v317
  %v354 = vunpack.c.l.b16 %v318
  %v355 = vunpack.c.l.b16 %v319
  %v356 = vunpack.c.l.b16 %v320
  %v357 = vunpack.c.l.b16 %v321
  %v358 = vunpack.c.l.b16 %v322
  %v359 = vpack.c.b16 %v344, %v343
  %v360 = vpack.c.b16 %v346, %v345
  %v361 = vpack.c.b16 %v348, %v347
  %v362 = vpack.c.b16 %v350, %v349
  %v363 = vpack.c.b16 %v352, %v351
  %v364 = vpack.c.b16 %v354, %v353
  %v365 = vpack.c.b16 %v356, %v355
  %v366 = vpack.c.b16 %v358, %v357
  %375 = vmatpush.bf16.msra.mxu0 %v366
  %376 = vmatpush.bf16.msra.mxu0 %v365
  %377 = vmatpush.bf16.msra.mxu0 %v364
  %378 = vmatpush.bf16.msra.mxu0 %v363
  %379 = vmatpush.bf16.msra.mxu0 %v362
  %380 = vmatpush.bf16.msra.mxu0 %v361
  %381 = vmatpush.bf16.msra.mxu0 %v360
  %382 = vmatpush.bf16.msra.mxu0 %v359
  %383 = vmatmul.bf16.gmra.mxu0 %v144
  %v384 = vpop.f32.mrf.mxu0
  %v385 = vadd.f32 %v325, %v384
  %v386 = vpop.f32.mrf.mxu0
  %387 = vdwg.mxu0
  %v388 = vlaneseq
  %v389 = vshrl.u32 %v388, 7
  %v390 = vadd.s32 %v389, 8
  %v391 = vadd.s32 %v389, 16
  %v392 = vadd.s32 %v389, 24
  %v393 = vadd.s32 %v389, 32
  %v394 = vadd.s32 %v389, 40
  %v395 = vadd.s32 %v389, 48
  %v396 = vadd.s32 %v389, 56
  %v397 = vadd.s32 %v389, 64
  %v398 = vadd.s32 %v389, 72
  %v399 = vadd.s32 %v389, 80
  %v400 = vadd.s32 %v389, 88
  %v401 = vadd.s32 %v389, 96
  %v402 = vadd.s32 %v389, 104
  %v403 = vadd.s32 %v389, 112
  %v404 = vadd.s32 %v389, 120
  %v405 = vlaneseq
  %v406 = vand.u32 %v405, 127
  %v407 = vadd.s32 %v389, 1
  %v408 = vadd.s32 %v390, 1
  %v409 = vadd.s32 %v391, 1
  %v410 = vadd.s32 %v392, 1
  %v411 = vadd.s32 %v393, 1
  %v412 = vadd.s32 %v394, 1
  %v413 = vadd.s32 %v395, 1
  %v414 = vadd.s32 %v396, 1
  %v415 = vadd.s32 %v397, 1
  %v416 = vadd.s32 %v398, 1
  %v417 = vadd.s32 %v399, 1
  %v418 = vadd.s32 %v400, 1
  %v419 = vadd.s32 %v401, 1
  %v420 = vadd.s32 %v402, 1
  %v421 = vadd.s32 %v403, 1
  %v422 = vadd.s32 %v404, 1
  %v423 = vand.u32 %v389, 1
  %v424 = vand.u32 %v390, 1
  %v425 = vand.u32 %v391, 1
  %v426 = vand.u32 %v392, 1
  %v427 = vand.u32 %v393, 1
  %v428 = vand.u32 %v394, 1
  %v429 = vand.u32 %v395, 1
  %v430 = vand.u32 %v396, 1
  %v431 = vand.u32 %v397, 1
  %v432 = vand.u32 %v398, 1
  %v433 = vand.u32 %v399, 1
  %v434 = vand.u32 %v400, 1
  %v435 = vand.u32 %v401, 1
  %v436 = vand.u32 %v402, 1
  %v437 = vand.u32 %v403, 1
  %v438 = vand.u32 %v404, 1
  %v439 = vmul.u32 %v423, 2
  %v440 = vmul.u32 %v424, 2
  %v441 = vmul.u32 %v425, 2
  %v442 = vmul.u32 %v426, 2
  %v443 = vmul.u32 %v427, 2
  %v444 = vmul.u32 %v428, 2
  %v445 = vmul.u32 %v429, 2
  %v446 = vmul.u32 %v430, 2
  %v447 = vmul.u32 %v431, 2
  %v448 = vmul.u32 %v432, 2
  %v449 = vmul.u32 %v433, 2
  %v450 = vmul.u32 %v434, 2
  %v451 = vmul.u32 %v435, 2
  %v452 = vmul.u32 %v436, 2
  %v453 = vmul.u32 %v437, 2
  %v454 = vmul.u32 %v438, 2
  %v455 = vsub.s32 %v407, %v439
  %v456 = vsub.s32 %v408, %v440
  %v457 = vsub.s32 %v409, %v441
  %v458 = vsub.s32 %v410, %v442
  %v459 = vsub.s32 %v411, %v443
  %v460 = vsub.s32 %v412, %v444
  %v461 = vsub.s32 %v413, %v445
  %v462 = vsub.s32 %v414, %v446
  %v463 = vsub.s32 %v415, %v447
  %v464 = vsub.s32 %v416, %v448
  %v465 = vsub.s32 %v417, %v449
  %v466 = vsub.s32 %v418, %v450
  %v467 = vsub.s32 %v419, %v451
  %v468 = vsub.s32 %v420, %v452
  %v469 = vsub.s32 %v421, %v453
  %v470 = vsub.s32 %v422, %v454
  %vm471 = vcmp.eq.s32.totalorder %v406, %v455
  %vm472 = vcmp.eq.s32.totalorder %v406, %v456
  %vm473 = vcmp.eq.s32.totalorder %v406, %v457
  %vm474 = vcmp.eq.s32.totalorder %v406, %v458
  %vm475 = vcmp.eq.s32.totalorder %v406, %v459
  %vm476 = vcmp.eq.s32.totalorder %v406, %v460
  %vm477 = vcmp.eq.s32.totalorder %v406, %v461
  %vm478 = vcmp.eq.s32.totalorder %v406, %v462
  %vm479 = vcmp.eq.s32.totalorder %v406, %v463
  %vm480 = vcmp.eq.s32.totalorder %v406, %v464
  %vm481 = vcmp.eq.s32.totalorder %v406, %v465
  %vm482 = vcmp.eq.s32.totalorder %v406, %v466
  %vm483 = vcmp.eq.s32.totalorder %v406, %v467
  %vm484 = vcmp.eq.s32.totalorder %v406, %v468
  %vm485 = vcmp.eq.s32.totalorder %v406, %v469
  %vm486 = vcmp.eq.s32.totalorder %v406, %v470
  %v487 = vsel %vm471, 1.0, 0.0
  %v488 = vsel %vm472, 1.0, 0.0
  %v489 = vsel %vm473, 1.0, 0.0
  %v490 = vsel %vm474, 1.0, 0.0
  %v491 = vsel %vm475, 1.0, 0.0
  %v492 = vsel %vm476, 1.0, 0.0
  %v493 = vsel %vm477, 1.0, 0.0
  %v494 = vsel %vm478, 1.0, 0.0
  %v495 = vsel %vm479, 1.0, 0.0
  %v496 = vsel %vm480, 1.0, 0.0
  %v497 = vsel %vm481, 1.0, 0.0
  %v498 = vsel %vm482, 1.0, 0.0
  %v499 = vsel %vm483, 1.0, 0.0
  %v500 = vsel %vm484, 1.0, 0.0
  %v501 = vsel %vm485, 1.0, 0.0
  %v502 = vsel %vm486, 1.0, 0.0
  %v503 = vpack.c.bf16 %v488, %v487
  %v504 = vpack.c.bf16 %v490, %v489
  %v505 = vpack.c.bf16 %v492, %v491
  %v506 = vpack.c.bf16 %v494, %v493
  %v507 = vpack.c.bf16 %v496, %v495
  %v508 = vpack.c.bf16 %v498, %v497
  %v509 = vpack.c.bf16 %v500, %v499
  %v510 = vpack.c.bf16 %v502, %v501
  %v511 = vld [vmem:[%s17] sm:$0x1]
  %v512 = vld [vmem:[%s18] sm:$0x1]
  %v513 = vpack.c.bf16 %v223, %v223
  %514 = vmatpush.bf16.msra.mxu0 %v510
  %515 = vmatpush.bf16.msra.mxu0 %v509
  %516 = vmatpush.bf16.msra.mxu0 %v508
  %517 = vmatpush.bf16.msra.mxu0 %v507
  %518 = vmatpush.bf16.msra.mxu0 %v506
  %519 = vmatpush.bf16.msra.mxu0 %v505
  %520 = vmatpush.bf16.msra.mxu0 %v504
  %521 = vmatpush.bf16.msra.mxu0 %v503
  %522 = vmatmul.bf16.gmra.mxu0 %v513
  %v523 = vpop.f32.mrf.mxu0
  %v524 = vadd.f32 0.0, %v523
  %v525 = vpop.f32.mrf.mxu0
  %526 = vdwg.mxu0
  %v527 = vpack.c.bf16 %v304, %v304
  %528 = vmatpush.bf16.msra.mxu0 %v510
  %529 = vmatpush.bf16.msra.mxu0 %v509
  %530 = vmatpush.bf16.msra.mxu0 %v508
  %531 = vmatpush.bf16.msra.mxu0 %v507
  %532 = vmatpush.bf16.msra.mxu0 %v506
  %533 = vmatpush.bf16.msra.mxu0 %v505
  %534 = vmatpush.bf16.msra.mxu0 %v504
  %535 = vmatpush.bf16.msra.mxu0 %v503
  %536 = vmatmul.bf16.gmra.mxu0 %v527
  %v537 = vpop.f32.mrf.mxu0
  %v538 = vadd.f32 0.0, %v537
  %v539 = vpop.f32.mrf.mxu0
  %540 = vdwg.mxu0
  %v542 = vperm.slane %v511, 0
  %v544 = vmul.f32 %v223, %v542
  %v546 = vperm.slane %v512, 0
  %v548 = vmul.f32 %v524, %v546
  %v549 = vadd.f32 %v544, %v548
  %v550 = vmul.f32 %v304, %v542
  %v551 = vmul.f32 %v538, %v546
  %v552 = vadd.f32 %v550, %v551
  %v554 = vrot.slane %v552, 1
  %556 = vst [vmem:[#allocation4] sm:$0x1] %v552
  %557 = vst [vmem:[#allocation4 + $0x1] sm:$0x1] %v554
  %v559 = vrot.slane %v385, 1
  %561 = vst [vmem:[#allocation5] sm:$0x1] %v385
  %562 = vst [vmem:[#allocation5 + $0x1] sm:$0x1] %v559
  %s563 = smul.u32 2, 16
  %s564 = smul.u32 %s563, 1
  %s565 = sshll.u32 %s564, 4
  %566 = dma.done [#allocation6], %s565
  %s567 = sshll.u32 %s564, 4
  %568 = dma.done %s88, %s567
  %s569 = scalar_lea.vmem %s20, %s63
  %s570 = scalar_lea.sflag [#allocation6], 2
  // Predicated region
  $region108: #{transformer_forward.2} parent=0 // pred_check
    _
  $region109: #{transformer_forward.2} parent=0 // pred_check_branch
    %572 = sbr.rel target = $region111
  $region110: #{transformer_forward.2} parent=0 // pred_region
    // Predicated region
    $region123: #{transformer_forward.2} parent=110 // pred_check
      _
    $region124: #{transformer_forward.2} parent=110 // pred_check_branch
      %590 = sbr.rel (0) target = $region126
    $region125: #{transformer_forward.2} parent=110 // pred_region
      %s592 = ssub.s32 2, 1
      loop: start=0, step=1, limit=1
      $region127: #{transformer_forward.2} parent=125 // loop_pre_header
        _
      $region128: #{transformer_forward.2} parent=125 // loop_header
        %s594 = sphi 0, %s598
        %p595 = scmp.ge.s32.totalorder %s594, 1
        %s599 = sphi [#allocation4], [#allocation4]
        %s600 = sphi %s569, %s569
      $region129: #{transformer_forward.2} parent=125 // loop_header_branch
        %597 = sbr.rel (%p595) target = $region133
      $region130: #{transformer_forward.2} parent=125 // loop_body
        %v601 = vld [vmem:[%s599] sm:%s592]
        %602 = vst [vmem:[%s600] sm:%s592] %v601
        %v603 = vld [vmem:[%s599 + $0x1] sm:%s592]
        %604 = vst [vmem:[%s600 + $0x10] sm:%s592] %v603
      $region131: #{transformer_forward.2} parent=125 // loop_footer
        %s598 = sadd.s32 1, %s594
      $region132: #{transformer_forward.2} parent=125 // loop_footer_branch
        %593 = sbr.rel target = $region128
      $region133: #{transformer_forward.2} parent=125 // loop_exit
        _
    $region126: #{transformer_forward.2} parent=110 // pred_fallthru
      _
  $region111: #{transformer_forward.2} parent=0 // pred_fallthru
    _
  // Predicated region
  $region112: #{transformer_forward.2} parent=0 // pred_check
    _
  $region113: #{transformer_forward.2} parent=0 // pred_check_branch
    %574 = sbr.rel (0) target = $region115
  $region114: #{transformer_forward.2} parent=0 // pred_region
    %s576 = ssub.s32 2, 1
    loop: start=0, step=1, limit=1
    $region116: #{transformer_forward.2} parent=114 // loop_pre_header
      _
    $region117: #{transformer_forward.2} parent=114 // loop_header
      %s578 = sphi 0, %s582
      %p579 = scmp.ge.s32.totalorder %s578, 1
      %s583 = sphi [#allocation4], [#allocation4]
      %s584 = sphi %s569, %s569
    $region118: #{transformer_forward.2} parent=114 // loop_header_branch
      %581 = sbr.rel (%p579) target = $region122
    $region119: #{transformer_forward.2} parent=114 // loop_body
      %v585 = vld [vmem:[%s583] sm:%s576]
      %586 = vst [vmem:[%s584] sm:%s576] %v585
      %v587 = vld [vmem:[%s583 + $0x1] sm:%s576]
      %588 = vst [vmem:[%s584 + $0x10] sm:%s576] %v587
    $region120: #{transformer_forward.2} parent=114 // loop_footer
      %s582 = sadd.s32 1, %s578
    $region121: #{transformer_forward.2} parent=114 // loop_footer_branch
      %577 = sbr.rel target = $region117
    $region122: #{transformer_forward.2} parent=114 // loop_exit
      _
  $region115: #{transformer_forward.2} parent=0 // pred_fallthru
    _
  // Predicated region
  $region134: #{transformer_forward.2} parent=0 // pred_check
    _
  $region135: #{transformer_forward.2} parent=0 // pred_check_branch
    %607 = sbr.rel (0) target = $region137
  $region136: #{transformer_forward.2} parent=0 // pred_region
    %608 = vsyncadd %s570, 32
  $region137: #{transformer_forward.2} parent=0 // pred_fallthru
    _
  %s609 = scalar_lea.vmem %s21, %s63
  %s610 = scalar_lea.sflag [#allocation6], 3
  // Predicated region
  $region138: #{transformer_forward.2} parent=0 // pred_check
    _
  $region139: #{transformer_forward.2} parent=0 // pred_check_branch
    %612 = sbr.rel target = $region141
  $region140: #{transformer_forward.2} parent=0 // pred_region
    // Predicated region
    $region153: #{transformer_forward.2} parent=140 // pred_check
      _
    $region154: #{transformer_forward.2} parent=140 // pred_check_branch
      %630 = sbr.rel (0) target = $region156
    $region155: #{transformer_forward.2} parent=140 // pred_region
      %s632 = ssub.s32 2, 1
      loop: start=0, step=1, limit=1
      $region157: #{transformer_forward.2} parent=155 // loop_pre_header
        _
      $region158: #{transformer_forward.2} parent=155 // loop_header
        %s634 = sphi 0, %s638
        %p635 = scmp.ge.s32.totalorder %s634, 1
        %s639 = sphi [#allocation5], [#allocation5]
        %s640 = sphi %s609, %s609
      $region159: #{transformer_forward.2} parent=155 // loop_header_branch
        %637 = sbr.rel (%p635) target = $region163
      $region160: #{transformer_forward.2} parent=155 // loop_body
        %v641 = vld [vmem:[%s639] sm:%s632]
        %642 = vst [vmem:[%s640] sm:%s632] %v641
        %v643 = vld [vmem:[%s639 + $0x1] sm:%s632]
        %644 = vst [vmem:[%s640 + $0x10] sm:%s632] %v643
      $region161: #{transformer_forward.2} parent=155 // loop_footer
        %s638 = sadd.s32 1, %s634
      $region162: #{transformer_forward.2} parent=155 // loop_footer_branch
        %633 = sbr.rel target = $region158
      $region163: #{transformer_forward.2} parent=155 // loop_exit
        _
    $region156: #{transformer_forward.2} parent=140 // pred_fallthru
      _
  $region141: #{transformer_forward.2} parent=0 // pred_fallthru
    _
  // Predicated region
  $region142: #{transformer_forward.2} parent=0 // pred_check
    _
  $region143: #{transformer_forward.2} parent=0 // pred_check_branch
    %614 = sbr.rel (0) target = $region145
  $region144: #{transformer_forward.2} parent=0 // pred_region
    %s616 = ssub.s32 2, 1
    loop: start=0, step=1, limit=1
    $region146: #{transformer_forward.2} parent=144 // loop_pre_header
      _
    $region147: #{transformer_forward.2} parent=144 // loop_header
      %s618 = sphi 0, %s622
      %p619 = scmp.ge.s32.totalorder %s618, 1
      %s623 = sphi [#allocation5], [#allocation5]
      %s624 = sphi %s609, %s609
    $region148: #{transformer_forward.2} parent=144 // loop_header_branch
      %621 = sbr.rel (%p619) target = $region152
    $region149: #{transformer_forward.2} parent=144 // loop_body
      %v625 = vld [vmem:[%s623] sm:%s616]
      %626 = vst [vmem:[%s624] sm:%s616] %v625
      %v627 = vld [vmem:[%s623 + $0x1] sm:%s616]
      %628 = vst [vmem:[%s624 + $0x10] sm:%s616] %v627
    $region150: #{transformer_forward.2} parent=144 // loop_footer
      %s622 = sadd.s32 1, %s618
    $region151: #{transformer_forward.2} parent=144 // loop_footer_branch
      %617 = sbr.rel target = $region147
    $region152: #{transformer_forward.2} parent=144 // loop_exit
      _
  $region145: #{transformer_forward.2} parent=0 // pred_fallthru
    _
  // Predicated region
  $region164: #{transformer_forward.2} parent=0 // pred_check
    _
  $region165: #{transformer_forward.2} parent=0 // pred_check_branch
    %647 = sbr.rel (0) target = $region167
  $region166: #{transformer_forward.2} parent=0 // pred_region
    %648 = vsyncadd %s610, 32
  $region167: #{transformer_forward.2} parent=0 // pred_fallthru
    _
  %v649 = vstv %s63
  %vm650 = vcmp.eq.s32.totalorder %v389, %v649
  %vm651 = vcmp.eq.s32.totalorder %v390, %v649
  %v652 = vld [vmem:[#allocation2] sm:$0xff]
  %v653 = vld [vmem:[#allocation2 + $0x8] sm:$0xff]
  %v654 = vld [vmem:[#allocation2 + $0x10] sm:$0xff]
  %v655 = vld [vmem:[#allocation2 + $0x18] sm:$0xff]
  %v656 = vsel %vm650, 1, 0
  %v657 = vsel %vm651, 1, 0
  %vm658 = vcmp.eq.s32.totalorder %v656, 1
  %vm659 = vcmp.eq.s32.totalorder %v657, 1
  %v660 = vperm.slane %v552, 0
  %v661 = vperm.slane %v554, 0
  %v664 = vsel %vm658, %v660, %v652
  %v665 = vsel %vm659, %v660, %v653
  %v666 = vsel %vm658, %v661, %v654
  %v667 = vsel %vm659, %v661, %v655
  %v668 = vld [vmem:[#allocation3] sm:$0xff]
  %v669 = vld [vmem:[#allocation3 + $0x8] sm:$0xff]
  %v670 = vld [vmem:[#allocation3 + $0x10] sm:$0xff]
  %v671 = vld [vmem:[#allocation3 + $0x18] sm:$0xff]
  %v672 = vperm.slane %v385, 0
  %v673 = vperm.slane %v559, 0
  %v676 = vsel %vm658, %v672, %v668
  %v677 = vsel %vm659, %v672, %v669
  %v678 = vsel %vm658, %v673, %v670
  %v679 = vsel %vm659, %v673, %v671
  %vm680 = vcmp.le.s32.totalorder %v406, %v649
  %v682 = vrot.slane %v549, 1
  %v684 = vpack.c.bf16 %v549, %v549
  %v685 = vpack.c.bf16 %v682, %v682
  %v686 = vpack.c.bf16 %v664, %v664
  %v687 = vpack.c.bf16 %v665, %v665
  %v688 = vpack.c.bf16 %v666, %v666
  %v689 = vpack.c.bf16 %v667, %v667
  %v690 = vpack.c.bf16 %v676, %v676
  %v691 = vpack.c.bf16 %v677, %v677
  %v692 = vpack.c.bf16 %v678, %v678
  %v693 = vpack.c.bf16 %v679, %v679
  %v696 = vunpack.c.l.b16 %v686
  %v697 = vunpack.c.l.b16 %v687
  %v698 = vpack.c.b16 %v697, %v696
  %vm699 = vcmask 261120
  %v701 = vsel %vm699, %v684, 0
  %v704 = vsel %vm699, %v698, 0
  %706 = vmatpush.bf16.xpose.msra.mxu0 0
  %707 = vmatpush.bf16.xpose.msra.mxu0 0
  %708 = vmatpush.bf16.xpose.msra.mxu0 0
  %709 = vmatpush.bf16.xpose.msra.mxu0 0
  %710 = vmatpush.bf16.xpose.msra.mxu0 0
  %711 = vmatpush.bf16.xpose.msra.mxu0 0
  %712 = vmatpush.bf16.xpose.msra.mxu0 0
  %713 = vmatpush.bf16.xpose.msra.mxu0 %v704
  %714 = vmatmul.bf16.gmra.mxu0 %v701
  %v715 = vpop.f32.mrf.mxu0
  %v716 = vadd.f32 0.0, %v715
  %v717 = vpop.f32.mrf.mxu0
  %718 = vdwg.mxu0
  %v721 = vunpack.c.l.b16 %v688
  %v722 = vunpack.c.l.b16 %v689
  %v723 = vpack.c.b16 %v722, %v721
  %v725 = vsel %vm699, %v685, 0
  %v728 = vsel %vm699, %v723, 0
  %730 = vmatpush.bf16.xpose.msra.mxu0 0
  %731 = vmatpush.bf16.xpose.msra.mxu0 0
  %732 = vmatpush.bf16.xpose.msra.mxu0 0
  %733 = vmatpush.bf16.xpose.msra.mxu0 0
  %734 = vmatpush.bf16.xpose.msra.mxu0 0
  %735 = vmatpush.bf16.xpose.msra.mxu0 0
  %736 = vmatpush.bf16.xpose.msra.mxu0 0
  %737 = vmatpush.bf16.xpose.msra.mxu0 %v728
  %738 = vmatmul.bf16.gmra.mxu0 %v725
  %v739 = vpop.f32.mrf.mxu0
  %v740 = vadd.f32 0.0, %v739
  %v741 = vpop.f32.mrf.mxu0
  %742 = vdwg.mxu0
  %v743 = vmul.f32 %v716, 0.17677669
  %v744 = vmul.f32 %v740, 0.17677669
  %v745 = vsel %vm680, 1, 0
  %vm746 = vcmp.eq.s32.totalorder %v745, 1
  %v747 = vsel %vm746, %v743, -inf
  %v748 = vsel %vm746, %v744, -inf
  %vm749 = vcmask 122880
  %v750 = vsel %vm749, %v747, -inf
  %751 = vmax.xlane.f32.xlu0 %v750
  %v752 = vpop.xlane.xlu0 %751
  %v753 = vsel %vm749, %v748, -inf
  %754 = vmax.xlane.f32.xlu0 %v753
  %v755 = vpop.xlane.xlu0 %754
  %v756 = vsub.f32 %v747, %v752
  %v757 = vsub.f32 %v748, %v755
  %v758 = vmul.f32 %v756, 1.442695
  %v759 = vpow.pop %v758
  %v760 = vmul.f32 %v757, 1.442695
  %v761 = vpow.pop %v760
  %v762 = vsel %vm749, %v759, 0.0
  %763 = vadd.xlane.f32.xlu0 %v762
  %v764 = vpop.xlane.xlu0 %763
  %v765 = vsel %vm749, %v761, 0.0
  %766 = vadd.xlane.f32.xlu0 %v765
  %v767 = vpop.xlane.xlu0 %766
  %v768 = vrcp.pop %v764
  %v769 = vrcp.pop %v767
  %v770 = vmul.f32 %v759, %v768
  %v771 = vmul.f32 %v761, %v769
  %v772 = vpack.c.bf16 %v770, %v770
  %v773 = vpack.c.bf16 %v771, %v771
  %v776 = vunpack.c.l.b16 %v690
  %v777 = vunpack.c.l.b16 %v691
  %v778 = vpack.c.b16 %v777, %v776
  %vm780 = vcmask 130048
  %v782 = vsel %vm780, %v772, 0
  %784 = vmatpush.bf16.msra.mxu0 0
  %785 = vmatpush.bf16.msra.mxu0 0
  %786 = vmatpush.bf16.msra.mxu0 0
  %787 = vmatpush.bf16.msra.mxu0 0
  %788 = vmatpush.bf16.msra.mxu0 0
  %789 = vmatpush.bf16.msra.mxu0 0
  %790 = vmatpush.bf16.msra.mxu0 0
  %791 = vmatpush.bf16.msra.mxu0 %v778
  %792 = vmatmul.bf16.gmra.mxu0 %v782
  %v793 = vpop.f32.mrf.mxu0
  %v794 = vadd.f32 0.0, %v793
  %v795 = vpop.f32.mrf.mxu0
  %796 = vdwg.mxu0
  %v799 = vunpack.c.l.b16 %v692
  %v800 = vunpack.c.l.b16 %v693
  %v801 = vpack.c.b16 %v800, %v799
  %v804 = vsel %vm780, %v773, 0
  %806 = vmatpush.bf16.msra.mxu0 0
  %807 = vmatpush.bf16.msra.mxu0 0
  %808 = vmatpush.bf16.msra.mxu0 0
  %809 = vmatpush.bf16.msra.mxu0 0
  %810 = vmatpush.bf16.msra.mxu0 0
  %811 = vmatpush.bf16.msra.mxu0 0
  %812 = vmatpush.bf16.msra.mxu0 0
  %813 = vmatpush.bf16.msra.mxu0 %v801
  %814 = vmatmul.bf16.gmra.mxu0 %v804
  %v815 = vpop.f32.mrf.mxu0
  %v816 = vadd.f32 0.0, %v815
  %v817 = vpop.f32.mrf.mxu0
  %818 = vdwg.mxu0
  %v820 = vunpack.c.l.b16 %v684
  %v821 = vpack.c.b16 %v820, %v820
  %822 = vrot.lane.b32.xlu0 %v821, 96
  %v823 = vpop.permute.xlu0 %822
  %824 = vrot.lane.b32.xlu0 %v698, 96
  %v825 = vpop.permute.xlu0 %824
  %v827 = vsel %vm699, %v823, 0
  %v830 = vsel %vm699, %v825, 0
  %832 = vmatpush.bf16.xpose.msra.mxu0 0
  %833 = vmatpush.bf16.xpose.msra.mxu0 0
  %834 = vmatpush.bf16.xpose.msra.mxu0 0
  %835 = vmatpush.bf16.xpose.msra.mxu0 0
  %836 = vmatpush.bf16.xpose.msra.mxu0 0
  %837 = vmatpush.bf16.xpose.msra.mxu0 0
  %838 = vmatpush.bf16.xpose.msra.mxu0 0
  %839 = vmatpush.bf16.xpose.msra.mxu0 %v830
  %840 = vmatmul.bf16.gmra.mxu0 %v827
  %v841 = vpop.f32.mrf.mxu0
  %v842 = vadd.f32 0.0, %v841
  %v843 = vpop.f32.mrf.mxu0
  %844 = vdwg.mxu0
  %v846 = vunpack.c.l.b16 %v685
  %v847 = vpack.c.b16 %v846, %v846
  %848 = vrot.lane.b32.xlu0 %v847, 96
  %v849 = vpop.permute.xlu0 %848
  %850 = vrot.lane.b32.xlu0 %v723, 96
  %v851 = vpop.permute.xlu0 %850
  %v853 = vsel %vm699, %v849, 0
  %v856 = vsel %vm699, %v851, 0
  %858 = vmatpush.bf16.xpose.msra.mxu0 0
  %859 = vmatpush.bf16.xpose.msra.mxu0 0
  %860 = vmatpush.bf16.xpose.msra.mxu0 0
  %861 = vmatpush.bf16.xpose.msra.mxu0 0
  %862 = vmatpush.bf16.xpose.msra.mxu0 0
  %863 = vmatpush.bf16.xpose.msra.mxu0 0
  %864 = vmatpush.bf16.xpose.msra.mxu0 0
  %865 = vmatpush.bf16.xpose.msra.mxu0 %v856
  %866 = vmatmul.bf16.gmra.mxu0 %v853
  %v867 = vpop.f32.mrf.mxu0
  %v868 = vadd.f32 0.0, %v867
  %v869 = vpop.f32.mrf.mxu0
  %870 = vdwg.mxu0
  %v871 = vmul.f32 %v842, 0.17677669
  %v872 = vmul.f32 %v868, 0.17677669
  %v873 = vsel %vm746, %v871, -inf
  %v874 = vsel %vm746, %v872, -inf
  %v875 = vsel %vm749, %v873, -inf
  %876 = vmax.xlane.f32.xlu0 %v875
  %v877 = vpop.xlane.xlu0 %876
  %v878 = vsel %vm749, %v874, -inf
  %879 = vmax.xlane.f32.xlu0 %v878
  %v880 = vpop.xlane.xlu0 %879
  %v881 = vsub.f32 %v873, %v877
  %v882 = vsub.f32 %v874, %v880
  %v883 = vmul.f32 %v881, 1.442695
  %v884 = vpow.pop %v883
  %v885 = vmul.f32 %v882, 1.442695
  %v886 = vpow.pop %v885
  %v887 = vsel %vm749, %v884, 0.0
  %888 = vadd.xlane.f32.xlu0 %v887
  %v889 = vpop.xlane.xlu0 %888
  %v890 = vsel %vm749, %v886, 0.0
  %891 = vadd.xlane.f32.xlu0 %v890
  %v892 = vpop.xlane.xlu0 %891
  %v893 = vrcp.pop %v889
  %v894 = vrcp.pop %v892
  %v895 = vmul.f32 %v884, %v893
  %v896 = vmul.f32 %v886, %v894
  %v897 = vpack.c.bf16 %v895, %v895
  %v898 = vpack.c.bf16 %v896, %v896
  %899 = vrot.lane.b32.xlu0 %v778, 96
  %v900 = vpop.permute.xlu0 %899
  %v903 = vsel %vm780, %v897, 0
  %905 = vmatpush.bf16.msra.mxu0 0
  %906 = vmatpush.bf16.msra.mxu0 0
  %907 = vmatpush.bf16.msra.mxu0 0
  %908 = vmatpush.bf16.msra.mxu0 0
  %909 = vmatpush.bf16.msra.mxu0 0
  %910 = vmatpush.bf16.msra.mxu0 0
  %911 = vmatpush.bf16.msra.mxu0 0
  %912 = vmatpush.bf16.msra.mxu0 %v900
  %913 = vmatmul.bf16.gmra.mxu0 %v903
  %v914 = vpop.f32.mrf.mxu0
  %v915 = vadd.f32 0.0, %v914
  %v916 = vpop.f32.mrf.mxu0
  %917 = vdwg.mxu0
  %918 = vrot.lane.b32.xlu0 %v801, 96
  %v919 = vpop.permute.xlu0 %918
  %v922 = vsel %vm780, %v898, 0
  %924 = vmatpush.bf16.msra.mxu0 0
  %925 = vmatpush.bf16.msra.mxu0 0
  %926 = vmatpush.bf16.msra.mxu0 0
  %927 = vmatpush.bf16.msra.mxu0 0
  %928 = vmatpush.bf16.msra.mxu0 0
  %929 = vmatpush.bf16.msra.mxu0 0
  %930 = vmatpush.bf16.msra.mxu0 0
  %931 = vmatpush.bf16.msra.mxu0 %v919
  %932 = vmatmul.bf16.gmra.mxu0 %v922
  %v933 = vpop.f32.mrf.mxu0
  %v934 = vadd.f32 0.0, %v933
  %v935 = vpop.f32.mrf.mxu0
  %936 = vdwg.mxu0
  %937 = vrot.lane.b32.xlu0 %v821, 64
  %v938 = vpop.permute.xlu0 %937
  %939 = vrot.lane.b32.xlu0 %v698, 64
  %v940 = vpop.permute.xlu0 %939
  %v942 = vsel %vm699, %v938, 0
  %v945 = vsel %vm699, %v940, 0
  %947 = vmatpush.bf16.xpose.msra.mxu0 0
  %948 = vmatpush.bf16.xpose.msra.mxu0 0
  %949 = vmatpush.bf16.xpose.msra.mxu0 0
  %950 = vmatpush.bf16.xpose.msra.mxu0 0
  %951 = vmatpush.bf16.xpose.msra.mxu0 0
  %952 = vmatpush.bf16.xpose.msra.mxu0 0
  %953 = vmatpush.bf16.xpose.msra.mxu0 0
  %954 = vmatpush.bf16.xpose.msra.mxu0 %v945
  %955 = vmatmul.bf16.gmra.mxu0 %v942
  %v956 = vpop.f32.mrf.mxu0
  %v957 = vadd.f32 0.0, %v956
  %v958 = vpop.f32.mrf.mxu0
  %959 = vdwg.mxu0
  %960 = vrot.lane.b32.xlu0 %v847, 64
  %v961 = vpop.permute.xlu0 %960
  %962 = vrot.lane.b32.xlu0 %v723, 64
  %v963 = vpop.permute.xlu0 %962
  %v965 = vsel %vm699, %v961, 0
  %v968 = vsel %vm699, %v963, 0
  %970 = vmatpush.bf16.xpose.msra.mxu0 0
  %971 = vmatpush.bf16.xpose.msra.mxu0 0
  %972 = vmatpush.bf16.xpose.msra.mxu0 0
  %973 = vmatpush.bf16.xpose.msra.mxu0 0
  %974 = vmatpush.bf16.xpose.msra.mxu0 0
  %975 = vmatpush.bf16.xpose.msra.mxu0 0
  %976 = vmatpush.bf16.xpose.msra.mxu0 0
  %977 = vmatpush.bf16.xpose.msra.mxu0 %v968
  %978 = vmatmul.bf16.gmra.mxu0 %v965
  %v979 = vpop.f32.mrf.mxu0
  %v980 = vadd.f32 0.0, %v979
  %v981 = vpop.f32.mrf.mxu0
  %982 = vdwg.mxu0
  %v983 = vmul.f32 %v957, 0.17677669
  %v984 = vmul.f32 %v980, 0.17677669
  %v985 = vsel %vm746, %v983, -inf
  %v986 = vsel %vm746, %v984, -inf
  %v987 = vsel %vm749, %v985, -inf
  %988 = vmax.xlane.f32.xlu0 %v987
  %v989 = vpop.xlane.xlu0 %988
  %v990 = vsel %vm749, %v986, -inf
  %991 = vmax.xlane.f32.xlu0 %v990
  %v992 = vpop.xlane.xlu0 %991
  %v993 = vsub.f32 %v985, %v989
  %v994 = vsub.f32 %v986, %v992
  %v995 = vmul.f32 %v993, 1.442695
  %v996 = vpow.pop %v995
  %v997 = vmul.f32 %v994, 1.442695
  %v998 = vpow.pop %v997
  %v999 = vsel %vm749, %v996, 0.0
  %1000 = vadd.xlane.f32.xlu0 %v999
  %v1001 = vpop.xlane.xlu0 %1000
  %v1002 = vsel %vm749, %v998, 0.0
  %1003 = vadd.xlane.f32.xlu0 %v1002
  %v1004 = vpop.xlane.xlu0 %1003
  %v1005 = vrcp.pop %v1001
  %v1006 = vrcp.pop %v1004
  %v1007 = vmul.f32 %v996, %v1005
  %v1008 = vmul.f32 %v998, %v1006
  %v1009 = vpack.c.bf16 %v1007, %v1007
  %v1010 = vpack.c.bf16 %v1008, %v1008
  %1011 = vrot.lane.b32.xlu0 %v778, 64
  %v1012 = vpop.permute.xlu0 %1011
  %v1015 = vsel %vm780, %v1009, 0
  %1017 = vmatpush.bf16.msra.mxu0 0
  %1018 = vmatpush.bf16.msra.mxu0 0
  %1019 = vmatpush.bf16.msra.mxu0 0
  %1020 = vmatpush.bf16.msra.mxu0 0
  %1021 = vmatpush.bf16.msra.mxu0 0
  %1022 = vmatpush.bf16.msra.mxu0 0
  %1023 = vmatpush.bf16.msra.mxu0 0
  %1024 = vmatpush.bf16.msra.mxu0 %v1012
  %1025 = vmatmul.bf16.gmra.mxu0 %v1015
  %v1026 = vpop.f32.mrf.mxu0
  %v1027 = vadd.f32 0.0, %v1026
  %v1028 = vpop.f32.mrf.mxu0
  %1029 = vdwg.mxu0
  %1030 = vrot.lane.b32.xlu0 %v801, 64
  %v1031 = vpop.permute.xlu0 %1030
  %v1034 = vsel %vm780, %v1010, 0
  %1036 = vmatpush.bf16.msra.mxu0 0
  %1037 = vmatpush.bf16.msra.mxu0 0
  %1038 = vmatpush.bf16.msra.mxu0 0
  %1039 = vmatpush.bf16.msra.mxu0 0
  %1040 = vmatpush.bf16.msra.mxu0 0
  %1041 = vmatpush.bf16.msra.mxu0 0
  %1042 = vmatpush.bf16.msra.mxu0 0
  %1043 = vmatpush.bf16.msra.mxu0 %v1031
  %1044 = vmatmul.bf16.gmra.mxu0 %v1034
  %v1045 = vpop.f32.mrf.mxu0
  %v1046 = vadd.f32 0.0, %v1045
  %v1047 = vpop.f32.mrf.mxu0
  %1048 = vdwg.mxu0
  %1049 = vrot.lane.b32.xlu0 %v821, 32
  %v1050 = vpop.permute.xlu0 %1049
  %1051 = vrot.lane.b32.xlu0 %v698, 32
  %v1052 = vpop.permute.xlu0 %1051
  %v1054 = vsel %vm699, %v1050, 0
  %v1057 = vsel %vm699, %v1052, 0
  %1059 = vmatpush.bf16.xpose.msra.mxu0 0
  %1060 = vmatpush.bf16.xpose.msra.mxu0 0
  %1061 = vmatpush.bf16.xpose.msra.mxu0 0
  %1062 = vmatpush.bf16.xpose.msra.mxu0 0
  %1063 = vmatpush.bf16.xpose.msra.mxu0 0
  %1064 = vmatpush.bf16.xpose.msra.mxu0 0
  %1065 = vmatpush.bf16.xpose.msra.mxu0 0
  %1066 = vmatpush.bf16.xpose.msra.mxu0 %v1057
  %1067 = vmatmul.bf16.gmra.mxu0 %v1054
  %v1068 = vpop.f32.mrf.mxu0
  %v1069 = vadd.f32 0.0, %v1068
  %v1070 = vpop.f32.mrf.mxu0
  %1071 = vdwg.mxu0
  %1072 = vrot.lane.b32.xlu0 %v847, 32
  %v1073 = vpop.permute.xlu0 %1072
  %1074 = vrot.lane.b32.xlu0 %v723, 32
  %v1075 = vpop.permute.xlu0 %1074
  %v1077 = vsel %vm699, %v1073, 0
  %v1080 = vsel %vm699, %v1075, 0
  %1082 = vmatpush.bf16.xpose.msra.mxu0 0
  %1083 = vmatpush.bf16.xpose.msra.mxu0 0
  %1084 = vmatpush.bf16.xpose.msra.mxu0 0
  %1085 = vmatpush.bf16.xpose.msra.mxu0 0
  %1086 = vmatpush.bf16.xpose.msra.mxu0 0
  %1087 = vmatpush.bf16.xpose.msra.mxu0 0
  %1088 = vmatpush.bf16.xpose.msra.mxu0 0
  %1089 = vmatpush.bf16.xpose.msra.mxu0 %v1080
  %1090 = vmatmul.bf16.gmra.mxu0 %v1077
  %v1091 = vpop.f32.mrf.mxu0
  %v1092 = vadd.f32 0.0, %v1091
  %v1093 = vpop.f32.mrf.mxu0
  %1094 = vdwg.mxu0
  %v1095 = vmul.f32 %v1069, 0.17677669
  %v1096 = vmul.f32 %v1092, 0.17677669
  %v1097 = vsel %vm746, %v1095, -inf
  %v1098 = vsel %vm746, %v1096, -inf
  %v1099 = vsel %vm749, %v1097, -inf
  %1100 = vmax.xlane.f32.xlu0 %v1099
  %v1101 = vpop.xlane.xlu0 %1100
  %v1102 = vsel %vm749, %v1098, -inf
  %1103 = vmax.xlane.f32.xlu0 %v1102
  %v1104 = vpop.xlane.xlu0 %1103
  %v1105 = vsub.f32 %v1097, %v1101
  %v1106 = vsub.f32 %v1098, %v1104
  %v1107 = vmul.f32 %v1105, 1.442695
  %v1108 = vpow.pop %v1107
  %v1109 = vmul.f32 %v1106, 1.442695
  %v1110 = vpow.pop %v1109
  %v1111 = vsel %vm749, %v1108, 0.0
  %1112 = vadd.xlane.f32.xlu0 %v1111
  %v1113 = vpop.xlane.xlu0 %1112
  %v1114 = vsel %vm749, %v1110, 0.0
  %1115 = vadd.xlane.f32.xlu0 %v1114
  %v1116 = vpop.xlane.xlu0 %1115
  %v1117 = vrcp.pop %v1113
  %v1118 = vrcp.pop %v1116
  %v1119 = vmul.f32 %v1108, %v1117
  %v1120 = vmul.f32 %v1110, %v1118
  %v1121 = vpack.c.bf16 %v1119, %v1119
  %v1122 = vpack.c.bf16 %v1120, %v1120
  %1123 = vrot.lane.b32.xlu0 %v778, 32
  %v1124 = vpop.permute.xlu0 %1123
  %v1127 = vsel %vm780, %v1121, 0
  %1129 = vmatpush.bf16.msra.mxu0 0
  %1130 = vmatpush.bf16.msra.mxu0 0
  %1131 = vmatpush.bf16.msra.mxu0 0
  %1132 = vmatpush.bf16.msra.mxu0 0
  %1133 = vmatpush.bf16.msra.mxu0 0
  %1134 = vmatpush.bf16.msra.mxu0 0
  %1135 = vmatpush.bf16.msra.mxu0 0
  %1136 = vmatpush.bf16.msra.mxu0 %v1124
  %1137 = vmatmul.bf16.gmra.mxu0 %v1127
  %v1138 = vpop.f32.mrf.mxu0
  %v1139 = vadd.f32 0.0, %v1138
  %v1140 = vpop.f32.mrf.mxu0
  %1141 = vdwg.mxu0
  %1142 = vrot.lane.b32.xlu0 %v801, 32
  %v1143 = vpop.permute.xlu0 %1142
  %v1146 = vsel %vm780, %v1122, 0
  %1148 = vmatpush.bf16.msra.mxu0 0
  %1149 = vmatpush.bf16.msra.mxu0 0
  %1150 = vmatpush.bf16.msra.mxu0 0
  %1151 = vmatpush.bf16.msra.mxu0 0
  %1152 = vmatpush.bf16.msra.mxu0 0
  %1153 = vmatpush.bf16.msra.mxu0 0
  %1154 = vmatpush.bf16.msra.mxu0 0
  %1155 = vmatpush.bf16.msra.mxu0 %v1143
  %1156 = vmatmul.bf16.gmra.mxu0 %v1146
  %v1157 = vpop.f32.mrf.mxu0
  %v1158 = vadd.f32 0.0, %v1157
  %v1159 = vpop.f32.mrf.mxu0
  %1160 = vdwg.mxu0
  %v1163 = vrot.slane %v816, 7
  %vm1164 = vcmask 1041409
  %v1165 = vsel %vm1164, %v1163, %v794
  %v1169 = vrot.slane %v934, 7
  %v1170 = vsel %vm1164, %v1169, %v915
  %1171 = vrot.lane.b32.xlu0 %v1170, 32
  %v1172 = vpop.permute.xlu0 %1171
  %v1176 = vrot.slane %v1046, 7
  %v1177 = vsel %vm1164, %v1176, %v1027
  %1178 = vrot.lane.b32.xlu0 %v1177, 64
  %v1179 = vpop.permute.xlu0 %1178
  %v1183 = vrot.slane %v1158, 7
  %v1184 = vsel %vm1164, %v1183, %v1139
  %1185 = vrot.lane.b32.xlu0 %v1184, 96
  %v1186 = vpop.permute.xlu0 %1185
  %v1188 = vsel %vm699, %v1165, %v1172
  %vm1189 = vcmask 523264
  %v1190 = vsel %vm1189, %v1188, %v1179
  %vm1191 = vcmask 785408
  %v1192 = vsel %vm1191, %v1190, %v1186
  %v1193 = vpack.c.bf16 %v1192, %v1192
  %v1194 = vld [vmem:[%s10] sm:$0xf]
  %v1195 = vld [vmem:[%s10 + $0x4] sm:$0xf]
  %v1196 = vld [vmem:[%s10 + $0x8] sm:$0xf]
  %v1197 = vld [vmem:[%s10 + $0xc] sm:$0xf]
  %v1198 = vld [vmem:[%s10 + $0x10] sm:$0xf]
  %v1199 = vld [vmem:[%s10 + $0x14] sm:$0xf]
  %v1200 = vld [vmem:[%s10 + $0x18] sm:$0xf]
  %v1201 = vld [vmem:[%s10 + $0x1c] sm:$0xf]
  %v1202 = vld [vmem:[%s10 + $0x20] sm:$0xf]
  %v1203 = vld [vmem:[%s10 + $0x24] sm:$0xf]
  %v1204 = vld [vmem:[%s10 + $0x28] sm:$0xf]
  %v1205 = vld [vmem:[%s10 + $0x2c] sm:$0xf]
  %v1206 = vld [vmem:[%s10 + $0x30] sm:$0xf]
  %v1207 = vld [vmem:[%s10 + $0x34] sm:$0xf]
  %v1208 = vld [vmem:[%s10 + $0x38] sm:$0xf]
  %v1209 = vld [vmem:[%s10 + $0x3c] sm:$0xf]
  %v1210 = vld [vmem:[%s11] sm:$0x1]
  %v1212 = vperm.slane %v1210, 0
  %v1230 = vunpack.c.l.b16 %v1194
  %v1231 = vunpack.c.l.b16 %v1195
  %v1232 = vunpack.c.l.b16 %v1196
  %v1233 = vunpack.c.l.b16 %v1197
  %v1234 = vunpack.c.l.b16 %v1198
  %v1235 = vunpack.c.l.b16 %v1199
  %v1236 = vunpack.c.l.b16 %v1200
  %v1237 = vunpack.c.l.b16 %v1201
  %v1238 = vunpack.c.l.b16 %v1202
  %v1239 = vunpack.c.l.b16 %v1203
  %v1240 = vunpack.c.l.b16 %v1204
  %v1241 = vunpack.c.l.b16 %v1205
  %v1242 = vunpack.c.l.b16 %v1206
  %v1243 = vunpack.c.l.b16 %v1207
  %v1244 = vunpack.c.l.b16 %v1208
  %v1245 = vunpack.c.l.b16 %v1209
  %v1246 = vpack.c.b16 %v1231, %v1230
  %v1247 = vpack.c.b16 %v1233, %v1232
  %v1248 = vpack.c.b16 %v1235, %v1234
  %v1249 = vpack.c.b16 %v1237, %v1236
  %v1250 = vpack.c.b16 %v1239, %v1238
  %v1251 = vpack.c.b16 %v1241, %v1240
  %v1252 = vpack.c.b16 %v1243, %v1242
  %v1253 = vpack.c.b16 %v1245, %v1244
  %1262 = vmatpush.bf16.msra.mxu0 %v1253
  %1263 = vmatpush.bf16.msra.mxu0 %v1252
  %1264 = vmatpush.bf16.msra.mxu0 %v1251
  %1265 = vmatpush.bf16.msra.mxu0 %v1250
  %1266 = vmatpush.bf16.msra.mxu0 %v1249
  %1267 = vmatpush.bf16.msra.mxu0 %v1248
  %1268 = vmatpush.bf16.msra.mxu0 %v1247
  %1269 = vmatpush.bf16.msra.mxu0 %v1246
  %1270 = vmatmul.bf16.gmra.mxu0 %v1193
  %v1271 = vpop.f32.mrf.mxu0
  %v1272 = vadd.f32 %v1212, %v1271
  %v1273 = vpop.f32.mrf.mxu0
  %1274 = vdwg.mxu0
  %v1275 = vadd.f32 %v113, %v1272
  %v1276 = vmul.f32 %v1275, %v1275
  %v1277 = vsel %vm115, %v1276, 0.0
  %1278 = vadd.xlane.f32.xlu0 %v1277
  %v1279 = vpop.xlane.xlu0 %1278
  %v1280 = vmul.f32 %v1279, %v125
  %v1281 = vadd.f32 %v1280, 1e-05
  %v1282 = vrsqrt.pop %v1281
  %v1283 = vmul.f32 %v1282, %v1281
  %v1284 = vmul.f32 %v1283, %v1282
  %v1285 = vmul.f32 0.5, %v1284
  %v1286 = vsub.f32 1.5, %v1285
  %v1287 = vmul.f32 %v1282, %v1286
  %vm1288 = vweird.f32 %v1281
  %vm1289 = vweird.f32 %v1282
  %vm1290 = vmor %vm1288, %vm1289
  %v1291 = vsel %vm1290, %v1282, %v1287
  %v1292 = vmul.f32 %v1275, %v1291
  %v1293 = vld [vmem:[%s16] sm:$0x1]
  %v1295 = vperm.slane %v1293, 0
  %v1297 = vmul.f32 %v1292, %v1295
  %v1298 = vpack.c.bf16 %v1297, %v1297
  %v1299 = vld [vmem:[%s12] sm:$0xff]
  %v1300 = vld [vmem:[%s12 + $0x8] sm:$0xff]
  %v1301 = vld [vmem:[%s12 + $0x10] sm:$0xff]
  %v1302 = vld [vmem:[%s12 + $0x18] sm:$0xff]
  %v1303 = vld [vmem:[%s12 + $0x20] sm:$0xff]
  %v1304 = vld [vmem:[%s12 + $0x28] sm:$0xff]
  %v1305 = vld [vmem:[%s12 + $0x30] sm:$0xff]
  %v1306 = vld [vmem:[%s12 + $0x38] sm:$0xff]
  %v1307 = vld [vmem:[%s12 + $0x40] sm:$0xff]
  %v1308 = vld [vmem:[%s12 + $0x48] sm:$0xff]
  %v1309 = vld [vmem:[%s12 + $0x50] sm:$0xff]
  %v1310 = vld [vmem:[%s12 + $0x58] sm:$0xff]
  %v1311 = vld [vmem:[%s12 + $0x60] sm:$0xff]
  %v1312 = vld [vmem:[%s12 + $0x68] sm:$0xff]
  %v1313 = vld [vmem:[%s12 + $0x70] sm:$0xff]
  %v1314 = vld [vmem:[%s12 + $0x78] sm:$0xff]
  %v1315 = vld [vmem:[%s12 + $0x80] sm:$0xff]
  %v1316 = vld [vmem:[%s12 + $0x88] sm:$0xff]
  %v1317 = vld [vmem:[%s12 + $0x90] sm:$0xff]
  %v1318 = vld [vmem:[%s12 + $0x98] sm:$0xff]
  %v1319 = vld [vmem:[%s12 + $0xa0] sm:$0xff]
  %v1320 = vld [vmem:[%s12 + $0xa8] sm:$0xff]
  %v1321 = vld [vmem:[%s12 + $0xb0] sm:$0xff]
  %v1322 = vld [vmem:[%s12 + $0xb8] sm:$0xff]
  %v1323 = vld [vmem:[%s12 + $0xc0] sm:$0xff]
  %v1324 = vld [vmem:[%s12 + $0xc8] sm:$0xff]
  %v1325 = vld [vmem:[%s12 + $0xd0] sm:$0xff]
  %v1326 = vld [vmem:[%s12 + $0xd8] sm:$0xff]
  %v1327 = vld [vmem:[%s12 + $0xe0] sm:$0xff]
  %v1328 = vld [vmem:[%s12 + $0xe8] sm:$0xff]
  %v1329 = vld [vmem:[%s12 + $0xf0] sm:$0xff]
  %v1330 = vld [vmem:[%s12 + $0xf8] sm:$0xff]
  %v1363 = vunpack.c.l.b16 %v1299
  %v1364 = vunpack.c.h.b16 %v1299
  %v1365 = vunpack.c.l.b16 %v1300
  %v1366 = vunpack.c.h.b16 %v1300
  %v1367 = vunpack.c.l.b16 %v1301
  %v1368 = vunpack.c.h.b16 %v1301
  %v1369 = vunpack.c.l.b16 %v1302
  %v1370 = vunpack.c.h.b16 %v1302
  %v1371 = vunpack.c.l.b16 %v1303
  %v1372 = vunpack.c.h.b16 %v1303
  %v1373 = vunpack.c.l.b16 %v1304
  %v1374 = vunpack.c.h.b16 %v1304
  %v1375 = vunpack.c.l.b16 %v1305
  %v1376 = vunpack.c.h.b16 %v1305
  %v1377 = vunpack.c.l.b16 %v1306
  %v1378 = vunpack.c.h.b16 %v1306
  %v1379 = vunpack.c.l.b16 %v1307
  %v1380 = vunpack.c.h.b16 %v1307
  %v1381 = vunpack.c.l.b16 %v1308
  %v1382 = vunpack.c.h.b16 %v1308
  %v1383 = vunpack.c.l.b16 %v1309
  %v1384 = vunpack.c.h.b16 %v1309
  %v1385 = vunpack.c.l.b16 %v1310
  %v1386 = vunpack.c.h.b16 %v1310
  %v1387 = vunpack.c.l.b16 %v1311
  %v1388 = vunpack.c.h.b16 %v1311
  %v1389 = vunpack.c.l.b16 %v1312
  %v1390 = vunpack.c.h.b16 %v1312
  %v1391 = vunpack.c.l.b16 %v1313
  %v1392 = vunpack.c.h.b16 %v1313
  %v1393 = vunpack.c.l.b16 %v1314
  %v1394 = vunpack.c.h.b16 %v1314
  %v1395 = vunpack.c.l.b16 %v1315
  %v1396 = vunpack.c.h.b16 %v1315
  %v1397 = vunpack.c.l.b16 %v1316
  %v1398 = vunpack.c.h.b16 %v1316
  %v1399 = vunpack.c.l.b16 %v1317
  %v1400 = vunpack.c.h.b16 %v1317
  %v1401 = vunpack.c.l.b16 %v1318
  %v1402 = vunpack.c.h.b16 %v1318
  %v1403 = vunpack.c.l.b16 %v1319
  %v1404 = vunpack.c.h.b16 %v1319
  %v1405 = vunpack.c.l.b16 %v1320
  %v1406 = vunpack.c.h.b16 %v1320
  %v1407 = vunpack.c.l.b16 %v1321
  %v1408 = vunpack.c.h.b16 %v1321
  %v1409 = vunpack.c.l.b16 %v1322
  %v1410 = vunpack.c.h.b16 %v1322
  %v1411 = vunpack.c.l.b16 %v1323
  %v1412 = vunpack.c.h.b16 %v1323
  %v1413 = vunpack.c.l.b16 %v1324
  %v1414 = vunpack.c.h.b16 %v1324
  %v1415 = vunpack.c.l.b16 %v1325
  %v1416 = vunpack.c.h.b16 %v1325
  %v1417 = vunpack.c.l.b16 %v1326
  %v1418 = vunpack.c.h.b16 %v1326
  %v1419 = vunpack.c.l.b16 %v1327
  %v1420 = vunpack.c.h.b16 %v1327
  %v1421 = vunpack.c.l.b16 %v1328
  %v1422 = vunpack.c.h.b16 %v1328
  %v1423 = vunpack.c.l.b16 %v1329
  %v1424 = vunpack.c.h.b16 %v1329
  %v1425 = vunpack.c.l.b16 %v1330
  %v1426 = vunpack.c.h.b16 %v1330
  %v1427 = vpack.c.b16 %v1367, %v1363
  %v1428 = vpack.c.b16 %v1368, %v1364
  %v1429 = vpack.c.b16 %v1369, %v1365
  %v1430 = vpack.c.b16 %v1370, %v1366
  %v1431 = vpack.c.b16 %v1375, %v1371
  %v1432 = vpack.c.b16 %v1376, %v1372
  %v1433 = vpack.c.b16 %v1377, %v1373
  %v1434 = vpack.c.b16 %v1378, %v1374
  %v1435 = vpack.c.b16 %v1383, %v1379
  %v1436 = vpack.c.b16 %v1384, %v1380
  %v1437 = vpack.c.b16 %v1385, %v1381
  %v1438 = vpack.c.b16 %v1386, %v1382
  %v1439 = vpack.c.b16 %v1391, %v1387
  %v1440 = vpack.c.b16 %v1392, %v1388
  %v1441 = vpack.c.b16 %v1393, %v1389
  %v1442 = vpack.c.b16 %v1394, %v1390
  %v1443 = vpack.c.b16 %v1399, %v1395
  %v1444 = vpack.c.b16 %v1400, %v1396
  %v1445 = vpack.c.b16 %v1401, %v1397
  %v1446 = vpack.c.b16 %v1402, %v1398
  %v1447 = vpack.c.b16 %v1407, %v1403
  %v1448 = vpack.c.b16 %v1408, %v1404
  %v1449 = vpack.c.b16 %v1409, %v1405
  %v1450 = vpack.c.b16 %v1410, %v1406
  %v1451 = vpack.c.b16 %v1415, %v1411
  %v1452 = vpack.c.b16 %v1416, %v1412
  %v1453 = vpack.c.b16 %v1417, %v1413
  %v1454 = vpack.c.b16 %v1418, %v1414
  %v1455 = vpack.c.b16 %v1423, %v1419
  %v1456 = vpack.c.b16 %v1424, %v1420
  %v1457 = vpack.c.b16 %v1425, %v1421
  %v1458 = vpack.c.b16 %v1426, %v1422
  %1491 = vmatpush.bf16.msra.mxu0 %v1455
  %1492 = vmatpush.bf16.msra.mxu0 %v1451
  %1493 = vmatpush.bf16.msra.mxu0 %v1447
  %1494 = vmatpush.bf16.msra.mxu0 %v1443
  %1495 = vmatpush.bf16.msra.mxu0 %v1439
  %1496 = vmatpush.bf16.msra.mxu0 %v1435
  %1497 = vmatpush.bf16.msra.mxu0 %v1431
  %1498 = vmatpush.bf16.msra.mxu0 %v1427
  %1499 = vmatmul.bf16.gmra.mxu0 %v1298
  %v1500 = vpop.f32.mrf.mxu0
  %v1501 = vadd.f32 0.0, %v1500
  %v1502 = vpop.f32.mrf.mxu0
  %1503 = vdwg.mxu0
  %1504 = vmatpush.bf16.msra.mxu0 %v1456
  %1505 = vmatpush.bf16.msra.mxu0 %v1452
  %1506 = vmatpush.bf16.msra.mxu0 %v1448
  %1507 = vmatpush.bf16.msra.mxu0 %v1444
  %1508 = vmatpush.bf16.msra.mxu0 %v1440
  %1509 = vmatpush.bf16.msra.mxu0 %v1436
  %1510 = vmatpush.bf16.msra.mxu0 %v1432
  %1511 = vmatpush.bf16.msra.mxu0 %v1428
  %1512 = vmatmul.bf16.gmra.mxu0 %v1298
  %v1513 = vpop.f32.mrf.mxu0
  %v1514 = vadd.f32 0.0, %v1513
  %v1515 = vpop.f32.mrf.mxu0
  %1516 = vdwg.mxu0
  %1517 = vmatpush.bf16.msra.mxu0 %v1457
  %1518 = vmatpush.bf16.msra.mxu0 %v1453
  %1519 = vmatpush.bf16.msra.mxu0 %v1449
  %1520 = vmatpush.bf16.msra.mxu0 %v1445
  %1521 = vmatpush.bf16.msra.mxu0 %v1441
  %1522 = vmatpush.bf16.msra.mxu0 %v1437
  %1523 = vmatpush.bf16.msra.mxu0 %v1433
  %1524 = vmatpush.bf16.msra.mxu0 %v1429
  %1525 = vmatmul.bf16.gmra.mxu0 %v1298
  %v1526 = vpop.f32.mrf.mxu0
  %v1527 = vadd.f32 0.0, %v1526
  %v1528 = vpop.f32.mrf.mxu0
  %1529 = vdwg.mxu0
  %1530 = vmatpush.bf16.msra.mxu0 %v1458
  %1531 = vmatpush.bf16.msra.mxu0 %v1454
  %1532 = vmatpush.bf16.msra.mxu0 %v1450
  %1533 = vmatpush.bf16.msra.mxu0 %v1446
  %1534 = vmatpush.bf16.msra.mxu0 %v1442
  %1535 = vmatpush.bf16.msra.mxu0 %v1438
  %1536 = vmatpush.bf16.msra.mxu0 %v1434
  %1537 = vmatpush.bf16.msra.mxu0 %v1430
  %1538 = vmatmul.bf16.gmra.mxu0 %v1298
  %v1539 = vpop.f32.mrf.mxu0
  %v1540 = vadd.f32 0.0, %v1539
  %v1541 = vpop.f32.mrf.mxu0
  %1542 = vdwg.mxu0
  %v1543 = vld [vmem:[%s13] sm:$0xff]
  %v1544 = vld [vmem:[%s13 + $0x8] sm:$0xff]
  %v1545 = vld [vmem:[%s13 + $0x10] sm:$0xff]
  %v1546 = vld [vmem:[%s13 + $0x18] sm:$0xff]
  %v1547 = vld [vmem:[%s13 + $0x20] sm:$0xff]
  %v1548 = vld [vmem:[%s13 + $0x28] sm:$0xff]
  %v1549 = vld [vmem:[%s13 + $0x30] sm:$0xff]
  %v1550 = vld [vmem:[%s13 + $0x38] sm:$0xff]
  %v1551 = vld [vmem:[%s13 + $0x40] sm:$0xff]
  %v1552 = vld [vmem:[%s13 + $0x48] sm:$0xff]
  %v1553 = vld [vmem:[%s13 + $0x50] sm:$0xff]
  %v1554 = vld [vmem:[%s13 + $0x58] sm:$0xff]
  %v1555 = vld [vmem:[%s13 + $0x60] sm:$0xff]
  %v1556 = vld [vmem:[%s13 + $0x68] sm:$0xff]
  %v1557 = vld [vmem:[%s13 + $0x70] sm:$0xff]
  %v1558 = vld [vmem:[%s13 + $0x78] sm:$0xff]
  %v1559 = vld [vmem:[%s13 + $0x80] sm:$0xff]
  %v1560 = vld [vmem:[%s13 + $0x88] sm:$0xff]
  %v1561 = vld [vmem:[%s13 + $0x90] sm:$0xff]
  %v1562 = vld [vmem:[%s13 + $0x98] sm:$0xff]
  %v1563 = vld [vmem:[%s13 + $0xa0] sm:$0xff]
  %v1564 = vld [vmem:[%s13 + $0xa8] sm:$0xff]
  %v1565 = vld [vmem:[%s13 + $0xb0] sm:$0xff]
  %v1566 = vld [vmem:[%s13 + $0xb8] sm:$0xff]
  %v1567 = vld [vmem:[%s13 + $0xc0] sm:$0xff]
  %v1568 = vld [vmem:[%s13 + $0xc8] sm:$0xff]
  %v1569 = vld [vmem:[%s13 + $0xd0] sm:$0xff]
  %v1570 = vld [vmem:[%s13 + $0xd8] sm:$0xff]
  %v1571 = vld [vmem:[%s13 + $0xe0] sm:$0xff]
  %v1572 = vld [vmem:[%s13 + $0xe8] sm:$0xff]
  %v1573 = vld [vmem:[%s13 + $0xf0] sm:$0xff]
  %v1574 = vld [vmem:[%s13 + $0xf8] sm:$0xff]
  %v1607 = vunpack.c.l.b16 %v1543
  %v1608 = vunpack.c.h.b16 %v1543
  %v1609 = vunpack.c.l.b16 %v1544
  %v1610 = vunpack.c.h.b16 %v1544
  %v1611 = vunpack.c.l.b16 %v1545
  %v1612 = vunpack.c.h.b16 %v1545
  %v1613 = vunpack.c.l.b16 %v1546
  %v1614 = vunpack.c.h.b16 %v1546
  %v1615 = vunpack.c.l.b16 %v1547
  %v1616 = vunpack.c.h.b16 %v1547
  %v1617 = vunpack.c.l.b16 %v1548
  %v1618 = vunpack.c.h.b16 %v1548
  %v1619 = vunpack.c.l.b16 %v1549
  %v1620 = vunpack.c.h.b16 %v1549
  %v1621 = vunpack.c.l.b16 %v1550
  %v1622 = vunpack.c.h.b16 %v1550
  %v1623 = vunpack.c.l.b16 %v1551
  %v1624 = vunpack.c.h.b16 %v1551
  %v1625 = vunpack.c.l.b16 %v1552
  %v1626 = vunpack.c.h.b16 %v1552
  %v1627 = vunpack.c.l.b16 %v1553
  %v1628 = vunpack.c.h.b16 %v1553
  %v1629 = vunpack.c.l.b16 %v1554
  %v1630 = vunpack.c.h.b16 %v1554
  %v1631 = vunpack.c.l.b16 %v1555
  %v1632 = vunpack.c.h.b16 %v1555
  %v1633 = vunpack.c.l.b16 %v1556
  %v1634 = vunpack.c.h.b16 %v1556
  %v1635 = vunpack.c.l.b16 %v1557
  %v1636 = vunpack.c.h.b16 %v1557
  %v1637 = vunpack.c.l.b16 %v1558
  %v1638 = vunpack.c.h.b16 %v1558
  %v1639 = vunpack.c.l.b16 %v1559
  %v1640 = vunpack.c.h.b16 %v1559
  %v1641 = vunpack.c.l.b16 %v1560
  %v1642 = vunpack.c.h.b16 %v1560
  %v1643 = vunpack.c.l.b16 %v1561
  %v1644 = vunpack.c.h.b16 %v1561
  %v1645 = vunpack.c.l.b16 %v1562
  %v1646 = vunpack.c.h.b16 %v1562
  %v1647 = vunpack.c.l.b16 %v1563
  %v1648 = vunpack.c.h.b16 %v1563
  %v1649 = vunpack.c.l.b16 %v1564
  %v1650 = vunpack.c.h.b16 %v1564
  %v1651 = vunpack.c.l.b16 %v1565
  %v1652 = vunpack.c.h.b16 %v1565
  %v1653 = vunpack.c.l.b16 %v1566
  %v1654 = vunpack.c.h.b16 %v1566
  %v1655 = vunpack.c.l.b16 %v1567
  %v1656 = vunpack.c.h.b16 %v1567
  %v1657 = vunpack.c.l.b16 %v1568
  %v1658 = vunpack.c.h.b16 %v1568
  %v1659 = vunpack.c.l.b16 %v1569
  %v1660 = vunpack.c.h.b16 %v1569
  %v1661 = vunpack.c.l.b16 %v1570
  %v1662 = vunpack.c.h.b16 %v1570
  %v1663 = vunpack.c.l.b16 %v1571
  %v1664 = vunpack.c.h.b16 %v1571
  %v1665 = vunpack.c.l.b16 %v1572
  %v1666 = vunpack.c.h.b16 %v1572
  %v1667 = vunpack.c.l.b16 %v1573
  %v1668 = vunpack.c.h.b16 %v1573
  %v1669 = vunpack.c.l.b16 %v1574
  %v1670 = vunpack.c.h.b16 %v1574
  %v1671 = vpack.c.b16 %v1611, %v1607
  %v1672 = vpack.c.b16 %v1612, %v1608
  %v1673 = vpack.c.b16 %v1613, %v1609
  %v1674 = vpack.c.b16 %v1614, %v1610
  %v1675 = vpack.c.b16 %v1619, %v1615
  %v1676 = vpack.c.b16 %v1620, %v1616
  %v1677 = vpack.c.b16 %v1621, %v1617
  %v1678 = vpack.c.b16 %v1622, %v1618
  %v1679 = vpack.c.b16 %v1627, %v1623
  %v1680 = vpack.c.b16 %v1628, %v1624
  %v1681 = vpack.c.b16 %v1629, %v1625
  %v1682 = vpack.c.b16 %v1630, %v1626
  %v1683 = vpack.c.b16 %v1635, %v1631
  %v1684 = vpack.c.b16 %v1636, %v1632
  %v1685 = vpack.c.b16 %v1637, %v1633
  %v1686 = vpack.c.b16 %v1638, %v1634
  %v1687 = vpack.c.b16 %v1643, %v1639
  %v1688 = vpack.c.b16 %v1644, %v1640
  %v1689 = vpack.c.b16 %v1645, %v1641
  %v1690 = vpack.c.b16 %v1646, %v1642
  %v1691 = vpack.c.b16 %v1651, %v1647
  %v1692 = vpack.c.b16 %v1652, %v1648
  %v1693 = vpack.c.b16 %v1653, %v1649
  %v1694 = vpack.c.b16 %v1654, %v1650
  %v1695 = vpack.c.b16 %v1659, %v1655
  %v1696 = vpack.c.b16 %v1660, %v1656
  %v1697 = vpack.c.b16 %v1661, %v1657
  %v1698 = vpack.c.b16 %v1662, %v1658
  %v1699 = vpack.c.b16 %v1667, %v1663
  %v1700 = vpack.c.b16 %v1668, %v1664
  %v1701 = vpack.c.b16 %v1669, %v1665
  %v1702 = vpack.c.b16 %v1670, %v1666
  %1735 = vmatpush.bf16.msra.mxu0 %v1699
  %1736 = vmatpush.bf16.msra.mxu0 %v1695
  %1737 = vmatpush.bf16.msra.mxu0 %v1691
  %1738 = vmatpush.bf16.msra.mxu0 %v1687
  %1739 = vmatpush.bf16.msra.mxu0 %v1683
  %1740 = vmatpush.bf16.msra.mxu0 %v1679
  %1741 = vmatpush.bf16.msra.mxu0 %v1675
  %1742 = vmatpush.bf16.msra.mxu0 %v1671
  %1743 = vmatmul.bf16.gmra.mxu0 %v1298
  %v1744 = vpop.f32.mrf.mxu0
  %v1745 = vadd.f32 0.0, %v1744
  %v1746 = vpop.f32.mrf.mxu0
  %1747 = vdwg.mxu0
  %1748 = vmatpush.bf16.msra.mxu0 %v1700
  %1749 = vmatpush.bf16.msra.mxu0 %v1696
  %1750 = vmatpush.bf16.msra.mxu0 %v1692
  %1751 = vmatpush.bf16.msra.mxu0 %v1688
  %1752 = vmatpush.bf16.msra.mxu0 %v1684
  %1753 = vmatpush.bf16.msra.mxu0 %v1680
  %1754 = vmatpush.bf16.msra.mxu0 %v1676
  %1755 = vmatpush.bf16.msra.mxu0 %v1672
  %1756 = vmatmul.bf16.gmra.mxu0 %v1298
  %v1757 = vpop.f32.mrf.mxu0
  %v1758 = vadd.f32 0.0, %v1757
  %v1759 = vpop.f32.mrf.mxu0
  %1760 = vdwg.mxu0
  %1761 = vmatpush.bf16.msra.mxu0 %v1701
  %1762 = vmatpush.bf16.msra.mxu0 %v1697
  %1763 = vmatpush.bf16.msra.mxu0 %v1693
  %1764 = vmatpush.bf16.msra.mxu0 %v1689
  %1765 = vmatpush.bf16.msra.mxu0 %v1685
  %1766 = vmatpush.bf16.msra.mxu0 %v1681
  %1767 = vmatpush.bf16.msra.mxu0 %v1677
  %1768 = vmatpush.bf16.msra.mxu0 %v1673
  %1769 = vmatmul.bf16.gmra.mxu0 %v1298
  %v1770 = vpop.f32.mrf.mxu0
  %v1771 = vadd.f32 0.0, %v1770
  %v1772 = vpop.f32.mrf.mxu0
  %1773 = vdwg.mxu0
  %1774 = vmatpush.bf16.msra.mxu0 %v1702
  %1775 = vmatpush.bf16.msra.mxu0 %v1698
  %1776 = vmatpush.bf16.msra.mxu0 %v1694
  %1777 = vmatpush.bf16.msra.mxu0 %v1690
  %1778 = vmatpush.bf16.msra.mxu0 %v1686
  %1779 = vmatpush.bf16.msra.mxu0 %v1682
  %1780 = vmatpush.bf16.msra.mxu0 %v1678
  %1781 = vmatpush.bf16.msra.mxu0 %v1674
  %1782 = vmatmul.bf16.gmra.mxu0 %v1298
  %v1783 = vpop.f32.mrf.mxu0
  %v1784 = vadd.f32 0.0, %v1783
  %v1785 = vpop.f32.mrf.mxu0
  %1786 = vdwg.mxu0
  %v1787 = vxor.u32 %v1501, 2147483648
  %v1788 = vxor.u32 %v1514, 2147483648
  %v1789 = vxor.u32 %v1527, 2147483648
  %v1790 = vxor.u32 %v1540, 2147483648
  %v1791 = vmul.f32 %v1787, 1.442695
  %v1792 = vpow.pop %v1791
  %v1793 = vmul.f32 %v1788, 1.442695
  %v1794 = vpow.pop %v1793
  %v1795 = vmul.f32 %v1789, 1.442695
  %v1796 = vpow.pop %v1795
  %v1797 = vmul.f32 %v1790, 1.442695
  %v1798 = vpow.pop %v1797
  %v1799 = vadd.f32 %v1792, 1.0
  %v1800 = vadd.f32 %v1794, 1.0
  %v1801 = vadd.f32 %v1796, 1.0
  %v1802 = vadd.f32 %v1798, 1.0
  %v1803 = vrcp.pop %v1799
  %v1804 = vmul.f32 %v1799, %v1803
  %v1805 = vsub.f32 1.0, %v1804
  %v1806 = vmul.f32 %v1803, %v1805
  %v1807 = vadd.f32 %v1803, %v1806
  %vm1808 = vweird.f32 %v1799
  %vm1809 = vweird.f32 %v1803
  %vm1810 = vmor %vm1808, %vm1809
  %v1811 = vsel %vm1810, %v1803, %v1807
  %v1812 = vand.u32 2147483647, %v1799
  %vm1813 = vcmp.eq.f32.partialorder %v1812, 8.507059e+37
  %v1814 = vand.u32 %v1799, 2147483648
  %v1815 = vor.u32 1.1754944e-38, %v1814
  %v1816 = vsel %vm1813, %v1815, %v1811
  %v1817 = vmul.f32 1.0, %v1816
  %v1818 = vrcp.pop %v1800
  %v1819 = vmul.f32 %v1800, %v1818
  %v1820 = vsub.f32 1.0, %v1819
  %v1821 = vmul.f32 %v1818, %v1820
  %v1822 = vadd.f32 %v1818, %v1821
  %vm1823 = vweird.f32 %v1800
  %vm1824 = vweird.f32 %v1818
  %vm1825 = vmor %vm1823, %vm1824
  %v1826 = vsel %vm1825, %v1818, %v1822
  %v1827 = vand.u32 2147483647, %v1800
  %vm1828 = vcmp.eq.f32.partialorder %v1827, 8.507059e+37
  %v1829 = vand.u32 %v1800, 2147483648
  %v1830 = vor.u32 1.1754944e-38, %v1829
  %v1831 = vsel %vm1828, %v1830, %v1826
  %v1832 = vmul.f32 1.0, %v1831
  %v1833 = vrcp.pop %v1801
  %v1834 = vmul.f32 %v1801, %v1833
  %v1835 = vsub.f32 1.0, %v1834
  %v1836 = vmul.f32 %v1833, %v1835
  %v1837 = vadd.f32 %v1833, %v1836
  %vm1838 = vweird.f32 %v1801
  %vm1839 = vweird.f32 %v1833
  %vm1840 = vmor %vm1838, %vm1839
  %v1841 = vsel %vm1840, %v1833, %v1837
  %v1842 = vand.u32 2147483647, %v1801
  %vm1843 = vcmp.eq.f32.partialorder %v1842, 8.507059e+37
  %v1844 = vand.u32 %v1801, 2147483648
  %v1845 = vor.u32 1.1754944e-38, %v1844
  %v1846 = vsel %vm1843, %v1845, %v1841
  %v1847 = vmul.f32 1.0, %v1846
  %v1848 = vrcp.pop %v1802
  %v1849 = vmul.f32 %v1802, %v1848
  %v1850 = vsub.f32 1.0, %v1849
  %v1851 = vmul.f32 %v1848, %v1850
  %v1852 = vadd.f32 %v1848, %v1851
  %vm1853 = vweird.f32 %v1802
  %vm1854 = vweird.f32 %v1848
  %vm1855 = vmor %vm1853, %vm1854
  %v1856 = vsel %vm1855, %v1848, %v1852
  %v1857 = vand.u32 2147483647, %v1802
  %vm1858 = vcmp.eq.f32.partialorder %v1857, 8.507059e+37
  %v1859 = vand.u32 %v1802, 2147483648
  %v1860 = vor.u32 1.1754944e-38, %v1859
  %v1861 = vsel %vm1858, %v1860, %v1856
  %v1862 = vmul.f32 1.0, %v1861
  %v1863 = vmul.f32 %v1501, %v1817
  %v1864 = vmul.f32 %v1514, %v1832
  %v1865 = vmul.f32 %v1527, %v1847
  %v1866 = vmul.f32 %v1540, %v1862
  %v1867 = vmul.f32 %v1863, %v1745
  %v1868 = vmul.f32 %v1864, %v1758
  %v1869 = vmul.f32 %v1865, %v1771
  %v1870 = vmul.f32 %v1866, %v1784
  %v1871 = vpack.c.bf16 %v1867, %v1867
  %v1872 = vpack.c.bf16 %v1868, %v1868
  %v1873 = vpack.c.bf16 %v1869, %v1869
  %v1874 = vpack.c.bf16 %v1870, %v1870
  %v1875 = vld [vmem:[%s14] sm:$0xf]
  %v1876 = vld [vmem:[%s14 + $0x4] sm:$0xf]
  %v1877 = vld [vmem:[%s14 + $0x8] sm:$0xf]
  %v1878 = vld [vmem:[%s14 + $0xc] sm:$0xf]
  %v1879 = vld [vmem:[%s14 + $0x10] sm:$0xf]
  %v1880 = vld [vmem:[%s14 + $0x14] sm:$0xf]
  %v1881 = vld [vmem:[%s14 + $0x18] sm:$0xf]
  %v1882 = vld [vmem:[%s14 + $0x1c] sm:$0xf]
  %v1883 = vld [vmem:[%s14 + $0x20] sm:$0xf]
  %v1884 = vld [vmem:[%s14 + $0x24] sm:$0xf]
  %v1885 = vld [vmem:[%s14 + $0x28] sm:$0xf]
  %v1886 = vld [vmem:[%s14 + $0x2c] sm:$0xf]
  %v1887 = vld [vmem:[%s14 + $0x30] sm:$0xf]
  %v1888 = vld [vmem:[%s14 + $0x34] sm:$0xf]
  %v1889 = vld [vmem:[%s14 + $0x38] sm:$0xf]
  %v1890 = vld [vmem:[%s14 + $0x3c] sm:$0xf]
  %v1891 = vld [vmem:[%s14 + $0x40] sm:$0xf]
  %v1892 = vld [vmem:[%s14 + $0x44] sm:$0xf]
  %v1893 = vld [vmem:[%s14 + $0x48] sm:$0xf]
  %v1894 = vld [vmem:[%s14 + $0x4c] sm:$0xf]
  %v1895 = vld [vmem:[%s14 + $0x50] sm:$0xf]
  %v1896 = vld [vmem:[%s14 + $0x54] sm:$0xf]
  %v1897 = vld [vmem:[%s14 + $0x58] sm:$0xf]
  %v1898 = vld [vmem:[%s14 + $0x5c] sm:$0xf]
  %v1899 = vld [vmem:[%s14 + $0x60] sm:$0xf]
  %v1900 = vld [vmem:[%s14 + $0x64] sm:$0xf]
  %v1901 = vld [vmem:[%s14 + $0x68] sm:$0xf]
  %v1902 = vld [vmem:[%s14 + $0x6c] sm:$0xf]
  %v1903 = vld [vmem:[%s14 + $0x70] sm:$0xf]
  %v1904 = vld [vmem:[%s14 + $0x74] sm:$0xf]
  %v1905 = vld [vmem:[%s14 + $0x78] sm:$0xf]
  %v1906 = vld [vmem:[%s14 + $0x7c] sm:$0xf]
  %v1907 = vld [vmem:[%s14 + $0x80] sm:$0xf]
  %v1908 = vld [vmem:[%s14 + $0x84] sm:$0xf]
  %v1909 = vld [vmem:[%s14 + $0x88] sm:$0xf]
  %v1910 = vld [vmem:[%s14 + $0x8c] sm:$0xf]
  %v1911 = vld [vmem:[%s14 + $0x90] sm:$0xf]
  %v1912 = vld [vmem:[%s14 + $0x94] sm:$0xf]
  %v1913 = vld [vmem:[%s14 + $0x98] sm:$0xf]
  %v1914 = vld [vmem:[%s14 + $0x9c] sm:$0xf]
  %v1915 = vld [vmem:[%s14 + $0xa0] sm:$0xf]
  %v1916 = vld [vmem:[%s14 + $0xa4] sm:$0xf]
  %v1917 = vld [vmem:[%s14 + $0xa8] sm:$0xf]
  %v1918 = vld [vmem:[%s14 + $0xac] sm:$0xf]
  %v1919 = vld [vmem:[%s14 + $0xb0] sm:$0xf]
  %v1920 = vld [vmem:[%s14 + $0xb4] sm:$0xf]
  %v1921 = vld [vmem:[%s14 + $0xb8] sm:$0xf]
  %v1922 = vld [vmem:[%s14 + $0xbc] sm:$0xf]
  %v1923 = vld [vmem:[%s14 + $0xc0] sm:$0xf]
  %v1924 = vld [vmem:[%s14 + $0xc4] sm:$0xf]
  %v1925 = vld [vmem:[%s14 + $0xc8] sm:$0xf]
  %v1926 = vld [vmem:[%s14 + $0xcc] sm:$0xf]
  %v1927 = vld [vmem:[%s14 + $0xd0] sm:$0xf]
  %v1928 = vld [vmem:[%s14 + $0xd4] sm:$0xf]
  %v1929 = vld [vmem:[%s14 + $0xd8] sm:$0xf]
  %v1930 = vld [vmem:[%s14 + $0xdc] sm:$0xf]
  %v1931 = vld [vmem:[%s14 + $0xe0] sm:$0xf]
  %v1932 = vld [vmem:[%s14 + $0xe4] sm:$0xf]
  %v1933 = vld [vmem:[%s14 + $0xe8] sm:$0x3]
  %v1993 = vunpack.c.l.b16 %v1875
  %v1994 = vunpack.c.l.b16 %v1876
  %v1995 = vunpack.c.l.b16 %v1877
  %v1996 = vunpack.c.l.b16 %v1878
  %v1997 = vunpack.c.l.b16 %v1879
  %v1998 = vunpack.c.l.b16 %v1880
  %v1999 = vunpack.c.l.b16 %v1881
  %v2000 = vunpack.c.l.b16 %v1882
  %v2001 = vunpack.c.l.b16 %v1883
  %v2002 = vunpack.c.l.b16 %v1884
  %v2003 = vunpack.c.l.b16 %v1885
  %v2004 = vunpack.c.l.b16 %v1886
  %v2005 = vunpack.c.l.b16 %v1887
  %v2006 = vunpack.c.l.b16 %v1888
  %v2007 = vunpack.c.l.b16 %v1889
  %v2008 = vunpack.c.l.b16 %v1890
  %v2009 = vunpack.c.l.b16 %v1891
  %v2010 = vunpack.c.l.b16 %v1892
  %v2011 = vunpack.c.l.b16 %v1893
  %v2012 = vunpack.c.l.b16 %v1894
  %v2013 = vunpack.c.l.b16 %v1895
  %v2014 = vunpack.c.l.b16 %v1896
  %v2015 = vunpack.c.l.b16 %v1897
  %v2016 = vunpack.c.l.b16 %v1898
  %v2017 = vunpack.c.l.b16 %v1899
  %v2018 = vunpack.c.l.b16 %v1900
  %v2019 = vunpack.c.l.b16 %v1901
  %v2020 = vunpack.c.l.b16 %v1902
  %v2021 = vunpack.c.l.b16 %v1903
  %v2022 = vunpack.c.l.b16 %v1904
  %v2023 = vunpack.c.l.b16 %v1905
  %v2024 = vunpack.c.l.b16 %v1906
  %v2025 = vunpack.c.l.b16 %v1907
  %v2026 = vunpack.c.l.b16 %v1908
  %v2027 = vunpack.c.l.b16 %v1909
  %v2028 = vunpack.c.l.b16 %v1910
  %v2029 = vunpack.c.l.b16 %v1911
  %v2030 = vunpack.c.l.b16 %v1912
  %v2031 = vunpack.c.l.b16 %v1913
  %v2032 = vunpack.c.l.b16 %v1914
  %v2033 = vunpack.c.l.b16 %v1915
  %v2034 = vunpack.c.l.b16 %v1916
  %v2035 = vunpack.c.l.b16 %v1917
  %v2036 = vunpack.c.l.b16 %v1918
  %v2037 = vunpack.c.l.b16 %v1919
  %v2038 = vunpack.c.l.b16 %v1920
  %v2039 = vunpack.c.l.b16 %v1921
  %v2040 = vunpack.c.l.b16 %v1922
  %v2041 = vunpack.c.l.b16 %v1923
  %v2042 = vunpack.c.l.b16 %v1924
  %v2043 = vunpack.c.l.b16 %v1925
  %v2044 = vunpack.c.l.b16 %v1926
  %v2045 = vunpack.c.l.b16 %v1927
  %v2046 = vunpack.c.l.b16 %v1928
  %v2047 = vunpack.c.l.b16 %v1929
  %v2048 = vunpack.c.l.b16 %v1930
  %v2049 = vunpack.c.l.b16 %v1931
  %v2050 = vunpack.c.l.b16 %v1932
  %v2051 = vunpack.c.l.b16 %v1933
  %v2052 = vpack.c.b16 %v1994, %v1993
  %v2053 = vpack.c.b16 %v1996, %v1995
  %v2054 = vpack.c.b16 %v1998, %v1997
  %v2055 = vpack.c.b16 %v2000, %v1999
  %v2056 = vpack.c.b16 %v2002, %v2001
  %v2057 = vpack.c.b16 %v2004, %v2003
  %v2058 = vpack.c.b16 %v2006, %v2005
  %v2059 = vpack.c.b16 %v2008, %v2007
  %v2060 = vpack.c.b16 %v2010, %v2009
  %v2061 = vpack.c.b16 %v2012, %v2011
  %v2062 = vpack.c.b16 %v2014, %v2013
  %v2063 = vpack.c.b16 %v2016, %v2015
  %v2064 = vpack.c.b16 %v2018, %v2017
  %v2065 = vpack.c.b16 %v2020, %v2019
  %v2066 = vpack.c.b16 %v2022, %v2021
  %v2067 = vpack.c.b16 %v2024, %v2023
  %v2068 = vpack.c.b16 %v2026, %v2025
  %v2069 = vpack.c.b16 %v2028, %v2027
  %v2070 = vpack.c.b16 %v2030, %v2029
  %v2071 = vpack.c.b16 %v2032, %v2031
  %v2072 = vpack.c.b16 %v2034, %v2033
  %v2073 = vpack.c.b16 %v2036, %v2035
  %v2074 = vpack.c.b16 %v2038, %v2037
  %v2075 = vpack.c.b16 %v2040, %v2039
  %v2076 = vpack.c.b16 %v2042, %v2041
  %v2077 = vpack.c.b16 %v2044, %v2043
  %v2078 = vpack.c.b16 %v2046, %v2045
  %v2079 = vpack.c.b16 %v2048, %v2047
  %v2080 = vpack.c.b16 %v2050, %v2049
  %v2081 = vpack.c.b16 %v2051, %v2051
  %vm2111 = vcmask 687104
  %v2113 = vsel %vm2111, %v1874, 0
  %v2116 = vsel %vm115, %v2081, 0
  %2118 = vmatpush.bf16.msra.mxu0 %v2059
  %2119 = vmatpush.bf16.msra.mxu0 %v2058
  %2120 = vmatpush.bf16.msra.mxu0 %v2057
  %2121 = vmatpush.bf16.msra.mxu0 %v2056
  %2122 = vmatpush.bf16.msra.mxu0 %v2055
  %2123 = vmatpush.bf16.msra.mxu0 %v2054
  %2124 = vmatpush.bf16.msra.mxu0 %v2053
  %2125 = vmatpush.bf16.msra.mxu0 %v2052
  %2126 = vmatmul.bf16.gmra.mxu0 %v1871
  %v2127 = vpop.f32.mrf.mxu0
  %v2128 = vadd.f32 0.0, %v2127
  %v2129 = vpop.f32.mrf.mxu0
  %2130 = vdwg.mxu0
  %2131 = vmatpush.bf16.msra.mxu0 %v2067
  %2132 = vmatpush.bf16.msra.mxu0 %v2066
  %2133 = vmatpush.bf16.msra.mxu0 %v2065
  %2134 = vmatpush.bf16.msra.mxu0 %v2064
  %2135 = vmatpush.bf16.msra.mxu0 %v2063
  %2136 = vmatpush.bf16.msra.mxu0 %v2062
  %2137 = vmatpush.bf16.msra.mxu0 %v2061
  %2138 = vmatpush.bf16.msra.mxu0 %v2060
  %2139 = vmatmul.bf16.gmra.mxu0 %v1872
  %v2140 = vpop.f32.mrf.mxu0
  %v2141 = vadd.f32 %v2128, %v2140
  %v2142 = vpop.f32.mrf.mxu0
  %2143 = vdwg.mxu0
  %2144 = vmatpush.bf16.msra.mxu0 %v2075
  %2145 = vmatpush.bf16.msra.mxu0 %v2074
  %2146 = vmatpush.bf16.msra.mxu0 %v2073
  %2147 = vmatpush.bf16.msra.mxu0 %v2072
  %2148 = vmatpush.bf16.msra.mxu0 %v2071
  %2149 = vmatpush.bf16.msra.mxu0 %v2070
  %2150 = vmatpush.bf16.msra.mxu0 %v2069
  %2151 = vmatpush.bf16.msra.mxu0 %v2068
  %2152 = vmatmul.bf16.gmra.mxu0 %v1873
  %v2153 = vpop.f32.mrf.mxu0
  %v2154 = vadd.f32 %v2141, %v2153
  %v2155 = vpop.f32.mrf.mxu0
  %2156 = vdwg.mxu0
  %2157 = vmatpush.bf16.msra.mxu0 0
  %2158 = vmatpush.bf16.msra.mxu0 0
  %2159 = vmatpush.bf16.msra.mxu0 %v2116
  %2160 = vmatpush.bf16.msra.mxu0 %v2080
  %2161 = vmatpush.bf16.msra.mxu0 %v2079
  %2162 = vmatpush.bf16.msra.mxu0 %v2078
  %2163 = vmatpush.bf16.msra.mxu0 %v2077
  %2164 = vmatpush.bf16.msra.mxu0 %v2076
  %2165 = vmatmul.bf16.gmra.mxu0 %v2113
  %v2166 = vpop.f32.mrf.mxu0
  %v2167 = vadd.f32 %v2154, %v2166
  %v2168 = vpop.f32.mrf.mxu0
  %2169 = vdwg.mxu0
  %v2170 = vadd.f32 %v1275, %v2167
  %2171 = vst [vmem:[%s19] sm:$0x3] %v2170
  %s2172 = smul.u32 2, 1
  %s2173 = smul.u32 %s2172, 1
  %s2174 = sshll.u32 %s2173, 4
  %2175 = dma.done %s570, %s2174
  %s2176 = sshll.u32 %s2173, 4
  %2177 = dma.done %s610, %s2176
  // Predicated region
  $region168: #{transformer_forward.2} parent=0 // pred_check
    _
  $region169: #{transformer_forward.2} parent=0 // pred_check_branch
    %2179 = sbr.rel (0) target = $region171
  $region170: #{transformer_forward.2} parent=0 // pred_region
    _
  $region171: #{transformer_forward.2} parent=0 // pred_fallthru
    _
  // Predicated region
  $region172: #{transformer_forward.2} parent=0 // pred_check
    _
  $region173: #{transformer_forward.2} parent=0 // pred_check_branch
    %2181 = sbr.rel (0) target = $region175
  $region174: #{transformer_forward.2} parent=0 // pred_region
    _
  $region175: #{transformer_forward.2} parent=0 // pred_fallthru
    _
  %2182 = vsyncmov [#allocation6]
  %s2183 = vpop.sfrf %2182
  %p2184 = scmp.eq.s32.totalorder %s2183, 0
  %p2185 = pneg %p2184
  %2187 = shalt.err (%p2185)
  %s2188 = scalar_lea.sflag [#allocation6], 1
  %2189 = vsyncmov %s2188
  %s2190 = vpop.sfrf %2189
  %p2191 = scmp.eq.s32.totalorder %s2190, 0
  %p2192 = pneg %p2191
  %2194 = shalt.err (%p2192)
  %s2195 = scalar_lea.sflag [#allocation6], 2
  %2196 = vsyncmov %s2195
  %s2197 = vpop.sfrf %2196
  %p2198 = scmp.eq.s32.totalorder %s2197, 0
  %p2199 = pneg %p2198
  %2201 = shalt.err (%p2199)
  %s2202 = scalar_lea.sflag [#allocation6], 3
  %2203 = vsyncmov %s2202
  %s2204 = vpop.sfrf %2203
  %p2205 = scmp.eq.s32.totalorder %s2204, 0
  %p2206 = pneg %p2205
  %2208 = shalt.err (%p2206)

</llo_original>
